<compile_context>
chip_gen: v6e
topology: v6e:2x2x1
jax: 0.10.0
libtpu: 0.0.40
codegen_flags: <defaults>
</compile_context>

<pallas_src>
import math

import jax
import jax.numpy as jnp
from jax.experimental import pallas as pl
from jax.experimental.pallas import tpu as pltpu

D_MODEL = 32
NUM_HEADS = 4
HEAD_DIM = D_MODEL // NUM_HEADS
D_FF = 256
LN_EPS = 1e-5
NEG_INF = -1e30  # finite stand-in for -inf: fully-masked rows give a uniform
                 # distribution instead of PyTorch's NaN (no NaN propagation).


def _layernorm(x, g, b):
    mu = jnp.mean(x, axis=-1, keepdims=True)
    var = jnp.mean((x - mu) ** 2, axis=-1, keepdims=True)
    return (x - mu) * jax.lax.rsqrt(var + LN_EPS) * g + b


def decoder_forward(x, enc, mask, layer_params, *, block_b=512,
                    compute_dtype=jnp.bfloat16):
    """Full Decoder in one pallas_call.

    x:    (B, Sq, D) f32
    enc:  (B, Sk, D) f32
    mask: (B, Sk, 1) bool, True = valid key (module applies ~mask internally)
    layer_params: list of per-layer param dicts (see init_layer_params).
    """
    B, Sq, D = x.shape
    Sk = enc.shape[1]
    L = len(layer_params)
    H, Hd = NUM_HEADS, HEAD_DIM
    scale = 1.0 / math.sqrt(Hd)
    cdt = compute_dtype

    # ---- wrapper-side weight re-layout: head structure lives in the weights ----
    def split_cols(w):                              # (D, D) -> (H, D, Hd)
        return w.reshape(D, H, Hd).transpose(1, 0, 2)

    wq, bq, wk, wvo, battn = [], [], [], [], []
    ln1g, ln1b, ln2g, ln2b = [], [], [], []
    w1, b1, w2, b2, wave = [], [], [], [], []
    for p in layer_params:
        wq.append(split_cols(p["wq"] * scale))      # fold 1/sqrt(head_dim)
        bq.append((p["bq"] * scale).reshape(1, H, Hd).transpose(1, 0, 2))
        wk.append(split_cols(p["wk"]))              # bk dropped (softmax-invariant)
        wv_h = split_cols(p["wv"])                  # (H, D, Hd)
        wo_h = p["wo"].reshape(H, Hd, D)            # per-head rows of Wo
        wvo.append(jnp.einsum("hdk,hkf->hdf", wv_h, wo_h))      # (H, D, D)
        battn.append(p["bv"] @ p["wo"] + p["bo"])   # (1, D): bv folded via softmax-sum==1
        ln1g.append(p["ln1g"]); ln1b.append(p["ln1b"])
        ln2g.append(p["ln2g"]); ln2b.append(p["ln2b"])
        w1.append(p["w1"]); b1.append(p["b1"])
        w2.append(p["w2"]); b2.append(p["b2"])
        a, c = p["wave"][0], p["wave"][1]           # a*sin + c*cos == R*sin(x+phi)
        wave.append(jnp.stack([jnp.sqrt(a * a + c * c), jnp.arctan2(c, a)]))

    stk = lambda xs, dt=jnp.float32: jnp.stack(xs, 0).astype(dt)
    wq, bq = stk(wq, cdt), stk(bq)                  # (L,H,D,Hd) / (L,H,1,Hd)
    wk, wvo = stk(wk, cdt), stk(wvo, cdt)           # (L,H,D,Hd) / (L,H,D,D)
    battn = stk(battn)                              # (L,1,D)
    ln1g, ln1b = stk(ln1g), stk(ln1b)
    ln2g, ln2b = stk(ln2g), stk(ln2b)
    w1, b1 = stk(w1, cdt), stk(b1)                  # (L,D,F) / (L,1,F)
    w2, b2 = stk(w2, cdt), stk(b2)                  # (L,F,D) / (L,1,D)
    wave = jnp.stack(wave, 0).reshape(-1).astype(jnp.float32)   # (2L,) -> SMEM

    # ---- key-padding mask as additive bias (0 valid / NEG_INF masked) ----
    bias = jnp.where(mask[..., 0], 0.0, NEG_INF).astype(jnp.float32)[:, None, :]

    # ---- batch tiling: large tile, but keep >=2 grid steps (v7x has 2 TCs) ----
    tb = max(1, min(block_b, B))
    if pl.cdiv(B, tb) < 2 and B > 1:
        tb = pl.cdiv(B, 2)
    nb = pl.cdiv(B, tb)
    padB = nb * tb
    if padB != B:
        padn = padB - B
        x = jnp.pad(x, ((0, padn), (0, 0), (0, 0)))
        enc = jnp.pad(enc, ((0, padn), (0, 0), (0, 0)))
        bias = jnp.pad(bias, ((0, padn), (0, 0), (0, 0)))   # 0.0 = all valid

    Mq, Mk = tb * Sq, tb * Sk
    xf = x.reshape(padB * Sq, D).astype(jnp.float32)        # flattened slabs
    ef = enc.reshape(padB * Sk, D).astype(jnp.float32)

    def kernel(x_ref, enc_ref, bias_ref,
               ln1g_ref, ln1b_ref, wq_ref, bq_ref, wk_ref, wvo_ref, battn_ref,
               ln2g_ref, ln2b_ref, w1_ref, b1_ref, w2_ref, b2_ref, wave_ref,
               o_ref, acc_ref):
        l = pl.program_id(1)

        @pl.when(l == 0)
        def _init():                                 # residual stream -> VMEM scratch
            acc_ref[...] = x_ref[...]

        xcur = acc_ref[...]                          # (Mq, D) f32
        encf = enc_ref[...].astype(cdt)              # (Mk, D) MXU dtype
        bias3 = jnp.broadcast_to(bias_ref[...], (tb, Sq, Sk))   # hoisted once

        # ---- pre-attention LayerNorm + cross attention --------------------
        x2 = _layernorm(xcur, ln1g_ref[0], ln1b_ref[0]).astype(cdt)
        attn = jnp.zeros((tb, Sq, D), jnp.float32)
        for h in range(H):        # static unroll; head split folded into weights
            qh = jnp.dot(x2, wq_ref[0, h], preferred_element_type=jnp.float32)
            qh = (qh + bq_ref[0, h]).reshape(tb, Sq, Hd).astype(cdt)
            kh = jnp.dot(encf, wk_ref[0, h], preferred_element_type=jnp.float32)
            kh = kh.reshape(tb, Sk, Hd).astype(cdt)
            vh = jnp.dot(encf, wvo_ref[0, h], preferred_element_type=jnp.float32)
            vh = vh.reshape(tb, Sk, D).astype(cdt)   # already projected by Wo rows
            s = jnp.einsum("bqd,bkd->bqk", qh, kh,
                           preferred_element_type=jnp.float32) + bias3
            s = s - jnp.max(s, axis=-1, keepdims=True)
            pr = jnp.exp(s)
            pr = pr * pl.reciprocal(jnp.sum(pr, axis=-1, keepdims=True),
                                    approx=True)
            attn = attn + jnp.einsum("bqk,bkd->bqd", pr.astype(cdt), vh,
                                     preferred_element_type=jnp.float32)
        xcur = xcur + attn.reshape(Mq, D) + battn_ref[0]     # residual 1

        # ---- LayerNorm 2 + MLP (Linear -> WaveAct -> Linear) --------------
        x2 = _layernorm(xcur, ln2g_ref[0], ln2b_ref[0]).astype(cdt)
        h1 = jnp.dot(x2, w1_ref[0], preferred_element_type=jnp.float32) + b1_ref[0]
        h1 = wave_ref[2 * l] * jnp.sin(h1 + wave_ref[2 * l + 1])    # R*sin(x+phi)
        h2 = jnp.dot(h1.astype(cdt), w2_ref[0],
                     preferred_element_type=jnp.float32) + b2_ref[0]
        xcur = xcur + h2                                      # residual 2

        acc_ref[...] = xcur

        @pl.when(l == pl.num_programs(1) - 1)
        def _store():
            o_ref[...] = xcur

    def wspec(arr):                      # per-layer weight block, indexed by l
        rest = arr.shape[1:]
        return pl.BlockSpec((1,) + rest, lambda b, l: (l,) + (0,) * len(rest))

    in_specs = [
        pl.BlockSpec((Mq, D), lambda b, l: (b, 0)),          # x (flattened)
        pl.BlockSpec((Mk, D), lambda b, l: (b, 0)),          # encoder_out
        pl.BlockSpec((tb, 1, Sk), lambda b, l: (b, 0, 0)),   # additive key mask
        wspec(ln1g), wspec(ln1b), wspec(wq), wspec(bq), wspec(wk),
        wspec(wvo), wspec(battn), wspec(ln2g), wspec(ln2b),
        wspec(w1), wspec(b1), wspec(w2), wspec(b2),
        pl.BlockSpec(memory_space=pltpu.MemorySpace.SMEM),   # WaveAct (R, phi)
    ]

    out = pl.pallas_call(
        kernel,
        out_shape=jax.ShapeDtypeStruct((padB * Sq, D), jnp.float32),
        grid=(nb, L),
        in_specs=in_specs,
        out_specs=pl.BlockSpec((Mq, D), lambda b, l: (b, 0)),
        scratch_shapes=[pltpu.VMEM((Mq, D), jnp.float32)],
        compiler_params=pltpu.CompilerParams(
            dimension_semantics=("parallel", "arbitrary"),
            # below v7x's 64 MiB physical VMEM, above v5e's 16 MiB default scope
            vmem_limit_bytes=48 * 1024 * 1024),
    )(xf, ef, bias,
      ln1g, ln1b, wq, bq, wk, wvo, battn,
      ln2g, ln2b, w1, b1, w2, b2, wave)

    return out.reshape(padB, Sq, D)[:B]


def reference_decoder(x, enc, mask, layer_params):
    """Pure-JAX reference mirroring the PyTorch Decoder forward."""
    def ln(t, g, b):
        mu = jnp.mean(t, -1, keepdims=True)
        var = jnp.mean((t - mu) ** 2, -1, keepdims=True)
        return (t - mu) / jnp.sqrt(var + LN_EPS) * g + b

    B, Sq, D = x.shape
    Sk = enc.shape[1]
    key_valid = mask[:, None, None, :, 0]                    # (B,1,1,Sk)
    for p in layer_params:
        x2 = ln(x, p["ln1g"], p["ln1b"])
        q = x2 @ p["wq"] + p["bq"]
        k = enc @ p["wk"] + p["bk"]
        v = enc @ p["wv"] + p["bv"]
        qh = q.reshape(B, Sq, NUM_HEADS, HEAD_DIM)
        kh = k.reshape(B, Sk, NUM_HEADS, HEAD_DIM)
        vh = v.reshape(B, Sk, NUM_HEADS, HEAD_DIM)
        s = jnp.einsum("bqhd,bkhd->bhqk", qh, kh) / math.sqrt(HEAD_DIM)
        s = jnp.where(key_valid, s, NEG_INF)
        a = jax.nn.softmax(s, axis=-1)
        o = jnp.einsum("bhqk,bkhd->bqhd", a, vh).reshape(B, Sq, D)
        x = x + (o @ p["wo"] + p["bo"])
        x2 = ln(x, p["ln2g"], p["ln2b"])
        h1 = x2 @ p["w1"] + p["b1"]
        h1 = p["wave"][0] * jnp.sin(h1) + p["wave"][1] * jnp.cos(h1)
        x = x + (h1 @ p["w2"] + p["b2"])
    return x


def init_layer_params(key):
    ks = jax.random.split(key, 12)
    def rnd(k, shape, scale=0.1):
        return scale * jax.random.normal(k, shape, jnp.float32)
    return {
        "ln1g": jnp.ones((1, D_MODEL), jnp.float32),
        "ln1b": jnp.zeros((1, D_MODEL), jnp.float32),
        "ln2g": jnp.ones((1, D_MODEL), jnp.float32),
        "ln2b": jnp.zeros((1, D_MODEL), jnp.float32),
        "wq": rnd(ks[0], (D_MODEL, D_MODEL)),
        "wk": rnd(ks[1], (D_MODEL, D_MODEL)),
        "wv": rnd(ks[2], (D_MODEL, D_MODEL)),
        "bq": rnd(ks[3], (1, D_MODEL), 0.01),
        "bk": rnd(ks[4], (1, D_MODEL), 0.01),
        "bv": rnd(ks[5], (1, D_MODEL), 0.01),
        "wo": rnd(ks[6], (D_MODEL, D_MODEL)),
        "bo": rnd(ks[7], (1, D_MODEL), 0.01),
        "w1": rnd(ks[8], (D_MODEL, D_FF)),
        "b1": rnd(ks[9], (1, D_FF), 0.01),
        "wave": jnp.array([1.0, 1.0], jnp.float32)
                + 0.1 * jax.random.normal(ks[10], (2,), jnp.float32),
        "w2": rnd(ks[11], (D_FF, D_MODEL)),
        "b2": jnp.zeros((1, D_MODEL), jnp.float32),
    }


if __name__ == "__main__":
    B, Sq, Sk, NUM_LAYERS = 2, 8, 8, 2
    key = jax.random.PRNGKey(0)
    kx, ke, kp = jax.random.split(key, 3)

    x = jax.random.normal(kx, (B, Sq, D_MODEL), jnp.float32)
    enc = jax.random.normal(ke, (B, Sk, D_MODEL), jnp.float32)
    # mask: True = valid key position (module applies key_padding_mask=~mask)
    valid_len = jnp.array([Sk, Sk - 3])
    mask = (jnp.arange(Sk)[None, :] < valid_len[:, None])[..., None]  # (B,Sk,1)

    layer_params = [init_layer_params(k) for k in jax.random.split(kp, NUM_LAYERS)]

    ref = reference_decoder(x, enc, mask, layer_params)

    # f32-operand mode: tight check of all structural rewrites (per-head weight
    # folding, fused Wv@Wo, dropped key bias, WaveAct amplitude/phase form,
    # additive mask bias, approx EUP reciprocal).
    out_f32 = jax.block_until_ready(
        decoder_forward(x, enc, mask, layer_params, compute_dtype=jnp.float32))
    assert out_f32.shape == (B, Sq, D_MODEL)
    assert jnp.allclose(out_f32, ref, rtol=2e-3, atol=2e-3), \
        float(jnp.max(jnp.abs(out_f32 - ref)))

    # bf16-operand mode (default fast path on v6e/v7x MXU): looser tolerance
    # for bf16 operand rounding (~2^-9 rel) compounded over layers/matmuls.
    out_bf16 = jax.block_until_ready(decoder_forward(x, enc, mask, layer_params))
    assert out_bf16.shape == (B, Sq, D_MODEL)
    assert jnp.allclose(out_bf16, ref, rtol=5e-2, atol=5e-2), \
        float(jnp.max(jnp.abs(out_bf16 - ref)))

    print("KERNEL_OK")
</pallas_src>

<mosaic_0001>
module attributes {stable_mosaic.version = 11 : i64} {
  func.func @kernel(%arg0: i32, %arg1: i32, %arg2: memref<8x32xf32, #tpu.memory_space<vmem>>, %arg3: memref<8x32xf32, #tpu.memory_space<vmem>>, %arg4: memref<1x1x8xf32, #tpu.memory_space<vmem>>, %arg5: memref<1x1x32xf32, #tpu.memory_space<vmem>>, %arg6: memref<1x1x32xf32, #tpu.memory_space<vmem>>, %arg7: memref<1x4x32x8xf32, #tpu.memory_space<vmem>>, %arg8: memref<1x4x1x8xf32, #tpu.memory_space<vmem>>, %arg9: memref<1x4x32x8xf32, #tpu.memory_space<vmem>>, %arg10: memref<1x4x32x32xf32, #tpu.memory_space<vmem>>, %arg11: memref<1x1x32xf32, #tpu.memory_space<vmem>>, %arg12: memref<1x1x32xf32, #tpu.memory_space<vmem>>, %arg13: memref<1x1x32xf32, #tpu.memory_space<vmem>>, %arg14: memref<1x32x256xf32, #tpu.memory_space<vmem>>, %arg15: memref<1x1x256xf32, #tpu.memory_space<vmem>>, %arg16: memref<1x256x32xf32, #tpu.memory_space<vmem>>, %arg17: memref<1x1x32xf32, #tpu.memory_space<vmem>>, %arg18: memref<4xf32, #tpu.memory_space<smem>>, %arg19: memref<8x32xf32, #tpu.memory_space<vmem>>, %arg20: memref<8x32xf32, #tpu.memory_space<vmem>>) attributes {dimension_semantics = [#tpu.dimension_semantics<parallel>, #tpu.dimension_semantics<arbitrary>], iteration_bounds = array<i64: 2, 2>, scalar_prefetch = 0 : i64, scratch_operands = 1 : i64, tpu.core_type = #tpu.core_type<tc>, window_params = [{transform_indices = @transform_0, window_bounds = array<i64: 8, 32>}, {transform_indices = @transform_1, window_bounds = array<i64: 8, 32>}, {transform_indices = @transform_2, window_bounds = array<i64: 1, 1, 8>}, {transform_indices = @transform_3, window_bounds = array<i64: 1, 1, 32>}, {transform_indices = @transform_4, window_bounds = array<i64: 1, 1, 32>}, {transform_indices = @transform_5, window_bounds = array<i64: 1, 4, 32, 8>}, {transform_indices = @transform_6, window_bounds = array<i64: 1, 4, 1, 8>}, {transform_indices = @transform_7, window_bounds = array<i64: 1, 4, 32, 8>}, {transform_indices = @transform_8, window_bounds = array<i64: 1, 4, 32, 32>}, {transform_indices = @transform_9, window_bounds = array<i64: 1, 1, 32>}, {transform_indices = @transform_10, window_bounds = array<i64: 1, 1, 32>}, {transform_indices = @transform_11, window_bounds = array<i64: 1, 1, 32>}, {transform_indices = @transform_12, window_bounds = array<i64: 1, 32, 256>}, {transform_indices = @transform_13, window_bounds = array<i64: 1, 1, 256>}, {transform_indices = @transform_14, window_bounds = array<i64: 1, 256, 32>}, {transform_indices = @transform_15, window_bounds = array<i64: 1, 1, 32>}, {transform_indices = @transform_16, window_bounds = array<i64: 4>}, {transform_indices = @transform_17, window_bounds = array<i64: 8, 32>}]} {
    %c0_i32 = arith.constant 0 : i32
    %0 = arith.cmpi eq, %arg1, %c0_i32 : i32
    %1 = arith.extui %0 : i1 to i32
    %c0_i32_0 = arith.constant 0 : i32
    %2 = arith.cmpi ne, %1, %c0_i32_0 : i32
    scf.if %2 {
      %c0_140 = arith.constant 0 : index
      %c0_141 = arith.constant 0 : index
      %218 = vector.load %arg2[%c0_140, %c0_141] : memref<8x32xf32, #tpu.memory_space<vmem>>, vector<8x32xf32>
      %c0_142 = arith.constant 0 : index
      %c0_143 = arith.constant 0 : index
      %219 = vector.load %arg20[%c0_142, %c0_143] : memref<8x32xf32, #tpu.memory_space<vmem>>, vector<8x32xf32>
      tpu.vector_store %arg20[%c0_142, %c0_143], %218 {strides = array<i32>} : memref<8x32xf32, #tpu.memory_space<vmem>>, vector<8x32xf32>,
    } else {
    }
    %c0 = arith.constant 0 : index
    %c0_1 = arith.constant 0 : index
    %3 = vector.load %arg20[%c0, %c0_1] : memref<8x32xf32, #tpu.memory_space<vmem>>, vector<8x32xf32>
    %c0_2 = arith.constant 0 : index
    %c0_3 = arith.constant 0 : index
    %4 = vector.load %arg3[%c0_2, %c0_3] : memref<8x32xf32, #tpu.memory_space<vmem>>, vector<8x32xf32>
    %c0_4 = arith.constant 0 : index
    %c0_5 = arith.constant 0 : index
    %c0_6 = arith.constant 0 : index
    %5 = vector.load %arg4[%c0_4, %c0_5, %c0_6] : memref<1x1x8xf32, #tpu.memory_space<vmem>>, vector<1x1x8xf32>
    %6 = vector.shape_cast %5 : vector<1x1x8xf32> to vector<1x1x8xf32>
    %7 = vector.broadcast %6 : vector<1x1x8xf32> to vector<1x8x8xf32>
    %c0_7 = arith.constant 0 : index
    %c0_8 = arith.constant 0 : index
    %c0_9 = arith.constant 0 : index
    %8 = vector.load %arg5[%c0_7, %c0_8, %c0_9] : memref<1x1x32xf32, #tpu.memory_space<vmem>>, vector<1x1x32xf32>
    %9 = vector.shape_cast %8 : vector<1x1x32xf32> to vector<1x32xf32>
    %c0_10 = arith.constant 0 : index
    %c0_11 = arith.constant 0 : index
    %c0_12 = arith.constant 0 : index
    %10 = vector.load %arg6[%c0_10, %c0_11, %c0_12] : memref<1x1x32xf32, #tpu.memory_space<vmem>>, vector<1x1x32xf32>
    %11 = vector.shape_cast %10 : vector<1x1x32xf32> to vector<1x32xf32>
    %cst = arith.constant dense<0.000000e+00> : vector<8xf32>
    %12 = vector.multi_reduction <add>, %3, %cst [1] : vector<8x32xf32> to vector<8xf32>
    %13 = vector.shape_cast %12 : vector<8xf32> to vector<8x1xf32>
    %cst_13 = arith.constant 3.200000e+01 : f32
    %14 = vector.broadcast %cst_13 : f32 to vector<8x1xf32>
    %15 = arith.divf %13, %14 : vector<8x1xf32>
    %16 = vector.broadcast %15 : vector<8x1xf32> to vector<8x32xf32>
    %17 = arith.subf %3, %16 : vector<8x32xf32>
    %18 = arith.mulf %17, %17 : vector<8x32xf32>
    %cst_14 = arith.constant dense<0.000000e+00> : vector<8xf32>
    %19 = vector.multi_reduction <add>, %18, %cst_14 [1] : vector<8x32xf32> to vector<8xf32>
    %20 = vector.shape_cast %19 : vector<8xf32> to vector<8x1xf32>
    %cst_15 = arith.constant 3.200000e+01 : f32
    %21 = vector.broadcast %cst_15 : f32 to vector<8x1xf32>
    %22 = arith.divf %20, %21 : vector<8x1xf32>
    %23 = vector.broadcast %15 : vector<8x1xf32> to vector<8x32xf32>
    %24 = arith.subf %3, %23 : vector<8x32xf32>
    %cst_16 = arith.constant 9.99999974E-6 : f32
    %25 = vector.broadcast %cst_16 : f32 to vector<8x1xf32>
    %26 = arith.addf %22, %25 : vector<8x1xf32>
    %27 = math.rsqrt %26 : vector<8x1xf32>
    %28 = vector.broadcast %27 : vector<8x1xf32> to vector<8x32xf32>
    %29 = arith.mulf %24, %28 : vector<8x32xf32>
    %30 = vector.broadcast %9 : vector<1x32xf32> to vector<8x32xf32>
    %31 = arith.mulf %29, %30 : vector<8x32xf32>
    %32 = vector.broadcast %11 : vector<1x32xf32> to vector<8x32xf32>
    %33 = arith.addf %31, %32 : vector<8x32xf32>
    %cst_17 = arith.constant 0.000000e+00 : f32
    %34 = vector.broadcast %cst_17 : f32 to vector<1x8x32xf32>
    %c0_18 = arith.constant 0 : index
    %c0_19 = arith.constant 0 : index
    %c0_20 = arith.constant 0 : index
    %c0_21 = arith.constant 0 : index
    %35 = vector.load %arg7[%c0_18, %c0_19, %c0_20, %c0_21] : memref<1x4x32x8xf32, #tpu.memory_space<vmem>>, vector<1x1x32x8xf32>
    %36 = vector.shape_cast %35 : vector<1x1x32x8xf32> to vector<32x8xf32>
    %cst_22 = arith.constant dense<0.000000e+00> : vector<8x8xf32>
    %37 = tpu.matmul %33, %36, %cst_22 {dimension_numbers = #tpu.dot_dimension_numbers<[1], [0], [0], [1], [0, 0, 1, 1], [], []>} : vector<8x32xf32>, vector<32x8xf32>, vector<8x8xf32> -> vector<8x8xf32>
    %c0_23 = arith.constant 0 : index
    %c0_24 = arith.constant 0 : index
    %c0_25 = arith.constant 0 : index
    %c0_26 = arith.constant 0 : index
    %38 = vector.load %arg8[%c0_23, %c0_24, %c0_25, %c0_26] : memref<1x4x1x8xf32, #tpu.memory_space<vmem>>, vector<1x1x1x8xf32>
    %39 = vector.shape_cast %38 : vector<1x1x1x8xf32> to vector<1x8xf32>
    %40 = vector.broadcast %39 : vector<1x8xf32> to vector<8x8xf32>
    %41 = arith.addf %37, %40 : vector<8x8xf32>
    %42 = vector.shape_cast %41 : vector<8x8xf32> to vector<1x8x8xf32>
    %c0_27 = arith.constant 0 : index
    %c0_28 = arith.constant 0 : index
    %c0_29 = arith.constant 0 : index
    %c0_30 = arith.constant 0 : index
    %43 = vector.load %arg9[%c0_27, %c0_28, %c0_29, %c0_30] : memref<1x4x32x8xf32, #tpu.memory_space<vmem>>, vector<1x1x32x8xf32>
    %44 = vector.shape_cast %43 : vector<1x1x32x8xf32> to vector<32x8xf32>
    %cst_31 = arith.constant dense<0.000000e+00> : vector<8x8xf32>
    %45 = tpu.matmul %4, %44, %cst_31 {dimension_numbers = #tpu.dot_dimension_numbers<[1], [0], [0], [1], [0, 0, 1, 1], [], []>} : vector<8x32xf32>, vector<32x8xf32>, vector<8x8xf32> -> vector<8x8xf32>
    %46 = vector.shape_cast %45 : vector<8x8xf32> to vector<1x8x8xf32>
    %c0_32 = arith.constant 0 : index
    %c0_33 = arith.constant 0 : index
    %c0_34 = arith.constant 0 : index
    %c0_35 = arith.constant 0 : index
    %47 = vector.load %arg10[%c0_32, %c0_33, %c0_34, %c0_35] : memref<1x4x32x32xf32, #tpu.memory_space<vmem>>, vector<1x1x32x32xf32>
    %48 = vector.shape_cast %47 : vector<1x1x32x32xf32> to vector<32x32xf32>
    %cst_36 = arith.constant dense<0.000000e+00> : vector<8x32xf32>
    %49 = tpu.matmul %4, %48, %cst_36 {dimension_numbers = #tpu.dot_dimension_numbers<[1], [0], [0], [1], [0, 0, 1, 1], [], []>} : vector<8x32xf32>, vector<32x32xf32>, vector<8x32xf32> -> vector<8x32xf32>
    %50 = vector.shape_cast %49 : vector<8x32xf32> to vector<1x8x32xf32>
    "tpu.trace_start"() <{level = 10 : i32, message = "bqd,bkd->bqk"}> : () -> ()
    %cst_37 = arith.constant dense<0.000000e+00> : vector<1x8x8xf32>
    %51 = tpu.matmul %42, %46, %cst_37 {dimension_numbers = #tpu.dot_dimension_numbers<[2], [2], [1], [1], [0, 0, 0, 1, 1, 1], [0], [0]>} : vector<1x8x8xf32>, vector<1x8x8xf32>, vector<1x8x8xf32> -> vector<1x8x8xf32>
    "tpu.trace_stop"() : () -> ()
    %52 = arith.addf %51, %7 : vector<1x8x8xf32>
    %cst_38 = arith.constant dense<0xFF800000> : vector<1x8xf32>
    %53 = vector.multi_reduction <maximumf>, %52, %cst_38 [2] : vector<1x8x8xf32> to vector<1x8xf32>
    %54 = vector.shape_cast %53 : vector<1x8xf32> to vector<1x8x1xf32>
    %55 = vector.broadcast %54 : vector<1x8x1xf32> to vector<1x8x8xf32>
    %56 = arith.subf %52, %55 : vector<1x8x8xf32>
    %57 = math.exp %56 : vector<1x8x8xf32>
    %cst_39 = arith.constant dense<0.000000e+00> : vector<1x8xf32>
    %58 = vector.multi_reduction <add>, %57, %cst_39 [2] : vector<1x8x8xf32> to vector<1x8xf32>
    %59 = vector.shape_cast %58 : vector<1x8xf32> to vector<1x8x1xf32>
    %60 = tpu.reciprocal %59 {approx = true} : vector<1x8x1xf32> -> vector<1x8x1xf32>
    %61 = vector.broadcast %60 : vector<1x8x1xf32> to vector<1x8x8xf32>
    %62 = arith.mulf %57, %61 : vector<1x8x8xf32>
    "tpu.trace_start"() <{level = 10 : i32, message = "bqk,bkd->bqd"}> : () -> ()
    %cst_40 = arith.constant dense<0.000000e+00> : vector<1x8x32xf32>
    %63 = tpu.matmul %62, %50, %cst_40 {dimension_numbers = #tpu.dot_dimension_numbers<[2], [1], [1], [2], [0, 0, 0, 1, 1, 2], [0], [0]>} : vector<1x8x8xf32>, vector<1x8x32xf32>, vector<1x8x32xf32> -> vector<1x8x32xf32>
    "tpu.trace_stop"() : () -> ()
    %64 = arith.addf %34, %63 : vector<1x8x32xf32>
    %c0_41 = arith.constant 0 : index
    %c1 = arith.constant 1 : index
    %c0_42 = arith.constant 0 : index
    %c0_43 = arith.constant 0 : index
    %65 = vector.load %arg7[%c0_41, %c1, %c0_42, %c0_43] : memref<1x4x32x8xf32, #tpu.memory_space<vmem>>, vector<1x1x32x8xf32>
    %66 = vector.shape_cast %65 : vector<1x1x32x8xf32> to vector<32x8xf32>
    %cst_44 = arith.constant dense<0.000000e+00> : vector<8x8xf32>
    %67 = tpu.matmul %33, %66, %cst_44 {dimension_numbers = #tpu.dot_dimension_numbers<[1], [0], [0], [1], [0, 0, 1, 1], [], []>} : vector<8x32xf32>, vector<32x8xf32>, vector<8x8xf32> -> vector<8x8xf32>
    %c0_45 = arith.constant 0 : index
    %c1_46 = arith.constant 1 : index
    %c0_47 = arith.constant 0 : index
    %c0_48 = arith.constant 0 : index
    %68 = vector.load %arg8[%c0_45, %c1_46, %c0_47, %c0_48] : memref<1x4x1x8xf32, #tpu.memory_space<vmem>>, vector<1x1x1x8xf32>
    %69 = vector.shape_cast %68 : vector<1x1x1x8xf32> to vector<1x8xf32>
    %70 = vector.broadcast %69 : vector<1x8xf32> to vector<8x8xf32>
    %71 = arith.addf %67, %70 : vector<8x8xf32>
    %72 = vector.shape_cast %71 : vector<8x8xf32> to vector<1x8x8xf32>
    %c0_49 = arith.constant 0 : index
    %c1_50 = arith.constant 1 : index
    %c0_51 = arith.constant 0 : index
    %c0_52 = arith.constant 0 : index
    %73 = vector.load %arg9[%c0_49, %c1_50, %c0_51, %c0_52] : memref<1x4x32x8xf32, #tpu.memory_space<vmem>>, vector<1x1x32x8xf32>
    %74 = vector.shape_cast %73 : vector<1x1x32x8xf32> to vector<32x8xf32>
    %cst_53 = arith.constant dense<0.000000e+00> : vector<8x8xf32>
    %75 = tpu.matmul %4, %74, %cst_53 {dimension_numbers = #tpu.dot_dimension_numbers<[1], [0], [0], [1], [0, 0, 1, 1], [], []>} : vector<8x32xf32>, vector<32x8xf32>, vector<8x8xf32> -> vector<8x8xf32>
    %76 = vector.shape_cast %75 : vector<8x8xf32> to vector<1x8x8xf32>
    %c0_54 = arith.constant 0 : index
    %c1_55 = arith.constant 1 : index
    %c0_56 = arith.constant 0 : index
    %c0_57 = arith.constant 0 : index
    %77 = vector.load %arg10[%c0_54, %c1_55, %c0_56, %c0_57] : memref<1x4x32x32xf32, #tpu.memory_space<vmem>>, vector<1x1x32x32xf32>
    %78 = vector.shape_cast %77 : vector<1x1x32x32xf32> to vector<32x32xf32>
    %cst_58 = arith.constant dense<0.000000e+00> : vector<8x32xf32>
    %79 = tpu.matmul %4, %78, %cst_58 {dimension_numbers = #tpu.dot_dimension_numbers<[1], [0], [0], [1], [0, 0, 1, 1], [], []>} : vector<8x32xf32>, vector<32x32xf32>, vector<8x32xf32> -> vector<8x32xf32>
    %80 = vector.shape_cast %79 : vector<8x32xf32> to vector<1x8x32xf32>
    "tpu.trace_start"() <{level = 10 : i32, message = "bqd,bkd->bqk"}> : () -> ()
    %cst_59 = arith.constant dense<0.000000e+00> : vector<1x8x8xf32>
    %81 = tpu.matmul %72, %76, %cst_59 {dimension_numbers = #tpu.dot_dimension_numbers<[2], [2], [1], [1], [0, 0, 0, 1, 1, 1], [0], [0]>} : vector<1x8x8xf32>, vector<1x8x8xf32>, vector<1x8x8xf32> -> vector<1x8x8xf32>
    "tpu.trace_stop"() : () -> ()
    %82 = arith.addf %81, %7 : vector<1x8x8xf32>
    %cst_60 = arith.constant dense<0xFF800000> : vector<1x8xf32>
    %83 = vector.multi_reduction <maximumf>, %82, %cst_60 [2] : vector<1x8x8xf32> to vector<1x8xf32>
    %84 = vector.shape_cast %83 : vector<1x8xf32> to vector<1x8x1xf32>
    %85 = vector.broadcast %84 : vector<1x8x1xf32> to vector<1x8x8xf32>
    %86 = arith.subf %82, %85 : vector<1x8x8xf32>
    %87 = math.exp %86 : vector<1x8x8xf32>
    %cst_61 = arith.constant dense<0.000000e+00> : vector<1x8xf32>
    %88 = vector.multi_reduction <add>, %87, %cst_61 [2] : vector<1x8x8xf32> to vector<1x8xf32>
    %89 = vector.shape_cast %88 : vector<1x8xf32> to vector<1x8x1xf32>
    %90 = tpu.reciprocal %89 {approx = true} : vector<1x8x1xf32> -> vector<1x8x1xf32>
    %91 = vector.broadcast %90 : vector<1x8x1xf32> to vector<1x8x8xf32>
    %92 = arith.mulf %87, %91 : vector<1x8x8xf32>
    "tpu.trace_start"() <{level = 10 : i32, message = "bqk,bkd->bqd"}> : () -> ()
    %cst_62 = arith.constant dense<0.000000e+00> : vector<1x8x32xf32>
    %93 = tpu.matmul %92, %80, %cst_62 {dimension_numbers = #tpu.dot_dimension_numbers<[2], [1], [1], [2], [0, 0, 0, 1, 1, 2], [0], [0]>} : vector<1x8x8xf32>, vector<1x8x32xf32>, vector<1x8x32xf32> -> vector<1x8x32xf32>
    "tpu.trace_stop"() : () -> ()
    %94 = arith.addf %64, %93 : vector<1x8x32xf32>
    %c0_63 = arith.constant 0 : index
    %c2 = arith.constant 2 : index
    %c0_64 = arith.constant 0 : index
    %c0_65 = arith.constant 0 : index
    %95 = vector.load %arg7[%c0_63, %c2, %c0_64, %c0_65] : memref<1x4x32x8xf32, #tpu.memory_space<vmem>>, vector<1x1x32x8xf32>
    %96 = vector.shape_cast %95 : vector<1x1x32x8xf32> to vector<32x8xf32>
    %cst_66 = arith.constant dense<0.000000e+00> : vector<8x8xf32>
    %97 = tpu.matmul %33, %96, %cst_66 {dimension_numbers = #tpu.dot_dimension_numbers<[1], [0], [0], [1], [0, 0, 1, 1], [], []>} : vector<8x32xf32>, vector<32x8xf32>, vector<8x8xf32> -> vector<8x8xf32>
    %c0_67 = arith.constant 0 : index
    %c2_68 = arith.constant 2 : index
    %c0_69 = arith.constant 0 : index
    %c0_70 = arith.constant 0 : index
    %98 = vector.load %arg8[%c0_67, %c2_68, %c0_69, %c0_70] : memref<1x4x1x8xf32, #tpu.memory_space<vmem>>, vector<1x1x1x8xf32>
    %99 = vector.shape_cast %98 : vector<1x1x1x8xf32> to vector<1x8xf32>
    %100 = vector.broadcast %99 : vector<1x8xf32> to vector<8x8xf32>
    %101 = arith.addf %97, %100 : vector<8x8xf32>
    %102 = vector.shape_cast %101 : vector<8x8xf32> to vector<1x8x8xf32>
    %c0_71 = arith.constant 0 : index
    %c2_72 = arith.constant 2 : index
    %c0_73 = arith.constant 0 : index
    %c0_74 = arith.constant 0 : index
    %103 = vector.load %arg9[%c0_71, %c2_72, %c0_73, %c0_74] : memref<1x4x32x8xf32, #tpu.memory_space<vmem>>, vector<1x1x32x8xf32>
    %104 = vector.shape_cast %103 : vector<1x1x32x8xf32> to vector<32x8xf32>
    %cst_75 = arith.constant dense<0.000000e+00> : vector<8x8xf32>
    %105 = tpu.matmul %4, %104, %cst_75 {dimension_numbers = #tpu.dot_dimension_numbers<[1], [0], [0], [1], [0, 0, 1, 1], [], []>} : vector<8x32xf32>, vector<32x8xf32>, vector<8x8xf32> -> vector<8x8xf32>
    %106 = vector.shape_cast %105 : vector<8x8xf32> to vector<1x8x8xf32>
    %c0_76 = arith.constant 0 : index
    %c2_77 = arith.constant 2 : index
    %c0_78 = arith.constant 0 : index
    %c0_79 = arith.constant 0 : index
    %107 = vector.load %arg10[%c0_76, %c2_77, %c0_78, %c0_79] : memref<1x4x32x32xf32, #tpu.memory_space<vmem>>, vector<1x1x32x32xf32>
    %108 = vector.shape_cast %107 : vector<1x1x32x32xf32> to vector<32x32xf32>
    %cst_80 = arith.constant dense<0.000000e+00> : vector<8x32xf32>
    %109 = tpu.matmul %4, %108, %cst_80 {dimension_numbers = #tpu.dot_dimension_numbers<[1], [0], [0], [1], [0, 0, 1, 1], [], []>} : vector<8x32xf32>, vector<32x32xf32>, vector<8x32xf32> -> vector<8x32xf32>
    %110 = vector.shape_cast %109 : vector<8x32xf32> to vector<1x8x32xf32>
    "tpu.trace_start"() <{level = 10 : i32, message = "bqd,bkd->bqk"}> : () -> ()
    %cst_81 = arith.constant dense<0.000000e+00> : vector<1x8x8xf32>
    %111 = tpu.matmul %102, %106, %cst_81 {dimension_numbers = #tpu.dot_dimension_numbers<[2], [2], [1], [1], [0, 0, 0, 1, 1, 1], [0], [0]>} : vector<1x8x8xf32>, vector<1x8x8xf32>, vector<1x8x8xf32> -> vector<1x8x8xf32>
    "tpu.trace_stop"() : () -> ()
    %112 = arith.addf %111, %7 : vector<1x8x8xf32>
    %cst_82 = arith.constant dense<0xFF800000> : vector<1x8xf32>
    %113 = vector.multi_reduction <maximumf>, %112, %cst_82 [2] : vector<1x8x8xf32> to vector<1x8xf32>
    %114 = vector.shape_cast %113 : vector<1x8xf32> to vector<1x8x1xf32>
    %115 = vector.broadcast %114 : vector<1x8x1xf32> to vector<1x8x8xf32>
    %116 = arith.subf %112, %115 : vector<1x8x8xf32>
    %117 = math.exp %116 : vector<1x8x8xf32>
    %cst_83 = arith.constant dense<0.000000e+00> : vector<1x8xf32>
    %118 = vector.multi_reduction <add>, %117, %cst_83 [2] : vector<1x8x8xf32> to vector<1x8xf32>
    %119 = vector.shape_cast %118 : vector<1x8xf32> to vector<1x8x1xf32>
    %120 = tpu.reciprocal %119 {approx = true} : vector<1x8x1xf32> -> vector<1x8x1xf32>
    %121 = vector.broadcast %120 : vector<1x8x1xf32> to vector<1x8x8xf32>
    %122 = arith.mulf %117, %121 : vector<1x8x8xf32>
    "tpu.trace_start"() <{level = 10 : i32, message = "bqk,bkd->bqd"}> : () -> ()
    %cst_84 = arith.constant dense<0.000000e+00> : vector<1x8x32xf32>
    %123 = tpu.matmul %122, %110, %cst_84 {dimension_numbers = #tpu.dot_dimension_numbers<[2], [1], [1], [2], [0, 0, 0, 1, 1, 2], [0], [0]>} : vector<1x8x8xf32>, vector<1x8x32xf32>, vector<1x8x32xf32> -> vector<1x8x32xf32>
    "tpu.trace_stop"() : () -> ()
    %124 = arith.addf %94, %123 : vector<1x8x32xf32>
    %c0_85 = arith.constant 0 : index
    %c3 = arith.constant 3 : index
    %c0_86 = arith.constant 0 : index
    %c0_87 = arith.constant 0 : index
    %125 = vector.load %arg7[%c0_85, %c3, %c0_86, %c0_87] : memref<1x4x32x8xf32, #tpu.memory_space<vmem>>, vector<1x1x32x8xf32>
    %126 = vector.shape_cast %125 : vector<1x1x32x8xf32> to vector<32x8xf32>
    %cst_88 = arith.constant dense<0.000000e+00> : vector<8x8xf32>
    %127 = tpu.matmul %33, %126, %cst_88 {dimension_numbers = #tpu.dot_dimension_numbers<[1], [0], [0], [1], [0, 0, 1, 1], [], []>} : vector<8x32xf32>, vector<32x8xf32>, vector<8x8xf32> -> vector<8x8xf32>
    %c0_89 = arith.constant 0 : index
    %c3_90 = arith.constant 3 : index
    %c0_91 = arith.constant 0 : index
    %c0_92 = arith.constant 0 : index
    %128 = vector.load %arg8[%c0_89, %c3_90, %c0_91, %c0_92] : memref<1x4x1x8xf32, #tpu.memory_space<vmem>>, vector<1x1x1x8xf32>
    %129 = vector.shape_cast %128 : vector<1x1x1x8xf32> to vector<1x8xf32>
    %130 = vector.broadcast %129 : vector<1x8xf32> to vector<8x8xf32>
    %131 = arith.addf %127, %130 : vector<8x8xf32>
    %132 = vector.shape_cast %131 : vector<8x8xf32> to vector<1x8x8xf32>
    %c0_93 = arith.constant 0 : index
    %c3_94 = arith.constant 3 : index
    %c0_95 = arith.constant 0 : index
    %c0_96 = arith.constant 0 : index
    %133 = vector.load %arg9[%c0_93, %c3_94, %c0_95, %c0_96] : memref<1x4x32x8xf32, #tpu.memory_space<vmem>>, vector<1x1x32x8xf32>
    %134 = vector.shape_cast %133 : vector<1x1x32x8xf32> to vector<32x8xf32>
    %cst_97 = arith.constant dense<0.000000e+00> : vector<8x8xf32>
    %135 = tpu.matmul %4, %134, %cst_97 {dimension_numbers = #tpu.dot_dimension_numbers<[1], [0], [0], [1], [0, 0, 1, 1], [], []>} : vector<8x32xf32>, vector<32x8xf32>, vector<8x8xf32> -> vector<8x8xf32>
    %136 = vector.shape_cast %135 : vector<8x8xf32> to vector<1x8x8xf32>
    %c0_98 = arith.constant 0 : index
    %c3_99 = arith.constant 3 : index
    %c0_100 = arith.constant 0 : index
    %c0_101 = arith.constant 0 : index
    %137 = vector.load %arg10[%c0_98, %c3_99, %c0_100, %c0_101] : memref<1x4x32x32xf32, #tpu.memory_space<vmem>>, vector<1x1x32x32xf32>
    %138 = vector.shape_cast %137 : vector<1x1x32x32xf32> to vector<32x32xf32>
    %cst_102 = arith.constant dense<0.000000e+00> : vector<8x32xf32>
    %139 = tpu.matmul %4, %138, %cst_102 {dimension_numbers = #tpu.dot_dimension_numbers<[1], [0], [0], [1], [0, 0, 1, 1], [], []>} : vector<8x32xf32>, vector<32x32xf32>, vector<8x32xf32> -> vector<8x32xf32>
    %140 = vector.shape_cast %139 : vector<8x32xf32> to vector<1x8x32xf32>
    "tpu.trace_start"() <{level = 10 : i32, message = "bqd,bkd->bqk"}> : () -> ()
    %cst_103 = arith.constant dense<0.000000e+00> : vector<1x8x8xf32>
    %141 = tpu.matmul %132, %136, %cst_103 {dimension_numbers = #tpu.dot_dimension_numbers<[2], [2], [1], [1], [0, 0, 0, 1, 1, 1], [0], [0]>} : vector<1x8x8xf32>, vector<1x8x8xf32>, vector<1x8x8xf32> -> vector<1x8x8xf32>
    "tpu.trace_stop"() : () -> ()
    %142 = arith.addf %141, %7 : vector<1x8x8xf32>
    %cst_104 = arith.constant dense<0xFF800000> : vector<1x8xf32>
    %143 = vector.multi_reduction <maximumf>, %142, %cst_104 [2] : vector<1x8x8xf32> to vector<1x8xf32>
    %144 = vector.shape_cast %143 : vector<1x8xf32> to vector<1x8x1xf32>
    %145 = vector.broadcast %144 : vector<1x8x1xf32> to vector<1x8x8xf32>
    %146 = arith.subf %142, %145 : vector<1x8x8xf32>
    %147 = math.exp %146 : vector<1x8x8xf32>
    %cst_105 = arith.constant dense<0.000000e+00> : vector<1x8xf32>
    %148 = vector.multi_reduction <add>, %147, %cst_105 [2] : vector<1x8x8xf32> to vector<1x8xf32>
    %149 = vector.shape_cast %148 : vector<1x8xf32> to vector<1x8x1xf32>
    %150 = tpu.reciprocal %149 {approx = true} : vector<1x8x1xf32> -> vector<1x8x1xf32>
    %151 = vector.broadcast %150 : vector<1x8x1xf32> to vector<1x8x8xf32>
    %152 = arith.mulf %147, %151 : vector<1x8x8xf32>
    "tpu.trace_start"() <{level = 10 : i32, message = "bqk,bkd->bqd"}> : () -> ()
    %cst_106 = arith.constant dense<0.000000e+00> : vector<1x8x32xf32>
    %153 = tpu.matmul %152, %140, %cst_106 {dimension_numbers = #tpu.dot_dimension_numbers<[2], [1], [1], [2], [0, 0, 0, 1, 1, 2], [0], [0]>} : vector<1x8x8xf32>, vector<1x8x32xf32>, vector<1x8x32xf32> -> vector<1x8x32xf32>
    "tpu.trace_stop"() : () -> ()
    %154 = arith.addf %124, %153 : vector<1x8x32xf32>
    %155 = vector.shape_cast %154 : vector<1x8x32xf32> to vector<8x32xf32>
    %156 = arith.addf %3, %155 : vector<8x32xf32>
    %c0_107 = arith.constant 0 : index
    %c0_108 = arith.constant 0 : index
    %c0_109 = arith.constant 0 : index
    %157 = vector.load %arg11[%c0_107, %c0_108, %c0_109] : memref<1x1x32xf32, #tpu.memory_space<vmem>>, vector<1x1x32xf32>
    %158 = vector.shape_cast %157 : vector<1x1x32xf32> to vector<1x32xf32>
    %159 = vector.broadcast %158 : vector<1x32xf32> to vector<8x32xf32>
    %160 = arith.addf %156, %159 : vector<8x32xf32>
    %c0_110 = arith.constant 0 : index
    %c0_111 = arith.constant 0 : index
    %c0_112 = arith.constant 0 : index
    %161 = vector.load %arg12[%c0_110, %c0_111, %c0_112] : memref<1x1x32xf32, #tpu.memory_space<vmem>>, vector<1x1x32xf32>
    %162 = vector.shape_cast %161 : vector<1x1x32xf32> to vector<1x32xf32>
    %c0_113 = arith.constant 0 : index
    %c0_114 = arith.constant 0 : index
    %c0_115 = arith.constant 0 : index
    %163 = vector.load %arg13[%c0_113, %c0_114, %c0_115] : memref<1x1x32xf32, #tpu.memory_space<vmem>>, vector<1x1x32xf32>
    %164 = vector.shape_cast %163 : vector<1x1x32xf32> to vector<1x32xf32>
    %cst_116 = arith.constant dense<0.000000e+00> : vector<8xf32>
    %165 = vector.multi_reduction <add>, %160, %cst_116 [1] : vector<8x32xf32> to vector<8xf32>
    %166 = vector.shape_cast %165 : vector<8xf32> to vector<8x1xf32>
    %cst_117 = arith.constant 3.200000e+01 : f32
    %167 = vector.broadcast %cst_117 : f32 to vector<8x1xf32>
    %168 = arith.divf %166, %167 : vector<8x1xf32>
    %169 = vector.broadcast %168 : vector<8x1xf32> to vector<8x32xf32>
    %170 = arith.subf %160, %169 : vector<8x32xf32>
    %171 = arith.mulf %170, %170 : vector<8x32xf32>
    %cst_118 = arith.constant dense<0.000000e+00> : vector<8xf32>
    %172 = vector.multi_reduction <add>, %171, %cst_118 [1] : vector<8x32xf32> to vector<8xf32>
    %173 = vector.shape_cast %172 : vector<8xf32> to vector<8x1xf32>
    %cst_119 = arith.constant 3.200000e+01 : f32
    %174 = vector.broadcast %cst_119 : f32 to vector<8x1xf32>
    %175 = arith.divf %173, %174 : vector<8x1xf32>
    %176 = vector.broadcast %168 : vector<8x1xf32> to vector<8x32xf32>
    %177 = arith.subf %160, %176 : vector<8x32xf32>
    %cst_120 = arith.constant 9.99999974E-6 : f32
    %178 = vector.broadcast %cst_120 : f32 to vector<8x1xf32>
    %179 = arith.addf %175, %178 : vector<8x1xf32>
    %180 = math.rsqrt %179 : vector<8x1xf32>
    %181 = vector.broadcast %180 : vector<8x1xf32> to vector<8x32xf32>
    %182 = arith.mulf %177, %181 : vector<8x32xf32>
    %183 = vector.broadcast %162 : vector<1x32xf32> to vector<8x32xf32>
    %184 = arith.mulf %182, %183 : vector<8x32xf32>
    %185 = vector.broadcast %164 : vector<1x32xf32> to vector<8x32xf32>
    %186 = arith.addf %184, %185 : vector<8x32xf32>
    %c0_121 = arith.constant 0 : index
    %c0_122 = arith.constant 0 : index
    %c0_123 = arith.constant 0 : index
    %187 = vector.load %arg14[%c0_121, %c0_122, %c0_123] : memref<1x32x256xf32, #tpu.memory_space<vmem>>, vector<1x32x256xf32>
    %188 = vector.shape_cast %187 : vector<1x32x256xf32> to vector<32x256xf32>
    %cst_124 = arith.constant dense<0.000000e+00> : vector<8x256xf32>
    %189 = tpu.matmul %186, %188, %cst_124 {dimension_numbers = #tpu.dot_dimension_numbers<[1], [0], [0], [1], [0, 0, 1, 1], [], []>} : vector<8x32xf32>, vector<32x256xf32>, vector<8x256xf32> -> vector<8x256xf32>
    %c0_125 = arith.constant 0 : index
    %c0_126 = arith.constant 0 : index
    %c0_127 = arith.constant 0 : index
    %190 = vector.load %arg15[%c0_125, %c0_126, %c0_127] : memref<1x1x256xf32, #tpu.memory_space<vmem>>, vector<1x1x256xf32>
    %191 = vector.shape_cast %190 : vector<1x1x256xf32> to vector<1x256xf32>
    %192 = vector.broadcast %191 : vector<1x256xf32> to vector<8x256xf32>
    %193 = arith.addf %189, %192 : vector<8x256xf32>
    %c2_i32 = arith.constant 2 : i32
    %194 = arith.muli %c2_i32, %arg1 : i32
    %195 = arith.index_cast %194 : i32 to index
    %196 = memref.load %arg18[%195] : memref<4xf32, #tpu.memory_space<smem>>
    %c2_i32_128 = arith.constant 2 : i32
    %197 = arith.muli %c2_i32_128, %arg1 : i32
    %c1_i32 = arith.constant 1 : i32
    %198 = arith.addi %197, %c1_i32 : i32
    %199 = arith.index_cast %198 : i32 to index
    %200 = memref.load %arg18[%199] : memref<4xf32, #tpu.memory_space<smem>>
    %201 = vector.broadcast %200 : f32 to vector<8x256xf32>
    %202 = arith.addf %193, %201 : vector<8x256xf32>
    %203 = math.sin %202 : vector<8x256xf32>
    %204 = vector.broadcast %196 : f32 to vector<8x256xf32>
    %205 = arith.mulf %204, %203 : vector<8x256xf32>
    %c0_129 = arith.constant 0 : index
    %c0_130 = arith.constant 0 : index
    %c0_131 = arith.constant 0 : index
    %206 = vector.load %arg16[%c0_129, %c0_130, %c0_131] : memref<1x256x32xf32, #tpu.memory_space<vmem>>, vector<1x256x32xf32>
    %207 = vector.shape_cast %206 : vector<1x256x32xf32> to vector<256x32xf32>
    %cst_132 = arith.constant dense<0.000000e+00> : vector<8x32xf32>
    %208 = tpu.matmul %205, %207, %cst_132 {dimension_numbers = #tpu.dot_dimension_numbers<[1], [0], [0], [1], [0, 0, 1, 1], [], []>} : vector<8x256xf32>, vector<256x32xf32>, vector<8x32xf32> -> vector<8x32xf32>
    %c0_133 = arith.constant 0 : index
    %c0_134 = arith.constant 0 : index
    %c0_135 = arith.constant 0 : index
    %209 = vector.load %arg17[%c0_133, %c0_134, %c0_135] : memref<1x1x32xf32, #tpu.memory_space<vmem>>, vector<1x1x32xf32>
    %210 = vector.shape_cast %209 : vector<1x1x32xf32> to vector<1x32xf32>
    %211 = vector.broadcast %210 : vector<1x32xf32> to vector<8x32xf32>
    %212 = arith.addf %208, %211 : vector<8x32xf32>
    %213 = arith.addf %160, %212 : vector<8x32xf32>
    %c0_136 = arith.constant 0 : index
    %c0_137 = arith.constant 0 : index
    %214 = vector.load %arg20[%c0_136, %c0_137] : memref<8x32xf32, #tpu.memory_space<vmem>>, vector<8x32xf32>
    tpu.vector_store %arg20[%c0_136, %c0_137], %213 {strides = array<i32>} : memref<8x32xf32, #tpu.memory_space<vmem>>, vector<8x32xf32>,
    %c1_i32_138 = arith.constant 1 : i32
    %215 = arith.cmpi eq, %arg1, %c1_i32_138 : i32
    %216 = arith.extui %215 : i1 to i32
    %c0_i32_139 = arith.constant 0 : i32
    %217 = arith.cmpi ne, %216, %c0_i32_139 : i32
    scf.if %217 {
      %c0_140 = arith.constant 0 : index
      %c0_141 = arith.constant 0 : index
      %218 = vector.load %arg19[%c0_140, %c0_141] : memref<8x32xf32, #tpu.memory_space<vmem>>, vector<8x32xf32>
      tpu.vector_store %arg19[%c0_140, %c0_141], %213 {strides = array<i32>} : memref<8x32xf32, #tpu.memory_space<vmem>>, vector<8x32xf32>,
    } else {
    }
    return
  }
  func.func @transform_0(%arg0: i32, %arg1: i32) -> (i32, i32) {
    %c0_i32 = arith.constant 0 : i32
    %c0_i32_0 = arith.constant 0 : i32
    return %arg0, %c0_i32 : i32, i32
  }
  func.func @transform_1(%arg0: i32, %arg1: i32) -> (i32, i32) {
    %c0_i32 = arith.constant 0 : i32
    %c0_i32_0 = arith.constant 0 : i32
    return %arg0, %c0_i32 : i32, i32
  }
  func.func @transform_2(%arg0: i32, %arg1: i32) -> (i32, i32, i32) {
    %c0_i32 = arith.constant 0 : i32
    %c0_i32_0 = arith.constant 0 : i32
    %c0_i32_1 = arith.constant 0 : i32
    return %arg0, %c0_i32, %c0_i32_0 : i32, i32, i32
  }
  func.func @transform_3(%arg0: i32, %arg1: i32) -> (i32, i32, i32) {
    %c0_i32 = arith.constant 0 : i32
    %c0_i32_0 = arith.constant 0 : i32
    %c0_i32_1 = arith.constant 0 : i32
    return %arg1, %c0_i32, %c0_i32_0 : i32, i32, i32
  }
  func.func @transform_4(%arg0: i32, %arg1: i32) -> (i32, i32, i32) {
    %c0_i32 = arith.constant 0 : i32
    %c0_i32_0 = arith.constant 0 : i32
    %c0_i32_1 = arith.constant 0 : i32
    return %arg1, %c0_i32, %c0_i32_0 : i32, i32, i32
  }
  func.func @transform_5(%arg0: i32, %arg1: i32) -> (i32, i32, i32, i32) {
    %c0_i32 = arith.constant 0 : i32
    %c0_i32_0 = arith.constant 0 : i32
    %c0_i32_1 = arith.constant 0 : i32
    %c0_i32_2 = arith.constant 0 : i32
    return %arg1, %c0_i32, %c0_i32_0, %c0_i32_1 : i32, i32, i32, i32
  }
  func.func @transform_6(%arg0: i32, %arg1: i32) -> (i32, i32, i32, i32) {
    %c0_i32 = arith.constant 0 : i32
    %c0_i32_0 = arith.constant 0 : i32
    %c0_i32_1 = arith.constant 0 : i32
    %c0_i32_2 = arith.constant 0 : i32
    return %arg1, %c0_i32, %c0_i32_0, %c0_i32_1 : i32, i32, i32, i32
  }
  func.func @transform_7(%arg0: i32, %arg1: i32) -> (i32, i32, i32, i32) {
    %c0_i32 = arith.constant 0 : i32
    %c0_i32_0 = arith.constant 0 : i32
    %c0_i32_1 = arith.constant 0 : i32
    %c0_i32_2 = arith.constant 0 : i32
    return %arg1, %c0_i32, %c0_i32_0, %c0_i32_1 : i32, i32, i32, i32
  }
  func.func @transform_8(%arg0: i32, %arg1: i32) -> (i32, i32, i32, i32) {
    %c0_i32 = arith.constant 0 : i32
    %c0_i32_0 = arith.constant 0 : i32
    %c0_i32_1 = arith.constant 0 : i32
    %c0_i32_2 = arith.constant 0 : i32
    return %arg1, %c0_i32, %c0_i32_0, %c0_i32_1 : i32, i32, i32, i32
  }
  func.func @transform_9(%arg0: i32, %arg1: i32) -> (i32, i32, i32) {
    %c0_i32 = arith.constant 0 : i32
    %c0_i32_0 = arith.constant 0 : i32
    %c0_i32_1 = arith.constant 0 : i32
    return %arg1, %c0_i32, %c0_i32_0 : i32, i32, i32
  }
  func.func @transform_10(%arg0: i32, %arg1: i32) -> (i32, i32, i32) {
    %c0_i32 = arith.constant 0 : i32
    %c0_i32_0 = arith.constant 0 : i32
    %c0_i32_1 = arith.constant 0 : i32
    return %arg1, %c0_i32, %c0_i32_0 : i32, i32, i32
  }
  func.func @transform_11(%arg0: i32, %arg1: i32) -> (i32, i32, i32) {
    %c0_i32 = arith.constant 0 : i32
    %c0_i32_0 = arith.constant 0 : i32
    %c0_i32_1 = arith.constant 0 : i32
    return %arg1, %c0_i32, %c0_i32_0 : i32, i32, i32
  }
  func.func @transform_12(%arg0: i32, %arg1: i32) -> (i32, i32, i32) {
    %c0_i32 = arith.constant 0 : i32
    %c0_i32_0 = arith.constant 0 : i32
    %c0_i32_1 = arith.constant 0 : i32
    return %arg1, %c0_i32, %c0_i32_0 : i32, i32, i32
  }
  func.func @transform_13(%arg0: i32, %arg1: i32) -> (i32, i32, i32) {
    %c0_i32 = arith.constant 0 : i32
    %c0_i32_0 = arith.constant 0 : i32
    %c0_i32_1 = arith.constant 0 : i32
    return %arg1, %c0_i32, %c0_i32_0 : i32, i32, i32
  }
  func.func @transform_14(%arg0: i32, %arg1: i32) -> (i32, i32, i32) {
    %c0_i32 = arith.constant 0 : i32
    %c0_i32_0 = arith.constant 0 : i32
    %c0_i32_1 = arith.constant 0 : i32
    return %arg1, %c0_i32, %c0_i32_0 : i32, i32, i32
  }
  func.func @transform_15(%arg0: i32, %arg1: i32) -> (i32, i32, i32) {
    %c0_i32 = arith.constant 0 : i32
    %c0_i32_0 = arith.constant 0 : i32
    %c0_i32_1 = arith.constant 0 : i32
    return %arg1, %c0_i32, %c0_i32_0 : i32, i32, i32
  }
  func.func @transform_16(%arg0: i32, %arg1: i32) -> i32 {
    %c0_i32 = arith.constant 0 : i32
    %c0_i32_0 = arith.constant 0 : i32
    return %c0_i32 : i32
  }
  func.func @transform_17(%arg0: i32, %arg1: i32) -> (i32, i32) {
    %c0_i32 = arith.constant 0 : i32
    %c0_i32_0 = arith.constant 0 : i32
    return %arg0, %c0_i32 : i32, i32
  }
}

</mosaic_0001>

<llo_original>
// kernel: tpu_custom_call.1
$region0: #{tpu_custom_call.1}
  #allocation0 [shape = 'u32[]', space=smem, size = 0x4, offset = 0x4, fixed_abs, tag = 'smem constant byte address 0x4 - core index']
  #allocation1 [shape = 'u32[144,128]{1,0:T(1,128)}', space=vmem, size = 0x12000, scoped, tag = 'internal scratch']
  #allocation2 [shape = 'f32[8,32]{1,0:T(8,128)}', space=vmem, size = 0x1000, scoped, tag = 'scratch operand']
  %s0 = inlined_call_operand.vmem [shape: f32[16,32], index: 0, kind: input, shape index: {}]
  %s1 = inlined_call_operand.vmem [shape: f32[16,32], index: 1, kind: input, shape index: {}]
  %s2 = inlined_call_operand.vmem [shape: f32[2,1,8], index: 2, kind: input, shape index: {}]
  %s3 = inlined_call_operand.vmem [shape: f32[2,1,32], index: 3, kind: input, shape index: {}]
  %s4 = inlined_call_operand.vmem [shape: f32[2,1,32], index: 4, kind: input, shape index: {}]
  %s5 = inlined_call_operand.vmem [shape: f32[2,4,32,8], index: 5, kind: input, shape index: {}]
  %s6 = inlined_call_operand.vmem [shape: f32[2,4,1,8], index: 6, kind: input, shape index: {}]
  %s7 = inlined_call_operand.vmem [shape: f32[2,4,32,8], index: 7, kind: input, shape index: {}]
  %s8 = inlined_call_operand.vmem [shape: f32[2,4,32,32], index: 8, kind: input, shape index: {}]
  %s9 = inlined_call_operand.vmem [shape: f32[2,1,32], index: 9, kind: input, shape index: {}]
  %s10 = inlined_call_operand.vmem [shape: f32[2,1,32], index: 10, kind: input, shape index: {}]
  %s11 = inlined_call_operand.vmem [shape: f32[2,1,32], index: 11, kind: input, shape index: {}]
  %s12 = inlined_call_operand.vmem [shape: f32[2,32,256], index: 12, kind: input, shape index: {}]
  %s13 = inlined_call_operand.vmem [shape: f32[2,1,256], index: 13, kind: input, shape index: {}]
  %s14 = inlined_call_operand.vmem [shape: f32[2,256,32], index: 14, kind: input, shape index: {}]
  %s15 = inlined_call_operand.vmem [shape: f32[2,1,32], index: 15, kind: input, shape index: {}]
  %s16 = inlined_call_operand.vmem [shape: f32[4], index: 16, kind: input, shape index: {}]
  %s17 = inlined_call_operand.hbm [shape: f32[16,32], index: 17, kind: output, shape index: {}]
  %s18 = sld [smem:[#allocation0]]
  $region113: #{tpu_custom_call.1} parent=0
    _
  %s20 = ssub.s32 1, %s18
  %s21 = scalar_select 0, %s20, %s18
  $region1: #{tpu_custom_call.1} parent=0
    #allocation3 [shape = 'u8[512]{0}', space=smem, size = 0x200, scoped, tag = 'input window, operand 16, single buffered']
    #allocation4 [shape = 's32[2]{0}', space=sflag, size = 0x8, scoped, tag = 'scoped memory for tpu_custom_call.1']
    #allocation5 [shape = 's32[2]{0}', space=sflag, size = 0x8, scoped, tag = 'scoped memory for tpu_custom_call.1']
    #allocation6 [shape = 'u8[8192]{0}', space=vmem, size = 0x2000, scoped, tag = 'output window, operand 0']
    %22 = vsyncpa [#allocation5], 0
    %23 = vsyncpa [#allocation4], 0
    %s24 = scalar_lea.sflag [#allocation4], 1
    %25 = vsyncpa %s24, 0
    loop: start=0, step=1, limit=6
    $region2: #{tpu_custom_call.1} parent=1 // loop_pre_header
      _
    $region3: #{tpu_custom_call.1} parent=1 // loop_header
      %s27 = sphi 0, %s31
      %p28 = scmp.ge.s32.totalorder %s27, 6
      %s34 = sphi 0, %s46
      %s35 = sphi 0, %s42
      %s36 = sphi 0, %s34
      %s37 = sphi 0, %s35
      %s38 = sphi 0, %s36
      %s39 = sphi 0, %s37
      %s49 = sphi 0, %s51
      %s52 = sphi 0, %s49
      %s53 = sphi 0, %s52
      %s69 = sphi 0, %s53
      %s75 = sphi 0, %s77
      %s78 = sphi 0, %s75
      %s79 = sphi 0, %s78
      %s95 = sphi 0, %s79
      %s101 = sphi 0, %s103
      %s104 = sphi 0, %s101
      %s105 = sphi 0, %s104
      %s121 = sphi 0, %s105
      %s127 = sphi 0, %s129
      %s130 = sphi 0, %s127
      %s131 = sphi 0, %s130
      %s147 = sphi 0, %s131
      %s153 = sphi 0, %s155
      %s156 = sphi 0, %s153
      %s157 = sphi 0, %s156
      %s173 = sphi 0, %s157
      %s179 = sphi 0, %s181
      %s182 = sphi 0, %s179
      %s183 = sphi 0, %s182
      %s199 = sphi 0, %s183
      %s205 = sphi 0, %s207
      %s208 = sphi 0, %s205
      %s209 = sphi 0, %s208
      %s225 = sphi 0, %s209
      %s231 = sphi 0, %s233
      %s234 = sphi 0, %s231
      %s235 = sphi 0, %s234
      %s251 = sphi 0, %s235
      %s257 = sphi 0, %s259
      %s260 = sphi 0, %s257
      %s261 = sphi 0, %s260
      %s277 = sphi 0, %s261
      %s283 = sphi 0, %s285
      %s286 = sphi 0, %s283
      %s287 = sphi 0, %s286
      %s303 = sphi 0, %s287
      %s309 = sphi 0, %s311
      %s312 = sphi 0, %s309
      %s313 = sphi 0, %s312
      %s329 = sphi 0, %s313
      %s335 = sphi 0, %s337
      %s338 = sphi 0, %s335
      %s339 = sphi 0, %s338
      %s355 = sphi 0, %s339
      %s361 = sphi 0, %s363
      %s364 = sphi 0, %s361
      %s365 = sphi 0, %s364
      %s381 = sphi 0, %s365
      %s387 = sphi 0, %s389
      %s390 = sphi 0, %s387
      %s391 = sphi 0, %s390
      %s407 = sphi 0, %s391
      %s413 = sphi 0, %s415
      %s416 = sphi 0, %s413
      %s417 = sphi 0, %s416
      %s433 = sphi 0, %s417
      %s439 = sphi 0, %s441
      %s442 = sphi 0, %s439
      %s443 = sphi 0, %s442
      %s459 = sphi 0, %s443
      %s463 = sphi 0, %s463
      %s465 = sphi 0, %s463
      %s466 = sphi 0, %s465
      %s480 = sphi 0, %s466
      %s486 = sphi 0, %s488
      %s489 = sphi 0, %s486
      %s490 = sphi 0, %s489
      %s506 = sphi 0, %s490
    $region4: #{tpu_custom_call.1} parent=1 // loop_header_branch
      %30 = sbr.rel (%p28) target = $region8
    $region5: #{tpu_custom_call.1} parent=1 // loop_body
      %s32 = ssub.s32 %s27, 1
      %s33 = ssub.s32 %s27, 2
      %s40 = sadd.s32 1, %s35
      %p41 = scmp.ge.s32.totalorder %s40, 2
      %s42 = scalar_select %p41, 0, %s40
      %s43 = sadd.s32 1, %s34
      %s44 = scalar_select %p41, %s43, %s34
      %p45 = scmp.ge.s32.totalorder %s44, 2
      %s46 = scalar_select %p45, 0, %s44
      %s47 = ssub.s32 %s34, %s46
      %p48 = scmp.eq.s32.totalorder %s47, 0
      %s50 = sadd.s32 %s49, 1
      %s51 = scalar_select %p48, %s49, %s50
      %p54 = pneg %p48
      %p55 = scmp.eq.s32.totalorder %s27, 3
      %p56 = por %p54, %p55
      %p57 = scmp.ne.s32.totalorder %s49, %s52
      %p58 = scmp.eq.s32.totalorder %s27, 0
      %p59 = por %p57, %p58
      %p60 = scmp.ne.s32.totalorder %s49, %s52
      %p61 = scmp.eq.s32.totalorder %s32, 3
      %p62 = por %p60, %p61
      %p63 = scmp.ne.s32.totalorder %s52, %s53
      %p64 = scmp.eq.s32.totalorder %s32, 0
      %p65 = por %p63, %p64
      %p66 = scmp.ne.s32.totalorder %s52, %s53
      %p67 = scmp.eq.s32.totalorder %s33, 3
      %p68 = por %p66, %p67
      %p70 = scmp.ne.s32.totalorder %s53, %s69
      %p71 = scmp.eq.s32.totalorder %s33, 0
      %p72 = por %p70, %p71
      %s73 = ssub.s32 %s34, %s46
      %p74 = scmp.eq.s32.totalorder %s73, 0
      %s76 = sadd.s32 %s75, 1
      %s77 = scalar_select %p74, %s75, %s76
      %p80 = pneg %p74
      %p81 = scmp.eq.s32.totalorder %s27, 3
      %p82 = por %p80, %p81
      %p83 = scmp.ne.s32.totalorder %s75, %s78
      %p84 = scmp.eq.s32.totalorder %s27, 0
      %p85 = por %p83, %p84
      %p86 = scmp.ne.s32.totalorder %s75, %s78
      %p87 = scmp.eq.s32.totalorder %s32, 3
      %p88 = por %p86, %p87
      %p89 = scmp.ne.s32.totalorder %s78, %s79
      %p90 = scmp.eq.s32.totalorder %s32, 0
      %p91 = por %p89, %p90
      %p92 = scmp.ne.s32.totalorder %s78, %s79
      %p93 = scmp.eq.s32.totalorder %s33, 3
      %p94 = por %p92, %p93
      %p96 = scmp.ne.s32.totalorder %s79, %s95
      %p97 = scmp.eq.s32.totalorder %s33, 0
      %p98 = por %p96, %p97
      %s99 = ssub.s32 %s34, %s46
      %p100 = scmp.eq.s32.totalorder %s99, 0
      %s102 = sadd.s32 %s101, 1
      %s103 = scalar_select %p100, %s101, %s102
      %p106 = pneg %p100
      %p107 = scmp.eq.s32.totalorder %s27, 3
      %p108 = por %p106, %p107
      %p109 = scmp.ne.s32.totalorder %s101, %s104
      %p110 = scmp.eq.s32.totalorder %s27, 0
      %p111 = por %p109, %p110
      %p112 = scmp.ne.s32.totalorder %s101, %s104
      %p113 = scmp.eq.s32.totalorder %s32, 3
      %p114 = por %p112, %p113
      %p115 = scmp.ne.s32.totalorder %s104, %s105
      %p116 = scmp.eq.s32.totalorder %s32, 0
      %p117 = por %p115, %p116
      %p118 = scmp.ne.s32.totalorder %s104, %s105
      %p119 = scmp.eq.s32.totalorder %s33, 3
      %p120 = por %p118, %p119
      %p122 = scmp.ne.s32.totalorder %s105, %s121
      %p123 = scmp.eq.s32.totalorder %s33, 0
      %p124 = por %p122, %p123
      %s125 = ssub.s32 %s35, %s42
      %p126 = scmp.eq.s32.totalorder %s125, 0
      %s128 = sadd.s32 %s127, 1
      %s129 = scalar_select %p126, %s127, %s128
      %p132 = pneg %p126
      %p133 = scmp.eq.s32.totalorder %s27, 3
      %p134 = por %p132, %p133
      %p135 = scmp.ne.s32.totalorder %s127, %s130
      %p136 = scmp.eq.s32.totalorder %s27, 0
      %p137 = por %p135, %p136
      %p138 = scmp.ne.s32.totalorder %s127, %s130
      %p139 = scmp.eq.s32.totalorder %s32, 3
      %p140 = por %p138, %p139
      %p141 = scmp.ne.s32.totalorder %s130, %s131
      %p142 = scmp.eq.s32.totalorder %s32, 0
      %p143 = por %p141, %p142
      %p144 = scmp.ne.s32.totalorder %s130, %s131
      %p145 = scmp.eq.s32.totalorder %s33, 3
      %p146 = por %p144, %p145
      %p148 = scmp.ne.s32.totalorder %s131, %s147
      %p149 = scmp.eq.s32.totalorder %s33, 0
      %p150 = por %p148, %p149
      %s151 = ssub.s32 %s35, %s42
      %p152 = scmp.eq.s32.totalorder %s151, 0
      %s154 = sadd.s32 %s153, 1
      %s155 = scalar_select %p152, %s153, %s154
      %p158 = pneg %p152
      %p159 = scmp.eq.s32.totalorder %s27, 3
      %p160 = por %p158, %p159
      %p161 = scmp.ne.s32.totalorder %s153, %s156
      %p162 = scmp.eq.s32.totalorder %s27, 0
      %p163 = por %p161, %p162
      %p164 = scmp.ne.s32.totalorder %s153, %s156
      %p165 = scmp.eq.s32.totalorder %s32, 3
      %p166 = por %p164, %p165
      %p167 = scmp.ne.s32.totalorder %s156, %s157
      %p168 = scmp.eq.s32.totalorder %s32, 0
      %p169 = por %p167, %p168
      %p170 = scmp.ne.s32.totalorder %s156, %s157
      %p171 = scmp.eq.s32.totalorder %s33, 3
      %p172 = por %p170, %p171
      %p174 = scmp.ne.s32.totalorder %s157, %s173
      %p175 = scmp.eq.s32.totalorder %s33, 0
      %p176 = por %p174, %p175
      %s177 = ssub.s32 %s35, %s42
      %p178 = scmp.eq.s32.totalorder %s177, 0
      %s180 = sadd.s32 %s179, 1
      %s181 = scalar_select %p178, %s179, %s180
      %p184 = pneg %p178
      %p185 = scmp.eq.s32.totalorder %s27, 3
      %p186 = por %p184, %p185
      %p187 = scmp.ne.s32.totalorder %s179, %s182
      %p188 = scmp.eq.s32.totalorder %s27, 0
      %p189 = por %p187, %p188
      %p190 = scmp.ne.s32.totalorder %s179, %s182
      %p191 = scmp.eq.s32.totalorder %s32, 3
      %p192 = por %p190, %p191
      %p193 = scmp.ne.s32.totalorder %s182, %s183
      %p194 = scmp.eq.s32.totalorder %s32, 0
      %p195 = por %p193, %p194
      %p196 = scmp.ne.s32.totalorder %s182, %s183
      %p197 = scmp.eq.s32.totalorder %s33, 3
      %p198 = por %p196, %p197
      %p200 = scmp.ne.s32.totalorder %s183, %s199
      %p201 = scmp.eq.s32.totalorder %s33, 0
      %p202 = por %p200, %p201
      %s203 = ssub.s32 %s35, %s42
      %p204 = scmp.eq.s32.totalorder %s203, 0
      %s206 = sadd.s32 %s205, 1
      %s207 = scalar_select %p204, %s205, %s206
      %p210 = pneg %p204
      %p211 = scmp.eq.s32.totalorder %s27, 3
      %p212 = por %p210, %p211
      %p213 = scmp.ne.s32.totalorder %s205, %s208
      %p214 = scmp.eq.s32.totalorder %s27, 0
      %p215 = por %p213, %p214
      %p216 = scmp.ne.s32.totalorder %s205, %s208
      %p217 = scmp.eq.s32.totalorder %s32, 3
      %p218 = por %p216, %p217
      %p219 = scmp.ne.s32.totalorder %s208, %s209
      %p220 = scmp.eq.s32.totalorder %s32, 0
      %p221 = por %p219, %p220
      %p222 = scmp.ne.s32.totalorder %s208, %s209
      %p223 = scmp.eq.s32.totalorder %s33, 3
      %p224 = por %p222, %p223
      %p226 = scmp.ne.s32.totalorder %s209, %s225
      %p227 = scmp.eq.s32.totalorder %s33, 0
      %p228 = por %p226, %p227
      %s229 = ssub.s32 %s35, %s42
      %p230 = scmp.eq.s32.totalorder %s229, 0
      %s232 = sadd.s32 %s231, 1
      %s233 = scalar_select %p230, %s231, %s232
      %p236 = pneg %p230
      %p237 = scmp.eq.s32.totalorder %s27, 3
      %p238 = por %p236, %p237
      %p239 = scmp.ne.s32.totalorder %s231, %s234
      %p240 = scmp.eq.s32.totalorder %s27, 0
      %p241 = por %p239, %p240
      %p242 = scmp.ne.s32.totalorder %s231, %s234
      %p243 = scmp.eq.s32.totalorder %s32, 3
      %p244 = por %p242, %p243
      %p245 = scmp.ne.s32.totalorder %s234, %s235
      %p246 = scmp.eq.s32.totalorder %s32, 0
      %p247 = por %p245, %p246
      %p248 = scmp.ne.s32.totalorder %s234, %s235
      %p249 = scmp.eq.s32.totalorder %s33, 3
      %p250 = por %p248, %p249
      %p252 = scmp.ne.s32.totalorder %s235, %s251
      %p253 = scmp.eq.s32.totalorder %s33, 0
      %p254 = por %p252, %p253
      %s255 = ssub.s32 %s35, %s42
      %p256 = scmp.eq.s32.totalorder %s255, 0
      %s258 = sadd.s32 %s257, 1
      %s259 = scalar_select %p256, %s257, %s258
      %p262 = pneg %p256
      %p263 = scmp.eq.s32.totalorder %s27, 3
      %p264 = por %p262, %p263
      %p265 = scmp.ne.s32.totalorder %s257, %s260
      %p266 = scmp.eq.s32.totalorder %s27, 0
      %p267 = por %p265, %p266
      %p268 = scmp.ne.s32.totalorder %s257, %s260
      %p269 = scmp.eq.s32.totalorder %s32, 3
      %p270 = por %p268, %p269
      %p271 = scmp.ne.s32.totalorder %s260, %s261
      %p272 = scmp.eq.s32.totalorder %s32, 0
      %p273 = por %p271, %p272
      %p274 = scmp.ne.s32.totalorder %s260, %s261
      %p275 = scmp.eq.s32.totalorder %s33, 3
      %p276 = por %p274, %p275
      %p278 = scmp.ne.s32.totalorder %s261, %s277
      %p279 = scmp.eq.s32.totalorder %s33, 0
      %p280 = por %p278, %p279
      %s281 = ssub.s32 %s35, %s42
      %p282 = scmp.eq.s32.totalorder %s281, 0
      %s284 = sadd.s32 %s283, 1
      %s285 = scalar_select %p282, %s283, %s284
      %p288 = pneg %p282
      %p289 = scmp.eq.s32.totalorder %s27, 3
      %p290 = por %p288, %p289
      %p291 = scmp.ne.s32.totalorder %s283, %s286
      %p292 = scmp.eq.s32.totalorder %s27, 0
      %p293 = por %p291, %p292
      %p294 = scmp.ne.s32.totalorder %s283, %s286
      %p295 = scmp.eq.s32.totalorder %s32, 3
      %p296 = por %p294, %p295
      %p297 = scmp.ne.s32.totalorder %s286, %s287
      %p298 = scmp.eq.s32.totalorder %s32, 0
      %p299 = por %p297, %p298
      %p300 = scmp.ne.s32.totalorder %s286, %s287
      %p301 = scmp.eq.s32.totalorder %s33, 3
      %p302 = por %p300, %p301
      %p304 = scmp.ne.s32.totalorder %s287, %s303
      %p305 = scmp.eq.s32.totalorder %s33, 0
      %p306 = por %p304, %p305
      %s307 = ssub.s32 %s35, %s42
      %p308 = scmp.eq.s32.totalorder %s307, 0
      %s310 = sadd.s32 %s309, 1
      %s311 = scalar_select %p308, %s309, %s310
      %p314 = pneg %p308
      %p315 = scmp.eq.s32.totalorder %s27, 3
      %p316 = por %p314, %p315
      %p317 = scmp.ne.s32.totalorder %s309, %s312
      %p318 = scmp.eq.s32.totalorder %s27, 0
      %p319 = por %p317, %p318
      %p320 = scmp.ne.s32.totalorder %s309, %s312
      %p321 = scmp.eq.s32.totalorder %s32, 3
      %p322 = por %p320, %p321
      %p323 = scmp.ne.s32.totalorder %s312, %s313
      %p324 = scmp.eq.s32.totalorder %s32, 0
      %p325 = por %p323, %p324
      %p326 = scmp.ne.s32.totalorder %s312, %s313
      %p327 = scmp.eq.s32.totalorder %s33, 3
      %p328 = por %p326, %p327
      %p330 = scmp.ne.s32.totalorder %s313, %s329
      %p331 = scmp.eq.s32.totalorder %s33, 0
      %p332 = por %p330, %p331
      %s333 = ssub.s32 %s35, %s42
      %p334 = scmp.eq.s32.totalorder %s333, 0
      %s336 = sadd.s32 %s335, 1
      %s337 = scalar_select %p334, %s335, %s336
      %p340 = pneg %p334
      %p341 = scmp.eq.s32.totalorder %s27, 3
      %p342 = por %p340, %p341
      %p343 = scmp.ne.s32.totalorder %s335, %s338
      %p344 = scmp.eq.s32.totalorder %s27, 0
      %p345 = por %p343, %p344
      %p346 = scmp.ne.s32.totalorder %s335, %s338
      %p347 = scmp.eq.s32.totalorder %s32, 3
      %p348 = por %p346, %p347
      %p349 = scmp.ne.s32.totalorder %s338, %s339
      %p350 = scmp.eq.s32.totalorder %s32, 0
      %p351 = por %p349, %p350
      %p352 = scmp.ne.s32.totalorder %s338, %s339
      %p353 = scmp.eq.s32.totalorder %s33, 3
      %p354 = por %p352, %p353
      %p356 = scmp.ne.s32.totalorder %s339, %s355
      %p357 = scmp.eq.s32.totalorder %s33, 0
      %p358 = por %p356, %p357
      %s359 = ssub.s32 %s35, %s42
      %p360 = scmp.eq.s32.totalorder %s359, 0
      %s362 = sadd.s32 %s361, 1
      %s363 = scalar_select %p360, %s361, %s362
      %p366 = pneg %p360
      %p367 = scmp.eq.s32.totalorder %s27, 3
      %p368 = por %p366, %p367
      %p369 = scmp.ne.s32.totalorder %s361, %s364
      %p370 = scmp.eq.s32.totalorder %s27, 0
      %p371 = por %p369, %p370
      %p372 = scmp.ne.s32.totalorder %s361, %s364
      %p373 = scmp.eq.s32.totalorder %s32, 3
      %p374 = por %p372, %p373
      %p375 = scmp.ne.s32.totalorder %s364, %s365
      %p376 = scmp.eq.s32.totalorder %s32, 0
      %p377 = por %p375, %p376
      %p378 = scmp.ne.s32.totalorder %s364, %s365
      %p379 = scmp.eq.s32.totalorder %s33, 3
      %p380 = por %p378, %p379
      %p382 = scmp.ne.s32.totalorder %s365, %s381
      %p383 = scmp.eq.s32.totalorder %s33, 0
      %p384 = por %p382, %p383
      %s385 = ssub.s32 %s35, %s42
      %p386 = scmp.eq.s32.totalorder %s385, 0
      %s388 = sadd.s32 %s387, 1
      %s389 = scalar_select %p386, %s387, %s388
      %p392 = pneg %p386
      %p393 = scmp.eq.s32.totalorder %s27, 3
      %p394 = por %p392, %p393
      %p395 = scmp.ne.s32.totalorder %s387, %s390
      %p396 = scmp.eq.s32.totalorder %s27, 0
      %p397 = por %p395, %p396
      %p398 = scmp.ne.s32.totalorder %s387, %s390
      %p399 = scmp.eq.s32.totalorder %s32, 3
      %p400 = por %p398, %p399
      %p401 = scmp.ne.s32.totalorder %s390, %s391
      %p402 = scmp.eq.s32.totalorder %s32, 0
      %p403 = por %p401, %p402
      %p404 = scmp.ne.s32.totalorder %s390, %s391
      %p405 = scmp.eq.s32.totalorder %s33, 3
      %p406 = por %p404, %p405
      %p408 = scmp.ne.s32.totalorder %s391, %s407
      %p409 = scmp.eq.s32.totalorder %s33, 0
      %p410 = por %p408, %p409
      %s411 = ssub.s32 %s35, %s42
      %p412 = scmp.eq.s32.totalorder %s411, 0
      %s414 = sadd.s32 %s413, 1
      %s415 = scalar_select %p412, %s413, %s414
      %p418 = pneg %p412
      %p419 = scmp.eq.s32.totalorder %s27, 3
      %p420 = por %p418, %p419
      %p421 = scmp.ne.s32.totalorder %s413, %s416
      %p422 = scmp.eq.s32.totalorder %s27, 0
      %p423 = por %p421, %p422
      %p424 = scmp.ne.s32.totalorder %s413, %s416
      %p425 = scmp.eq.s32.totalorder %s32, 3
      %p426 = por %p424, %p425
      %p427 = scmp.ne.s32.totalorder %s416, %s417
      %p428 = scmp.eq.s32.totalorder %s32, 0
      %p429 = por %p427, %p428
      %p430 = scmp.ne.s32.totalorder %s416, %s417
      %p431 = scmp.eq.s32.totalorder %s33, 3
      %p432 = por %p430, %p431
      %p434 = scmp.ne.s32.totalorder %s417, %s433
      %p435 = scmp.eq.s32.totalorder %s33, 0
      %p436 = por %p434, %p435
      %s437 = ssub.s32 %s35, %s42
      %p438 = scmp.eq.s32.totalorder %s437, 0
      %s440 = sadd.s32 %s439, 1
      %s441 = scalar_select %p438, %s439, %s440
      %p444 = pneg %p438
      %p445 = scmp.eq.s32.totalorder %s27, 3
      %p446 = por %p444, %p445
      %p447 = scmp.ne.s32.totalorder %s439, %s442
      %p448 = scmp.eq.s32.totalorder %s27, 0
      %p449 = por %p447, %p448
      %p450 = scmp.ne.s32.totalorder %s439, %s442
      %p451 = scmp.eq.s32.totalorder %s32, 3
      %p452 = por %p450, %p451
      %p453 = scmp.ne.s32.totalorder %s442, %s443
      %p454 = scmp.eq.s32.totalorder %s32, 0
      %p455 = por %p453, %p454
      %p456 = scmp.ne.s32.totalorder %s442, %s443
      %p457 = scmp.eq.s32.totalorder %s33, 3
      %p458 = por %p456, %p457
      %p460 = scmp.ne.s32.totalorder %s443, %s459
      %p461 = scmp.eq.s32.totalorder %s33, 0
      %p462 = por %p460, %p461
      %s464 = sadd.s32 %s463, 1
      %p467 = scmp.eq.s32.totalorder %s27, 3
      %p468 = scmp.ne.s32.totalorder %s463, %s465
      %p469 = scmp.eq.s32.totalorder %s27, 0
      %p470 = por %p468, %p469
      %p471 = scmp.ne.s32.totalorder %s463, %s465
      %p472 = scmp.eq.s32.totalorder %s32, 3
      %p473 = por %p471, %p472
      %p474 = scmp.ne.s32.totalorder %s465, %s466
      %p475 = scmp.eq.s32.totalorder %s32, 0
      %p476 = por %p474, %p475
      %p477 = scmp.ne.s32.totalorder %s465, %s466
      %p478 = scmp.eq.s32.totalorder %s33, 3
      %p479 = por %p477, %p478
      %p481 = scmp.ne.s32.totalorder %s466, %s480
      %p482 = scmp.eq.s32.totalorder %s33, 0
      %p483 = por %p481, %p482
      %s484 = ssub.s32 %s34, %s46
      %p485 = scmp.eq.s32.totalorder %s484, 0
      %s487 = sadd.s32 %s486, 1
      %s488 = scalar_select %p485, %s486, %s487
      %p491 = pneg %p485
      %p492 = scmp.eq.s32.totalorder %s27, 3
      %p493 = por %p491, %p492
      %p494 = scmp.ne.s32.totalorder %s486, %s489
      %p495 = scmp.eq.s32.totalorder %s27, 0
      %p496 = por %p494, %p495
      %p497 = scmp.ne.s32.totalorder %s486, %s489
      %p498 = scmp.eq.s32.totalorder %s32, 3
      %p499 = por %p497, %p498
      %p500 = scmp.ne.s32.totalorder %s489, %s490
      %p501 = scmp.eq.s32.totalorder %s32, 0
      %p502 = por %p500, %p501
      %p503 = scmp.ne.s32.totalorder %s489, %s490
      %p504 = scmp.eq.s32.totalorder %s33, 3
      %p505 = por %p503, %p504
      %p507 = scmp.ne.s32.totalorder %s490, %s506
      %p508 = scmp.eq.s32.totalorder %s33, 0
      %p509 = por %p507, %p508
      %p510 = scmp.le.s32.totalorder 1, %s27
      %p511 = scmp.lt.s32.totalorder %s27, 5
      %p512 = pnand %p510, %p511
      %p513 = pneg %p512
      // Predicated region
      $region9: #{tpu_custom_call.1} parent=5 // pred_check
        _
      $region10: #{tpu_custom_call.1} parent=5 // pred_check_branch
        %515 = sbr.rel (%p512) target = $region12
      $region11: #{tpu_custom_call.1} parent=5 // pred_region
        %s516 = ssub.s32 %s27, 1
        // Predicated region
        $region13: #{tpu_custom_call.1} parent=11 // pred_check
          %p517 = pneg %p476
        $region14: #{tpu_custom_call.1} parent=11 // pred_check_branch
          %519 = sbr.rel (%p517) target = $region16
        $region15: #{tpu_custom_call.1} parent=11 // pred_region
          %s521 = ssub.s32 16, 16
          %522 = vsyncadd [#allocation5], %s521
          %s524 = sshll.u32 %s16, 4
          %s525 = int_to_ptr.vmem [resolvable:$true] %s524
          %527 = dma.vmem_to_smem %s525, 16, [#allocation3], [#allocation5]
        $region16: #{tpu_custom_call.1} parent=11 // pred_fallthru
          _
      $region12: #{tpu_custom_call.1} parent=5 // pred_fallthru
        _
      %p528 = scmp.lt.s32.totalorder %s27, 4
      // Predicated region
      $region17: #{tpu_custom_call.1} parent=5 // pred_check
        %p529 = pneg %p528
      $region18: #{tpu_custom_call.1} parent=5 // pred_check_branch
        %531 = sbr.rel (%p529) target = $region20
      $region19: #{tpu_custom_call.1} parent=5 // pred_region
        // Predicated region
        $region21: #{tpu_custom_call.1} parent=19 // pred_check
          %p532 = pneg %p59
        $region22: #{tpu_custom_call.1} parent=19 // pred_check_branch
          %534 = sbr.rel (%p532) target = $region24
        $region23: #{tpu_custom_call.1} parent=19 // pred_region
          %p535 = scmp.lt.s32.totalorder %s34, 1
          %s536 = scalar_select %p535, %s34, 1
          %s537 = smul.addr %s536, 8
          %s538 = scalar_lea.vmem %s0, %s537
        $region24: #{tpu_custom_call.1} parent=19 // pred_fallthru
          _
        // Predicated region
        $region25: #{tpu_custom_call.1} parent=19 // pred_check
          %p539 = pneg %p85
        $region26: #{tpu_custom_call.1} parent=19 // pred_check_branch
          %541 = sbr.rel (%p539) target = $region28
        $region27: #{tpu_custom_call.1} parent=19 // pred_region
          %p542 = scmp.lt.s32.totalorder %s34, 1
          %s543 = scalar_select %p542, %s34, 1
          %s544 = smul.addr %s543, 8
          %s545 = scalar_lea.vmem %s1, %s544
        $region28: #{tpu_custom_call.1} parent=19 // pred_fallthru
          _
        // Predicated region
        $region29: #{tpu_custom_call.1} parent=19 // pred_check
          %p546 = pneg %p111
        $region30: #{tpu_custom_call.1} parent=19 // pred_check_branch
          %548 = sbr.rel (%p546) target = $region32
        $region31: #{tpu_custom_call.1} parent=19 // pred_region
          %p549 = scmp.lt.s32.totalorder %s34, 1
          %s550 = scalar_select %p549, %s34, 1
          %s551 = scalar_lea.vmem %s2, %s550
        $region32: #{tpu_custom_call.1} parent=19 // pred_fallthru
          _
        // Predicated region
        $region33: #{tpu_custom_call.1} parent=19 // pred_check
          %p552 = pneg %p137
        $region34: #{tpu_custom_call.1} parent=19 // pred_check_branch
          %554 = sbr.rel (%p552) target = $region36
        $region35: #{tpu_custom_call.1} parent=19 // pred_region
          %p555 = scmp.lt.s32.totalorder %s35, 1
          %s556 = scalar_select %p555, %s35, 1
          %s557 = scalar_lea.vmem %s3, %s556
        $region36: #{tpu_custom_call.1} parent=19 // pred_fallthru
          _
        // Predicated region
        $region37: #{tpu_custom_call.1} parent=19 // pred_check
          %p558 = pneg %p163
        $region38: #{tpu_custom_call.1} parent=19 // pred_check_branch
          %560 = sbr.rel (%p558) target = $region40
        $region39: #{tpu_custom_call.1} parent=19 // pred_region
          %p561 = scmp.lt.s32.totalorder %s35, 1
          %s562 = scalar_select %p561, %s35, 1
          %s563 = scalar_lea.vmem %s4, %s562
        $region40: #{tpu_custom_call.1} parent=19 // pred_fallthru
          _
        // Predicated region
        $region41: #{tpu_custom_call.1} parent=19 // pred_check
          %p564 = pneg %p189
        $region42: #{tpu_custom_call.1} parent=19 // pred_check_branch
          %566 = sbr.rel (%p564) target = $region44
        $region43: #{tpu_custom_call.1} parent=19 // pred_region
          %p567 = scmp.lt.s32.totalorder %s35, 1
          %s568 = scalar_select %p567, %s35, 1
          %s569 = smul.addr %s568, 16
          %s570 = smul.addr %s569, 8
          %s571 = scalar_lea.vmem %s5, %s570
        $region44: #{tpu_custom_call.1} parent=19 // pred_fallthru
          _
        // Predicated region
        $region45: #{tpu_custom_call.1} parent=19 // pred_check
          %p572 = pneg %p215
        $region46: #{tpu_custom_call.1} parent=19 // pred_check_branch
          %574 = sbr.rel (%p572) target = $region48
        $region47: #{tpu_custom_call.1} parent=19 // pred_region
          %p575 = scmp.lt.s32.totalorder %s35, 1
          %s576 = scalar_select %p575, %s35, 1
          %s577 = smul.addr %s576, 4
          %s578 = scalar_lea.vmem %s6, %s577
        $region48: #{tpu_custom_call.1} parent=19 // pred_fallthru
          _
        // Predicated region
        $region49: #{tpu_custom_call.1} parent=19 // pred_check
          %p579 = pneg %p241
        $region50: #{tpu_custom_call.1} parent=19 // pred_check_branch
          %581 = sbr.rel (%p579) target = $region52
        $region51: #{tpu_custom_call.1} parent=19 // pred_region
          %p582 = scmp.lt.s32.totalorder %s35, 1
          %s583 = scalar_select %p582, %s35, 1
          %s584 = smul.addr %s583, 16
          %s585 = smul.addr %s584, 8
          %s586 = scalar_lea.vmem %s7, %s585
        $region52: #{tpu_custom_call.1} parent=19 // pred_fallthru
          _
        // Predicated region
        $region53: #{tpu_custom_call.1} parent=19 // pred_check
          %p587 = pneg %p267
        $region54: #{tpu_custom_call.1} parent=19 // pred_check_branch
          %589 = sbr.rel (%p587) target = $region56
        $region55: #{tpu_custom_call.1} parent=19 // pred_region
          %p590 = scmp.lt.s32.totalorder %s35, 1
          %s591 = scalar_select %p590, %s35, 1
          %s592 = smul.addr %s591, 16
          %s593 = smul.addr %s592, 8
          %s594 = scalar_lea.vmem %s8, %s593
        $region56: #{tpu_custom_call.1} parent=19 // pred_fallthru
          _
        // Predicated region
        $region57: #{tpu_custom_call.1} parent=19 // pred_check
          %p595 = pneg %p293
        $region58: #{tpu_custom_call.1} parent=19 // pred_check_branch
          %597 = sbr.rel (%p595) target = $region60
        $region59: #{tpu_custom_call.1} parent=19 // pred_region
          %p598 = scmp.lt.s32.totalorder %s35, 1
          %s599 = scalar_select %p598, %s35, 1
          %s600 = scalar_lea.vmem %s9, %s599
        $region60: #{tpu_custom_call.1} parent=19 // pred_fallthru
          _
        // Predicated region
        $region61: #{tpu_custom_call.1} parent=19 // pred_check
          %p601 = pneg %p319
        $region62: #{tpu_custom_call.1} parent=19 // pred_check_branch
          %603 = sbr.rel (%p601) target = $region64
        $region63: #{tpu_custom_call.1} parent=19 // pred_region
          %p604 = scmp.lt.s32.totalorder %s35, 1
          %s605 = scalar_select %p604, %s35, 1
          %s606 = scalar_lea.vmem %s10, %s605
        $region64: #{tpu_custom_call.1} parent=19 // pred_fallthru
          _
        // Predicated region
        $region65: #{tpu_custom_call.1} parent=19 // pred_check
          %p607 = pneg %p345
        $region66: #{tpu_custom_call.1} parent=19 // pred_check_branch
          %609 = sbr.rel (%p607) target = $region68
        $region67: #{tpu_custom_call.1} parent=19 // pred_region
          %p610 = scmp.lt.s32.totalorder %s35, 1
          %s611 = scalar_select %p610, %s35, 1
          %s612 = scalar_lea.vmem %s11, %s611
        $region68: #{tpu_custom_call.1} parent=19 // pred_fallthru
          _
        // Predicated region
        $region69: #{tpu_custom_call.1} parent=19 // pred_check
          %p613 = pneg %p371
        $region70: #{tpu_custom_call.1} parent=19 // pred_check_branch
          %615 = sbr.rel (%p613) target = $region72
        $region71: #{tpu_custom_call.1} parent=19 // pred_region
          %p616 = scmp.lt.s32.totalorder %s35, 1
          %s617 = scalar_select %p616, %s35, 1
          %s618 = smul.addr %s617, 8
          %s619 = smul.addr %s618, 8
          %s620 = scalar_lea.vmem %s12, %s619
        $region72: #{tpu_custom_call.1} parent=19 // pred_fallthru
          _
        // Predicated region
        $region73: #{tpu_custom_call.1} parent=19 // pred_check
          %p621 = pneg %p397
        $region74: #{tpu_custom_call.1} parent=19 // pred_check_branch
          %623 = sbr.rel (%p621) target = $region76
        $region75: #{tpu_custom_call.1} parent=19 // pred_region
          %p624 = scmp.lt.s32.totalorder %s35, 1
          %s625 = scalar_select %p624, %s35, 1
          %s626 = smul.addr %s625, 2
          %s627 = scalar_lea.vmem %s13, %s626
        $region76: #{tpu_custom_call.1} parent=19 // pred_fallthru
          _
        // Predicated region
        $region77: #{tpu_custom_call.1} parent=19 // pred_check
          %p628 = pneg %p423
        $region78: #{tpu_custom_call.1} parent=19 // pred_check_branch
          %630 = sbr.rel (%p628) target = $region80
        $region79: #{tpu_custom_call.1} parent=19 // pred_region
          %p631 = scmp.lt.s32.totalorder %s35, 1
          %s632 = scalar_select %p631, %s35, 1
          %s633 = smul.addr %s632, 32
          %s634 = smul.addr %s633, 8
          %s635 = scalar_lea.vmem %s14, %s634
        $region80: #{tpu_custom_call.1} parent=19 // pred_fallthru
          _
        // Predicated region
        $region81: #{tpu_custom_call.1} parent=19 // pred_check
          %p636 = pneg %p449
        $region82: #{tpu_custom_call.1} parent=19 // pred_check_branch
          %638 = sbr.rel (%p636) target = $region84
        $region83: #{tpu_custom_call.1} parent=19 // pred_region
          %p639 = scmp.lt.s32.totalorder %s35, 1
          %s640 = scalar_select %p639, %s35, 1
          %s641 = scalar_lea.vmem %s15, %s640
        $region84: #{tpu_custom_call.1} parent=19 // pred_fallthru
          _
      $region20: #{tpu_custom_call.1} parent=5 // pred_fallthru
        _
      %p642 = scmp.le.s32.totalorder 1, %s27
      %p643 = scmp.lt.s32.totalorder %s27, 5
      %p644 = pnand %p642, %p643
      %p645 = pneg %p644
      // Predicated region
      $region85: #{tpu_custom_call.1} parent=5 // pred_check
        _
      $region86: #{tpu_custom_call.1} parent=5 // pred_check_branch
        %647 = sbr.rel (%p644) target = $region88
      $region87: #{tpu_custom_call.1} parent=5 // pred_region
        %s648 = ssub.s32 %s27, 1
        // Predicated region
        $region89: #{tpu_custom_call.1} parent=87 // pred_check
          %p649 = pneg %p476
        $region90: #{tpu_custom_call.1} parent=87 // pred_check_branch
          %651 = sbr.rel (%p649) target = $region92
        $region91: #{tpu_custom_call.1} parent=87 // pred_region
          %652 = dma.done [#allocation5], 16
        $region92: #{tpu_custom_call.1} parent=87 // pred_fallthru
          _
        %653 = sfence
        %p654 = scmp.lt.s32.totalorder %s36, 1
        %s655 = scalar_select %p654, %s36, 1
        %s656 = smul.addr %s655, 8
        %s657 = scalar_lea.vmem %s0, %s656
        %p658 = pneg %p65
        %p659 = pneg %p62
        %p660 = scmp.lt.s32.totalorder %s36, 1
        %s661 = scalar_select %p660, %s36, 1
        %s662 = smul.addr %s661, 8
        %s663 = scalar_lea.vmem %s1, %s662
        %p664 = pneg %p91
        %p665 = pneg %p88
        %p666 = scmp.lt.s32.totalorder %s36, 1
        %s667 = scalar_select %p666, %s36, 1
        %s668 = scalar_lea.vmem %s2, %s667
        %p669 = pneg %p117
        %p670 = pneg %p114
        %p671 = scmp.lt.s32.totalorder %s37, 1
        %s672 = scalar_select %p671, %s37, 1
        %s673 = scalar_lea.vmem %s3, %s672
        %p674 = pneg %p143
        %p675 = pneg %p140
        %p676 = scmp.lt.s32.totalorder %s37, 1
        %s677 = scalar_select %p676, %s37, 1
        %s678 = scalar_lea.vmem %s4, %s677
        %p679 = pneg %p169
        %p680 = pneg %p166
        %p681 = scmp.lt.s32.totalorder %s37, 1
        %s682 = scalar_select %p681, %s37, 1
        %s683 = smul.addr %s682, 16
        %s684 = smul.addr %s683, 8
        %s685 = scalar_lea.vmem %s5, %s684
        %p686 = pneg %p195
        %p687 = pneg %p192
        %p688 = scmp.lt.s32.totalorder %s37, 1
        %s689 = scalar_select %p688, %s37, 1
        %s690 = smul.addr %s689, 4
        %s691 = scalar_lea.vmem %s6, %s690
        %p692 = pneg %p221
        %p693 = pneg %p218
        %p694 = scmp.lt.s32.totalorder %s37, 1
        %s695 = scalar_select %p694, %s37, 1
        %s696 = smul.addr %s695, 16
        %s697 = smul.addr %s696, 8
        %s698 = scalar_lea.vmem %s7, %s697
        %p699 = pneg %p247
        %p700 = pneg %p244
        %p701 = scmp.lt.s32.totalorder %s37, 1
        %s702 = scalar_select %p701, %s37, 1
        %s703 = smul.addr %s702, 16
        %s704 = smul.addr %s703, 8
        %s705 = scalar_lea.vmem %s8, %s704
        %p706 = pneg %p273
        %p707 = pneg %p270
        %p708 = scmp.lt.s32.totalorder %s37, 1
        %s709 = scalar_select %p708, %s37, 1
        %s710 = scalar_lea.vmem %s9, %s709
        %p711 = pneg %p299
        %p712 = pneg %p296
        %p713 = scmp.lt.s32.totalorder %s37, 1
        %s714 = scalar_select %p713, %s37, 1
        %s715 = scalar_lea.vmem %s10, %s714
        %p716 = pneg %p325
        %p717 = pneg %p322
        %p718 = scmp.lt.s32.totalorder %s37, 1
        %s719 = scalar_select %p718, %s37, 1
        %s720 = scalar_lea.vmem %s11, %s719
        %p721 = pneg %p351
        %p722 = pneg %p348
        %p723 = scmp.lt.s32.totalorder %s37, 1
        %s724 = scalar_select %p723, %s37, 1
        %s725 = smul.addr %s724, 8
        %s726 = smul.addr %s725, 8
        %s727 = scalar_lea.vmem %s12, %s726
        %p728 = pneg %p377
        %p729 = pneg %p374
        %p730 = scmp.lt.s32.totalorder %s37, 1
        %s731 = scalar_select %p730, %s37, 1
        %s732 = smul.addr %s731, 2
        %s733 = scalar_lea.vmem %s13, %s732
        %p734 = pneg %p403
        %p735 = pneg %p400
        %p736 = scmp.lt.s32.totalorder %s37, 1
        %s737 = scalar_select %p736, %s37, 1
        %s738 = smul.addr %s737, 32
        %s739 = smul.addr %s738, 8
        %s740 = scalar_lea.vmem %s14, %s739
        %p741 = pneg %p429
        %p742 = pneg %p426
        %p743 = scmp.lt.s32.totalorder %s37, 1
        %s744 = scalar_select %p743, %s37, 1
        %s745 = scalar_lea.vmem %s15, %s744
        %p746 = pneg %p455
        %p747 = pneg %p452
        %p748 = pneg %p476
        %p749 = pneg %p473
        %p750 = pneg %p502
        %p751 = pneg %p499
        %s752 = sand.u32 %s489, 1
        %s753 = scalar_lea.sflag [#allocation4], %s752
        %s754 = sand.u32 %s489, 1
        %s755 = smul.addr %s754, 8
        %s756 = scalar_lea.vmem [#allocation6], %s755
        %p757 = scmp.lt.s32.totalorder %s36, 1
        %s758 = scalar_select %p757, %s36, 1
        %s759 = smul.addr %s758, 8
        %s760 = scalar_lea.vmem %s0, %s759
        %p761 = scmp.lt.s32.totalorder %s36, 1
        %s762 = scalar_select %p761, %s36, 1
        %s763 = smul.addr %s762, 8
        %s764 = scalar_lea.vmem %s1, %s763
        %p765 = scmp.lt.s32.totalorder %s36, 1
        %s766 = scalar_select %p765, %s36, 1
        %s767 = scalar_lea.vmem %s2, %s766
        %p768 = scmp.lt.s32.totalorder %s37, 1
        %s769 = scalar_select %p768, %s37, 1
        %s770 = scalar_lea.vmem %s3, %s769
        %p771 = scmp.lt.s32.totalorder %s37, 1
        %s772 = scalar_select %p771, %s37, 1
        %s773 = scalar_lea.vmem %s4, %s772
        %p774 = scmp.lt.s32.totalorder %s37, 1
        %s775 = scalar_select %p774, %s37, 1
        %s776 = smul.addr %s775, 16
        %s777 = smul.addr %s776, 8
        %s778 = scalar_lea.vmem %s5, %s777
        %p779 = scmp.lt.s32.totalorder %s37, 1
        %s780 = scalar_select %p779, %s37, 1
        %s781 = smul.addr %s780, 4
        %s782 = scalar_lea.vmem %s6, %s781
        %p783 = scmp.lt.s32.totalorder %s37, 1
        %s784 = scalar_select %p783, %s37, 1
        %s785 = smul.addr %s784, 16
        %s786 = smul.addr %s785, 8
        %s787 = scalar_lea.vmem %s7, %s786
        %p788 = scmp.lt.s32.totalorder %s37, 1
        %s789 = scalar_select %p788, %s37, 1
        %s790 = smul.addr %s789, 16
        %s791 = smul.addr %s790, 8
        %s792 = scalar_lea.vmem %s8, %s791
        %p793 = scmp.lt.s32.totalorder %s37, 1
        %s794 = scalar_select %p793, %s37, 1
        %s795 = scalar_lea.vmem %s9, %s794
        %p796 = scmp.lt.s32.totalorder %s37, 1
        %s797 = scalar_select %p796, %s37, 1
        %s798 = scalar_lea.vmem %s10, %s797
        %p799 = scmp.lt.s32.totalorder %s37, 1
        %s800 = scalar_select %p799, %s37, 1
        %s801 = scalar_lea.vmem %s11, %s800
        %p802 = scmp.lt.s32.totalorder %s37, 1
        %s803 = scalar_select %p802, %s37, 1
        %s804 = smul.addr %s803, 8
        %s805 = smul.addr %s804, 8
        %s806 = scalar_lea.vmem %s12, %s805
        %p807 = scmp.lt.s32.totalorder %s37, 1
        %s808 = scalar_select %p807, %s37, 1
        %s809 = smul.addr %s808, 2
        %s810 = scalar_lea.vmem %s13, %s809
        %p811 = scmp.lt.s32.totalorder %s37, 1
        %s812 = scalar_select %p811, %s37, 1
        %s813 = smul.addr %s812, 32
        %s814 = smul.addr %s813, 8
        %s815 = scalar_lea.vmem %s14, %s814
        %p816 = scmp.lt.s32.totalorder %s37, 1
        %s817 = scalar_select %p816, %s37, 1
        %s818 = scalar_lea.vmem %s15, %s817
        %p819 = scmp.eq.s32.totalorder %s37, 0
        // Predicated region
        $region93: #{tpu_custom_call.1} parent=87 // pred_check
          %p820 = pneg %p819
        $region94: #{tpu_custom_call.1} parent=87 // pred_check_branch
          %822 = sbr.rel (%p820) target = $region96
        $region95: #{tpu_custom_call.1} parent=87 // pred_region
          %v823 = vld [vmem:[%s760] sm:$0xff]
          %vm824 = vcmask 261120
          %825 = vst.msk [vmem:[#allocation2] sm:$0xff] %vm824, %v823
        $region96: #{tpu_custom_call.1} parent=87 // pred_fallthru
          _
        %v826 = vld [vmem:[#allocation2] sm:$0xff]
        %v827 = vld [vmem:[%s764] sm:$0xff]
        %v828 = vld [vmem:[%s767] sm:$0x1]
        %v830 = vlaneseq
        %v831 = vshrl.u32 %v830, 7
        %v832 = vsub.s32 0, %v831
        %v833 = vrot.slane %v828, %v832
        %v835 = vld [vmem:[%s770] sm:$0x1]
        %v836 = vld [vmem:[%s773] sm:$0x1]
        %vm837 = vcmask 261120
        %v838 = vsel %vm837, %v826, 0.0
        %839 = vadd.xlane.f32.xlu0 %v838
        %v840 = vpop.xlane.xlu0 %839
        %v841 = vrcp.pop 32.0
        %v842 = vmul.f32 %v840, %v841
        %v843 = vsub.f32 %v826, %v842
        %v844 = vmul.f32 %v843, %v843
        %v845 = vsel %vm837, %v844, 0.0
        %846 = vadd.xlane.f32.xlu0 %v845
        %v847 = vpop.xlane.xlu0 %846
        %v848 = vmul.f32 %v847, %v841
        %v849 = vadd.f32 %v848, 1e-05
        %v850 = vrsqrt.pop %v849
        %v851 = vmul.f32 %v843, %v850
        %v853 = vlaneseq
        %v854 = vshrl.u32 %v853, 7
        %v855 = vsub.s32 0, %v854
        %v856 = vrot.slane %v835, %v855
        %v858 = vmul.f32 %v851, %v856
        %v860 = vlaneseq
        %v861 = vshrl.u32 %v860, 7
        %v862 = vsub.s32 0, %v861
        %v863 = vrot.slane %v836, %v862
        %v865 = vadd.f32 %v858, %v863
        %v866 = vld [vmem:[%s778] sm:$0xff]
        %v867 = vld [vmem:[%s778 + $0x8] sm:$0xff]
        %v868 = vld [vmem:[%s778 + $0x10] sm:$0xff]
        %v869 = vld [vmem:[%s778 + $0x18] sm:$0xff]
        %v870 = vld [vmem:[%s782] sm:$0x1]
        %v872 = vlaneseq
        %v873 = vshrl.u32 %v872, 7
        %v874 = vsub.s32 0, %v873
        %v875 = vrot.slane %v870, %v874
        %v878 = vsel %vm837, %v865, 0
        %880 = vmatprep.subr.mxu0 0.0
        %881 = vmatpush1.msra.mxu0 0.0
        %882 = vmatprep.subr.mxu0 0.0
        %883 = vmatpush1.msra.mxu0 0.0
        %884 = vmatprep.subr.mxu0 0.0
        %885 = vmatpush1.msra.mxu0 0.0
        %886 = vmatprep.subr.mxu0 0.0
        %887 = vmatpush1.msra.mxu0 0.0
        %888 = vmatprep.subr.mxu0 0.0
        %889 = vmatpush1.msra.mxu0 0.0
        %890 = vmatprep.subr.mxu0 0.0
        %891 = vmatpush1.msra.mxu0 0.0
        %892 = vmatprep.subr.mxu0 0.0
        %893 = vmatpush1.msra.mxu0 0.0
        %894 = vmatprep.subr.mxu0 0.0
        %895 = vmatpush1.msra.mxu0 0.0
        %896 = vmatprep.subr.mxu0 0.0
        %897 = vmatpush1.msra.mxu0 0.0
        %898 = vmatprep.subr.mxu0 0.0
        %899 = vmatpush1.msra.mxu0 0.0
        %900 = vmatprep.subr.mxu0 0.0
        %901 = vmatpush1.msra.mxu0 0.0
        %902 = vmatprep.subr.mxu0 0.0
        %903 = vmatpush1.msra.mxu0 0.0
        %904 = vmatprep.subr.mxu0 0.0
        %905 = vmatpush1.msra.mxu0 %v869
        %906 = vmatprep.subr.mxu0 0.0
        %907 = vmatpush1.msra.mxu0 %v868
        %908 = vmatprep.subr.mxu0 0.0
        %909 = vmatpush1.msra.mxu0 %v867
        %910 = vmatprep.subr.mxu0 0.0
        %911 = vmatpush1.msra.mxu0 %v866
        %912 = vmatprep.subr.mxu0 0.0
        %913 = vmatpush2.msra.mxu0 0.0
        %914 = vmatprep.subr.mxu0 0.0
        %915 = vmatpush2.msra.mxu0 0.0
        %916 = vmatprep.subr.mxu0 0.0
        %917 = vmatpush2.msra.mxu0 0.0
        %918 = vmatprep.subr.mxu0 0.0
        %919 = vmatpush2.msra.mxu0 0.0
        %920 = vmatprep.subr.mxu0 0.0
        %921 = vmatpush2.msra.mxu0 0.0
        %922 = vmatprep.subr.mxu0 0.0
        %923 = vmatpush2.msra.mxu0 0.0
        %924 = vmatprep.subr.mxu0 0.0
        %925 = vmatpush2.msra.mxu0 0.0
        %926 = vmatprep.subr.mxu0 0.0
        %927 = vmatpush2.msra.mxu0 0.0
        %928 = vmatprep.subr.mxu0 0.0
        %929 = vmatpush2.msra.mxu0 0.0
        %930 = vmatprep.subr.mxu0 0.0
        %931 = vmatpush2.msra.mxu0 0.0
        %932 = vmatprep.subr.mxu0 0.0
        %933 = vmatpush2.msra.mxu0 0.0
        %934 = vmatprep.subr.mxu0 0.0
        %935 = vmatpush2.msra.mxu0 0.0
        %936 = vmatprep.subr.mxu0 0.0
        %937 = vmatpush2.msra.mxu0 0.0
        %938 = vmatprep.subr.mxu0 0.0
        %939 = vmatpush2.msra.mxu0 0.0
        %940 = vmatprep.subr.mxu0 0.0
        %941 = vmatpush2.msra.mxu0 0.0
        %942 = vmatprep.subr.mxu0 0.0
        %943 = vmatpush2.msra.mxu0 0.0
        %944 = vmatprep.mubr.f32.mxu0 0.0
        %945 = vmatmul.mubr.f32.gmra.mxu0 %v878
        %v946 = vpop.f32.mrf.mxu0
        %v947 = vadd.f32 %v875, %v946
        %v948 = vpop.f32.mrf.mxu0
        %949 = vdwg.mxu0
        %v950 = vld [vmem:[%s787] sm:$0xff]
        %v951 = vld [vmem:[%s787 + $0x8] sm:$0xff]
        %v952 = vld [vmem:[%s787 + $0x10] sm:$0xff]
        %v953 = vld [vmem:[%s787 + $0x18] sm:$0xff]
        %v955 = vsel %vm837, %v827, 0
        %957 = vmatprep.subr.mxu0 0.0
        %958 = vmatpush1.msra.mxu0 0.0
        %959 = vmatprep.subr.mxu0 0.0
        %960 = vmatpush1.msra.mxu0 0.0
        %961 = vmatprep.subr.mxu0 0.0
        %962 = vmatpush1.msra.mxu0 0.0
        %963 = vmatprep.subr.mxu0 0.0
        %964 = vmatpush1.msra.mxu0 0.0
        %965 = vmatprep.subr.mxu0 0.0
        %966 = vmatpush1.msra.mxu0 0.0
        %967 = vmatprep.subr.mxu0 0.0
        %968 = vmatpush1.msra.mxu0 0.0
        %969 = vmatprep.subr.mxu0 0.0
        %970 = vmatpush1.msra.mxu0 0.0
        %971 = vmatprep.subr.mxu0 0.0
        %972 = vmatpush1.msra.mxu0 0.0
        %973 = vmatprep.subr.mxu0 0.0
        %974 = vmatpush1.msra.mxu0 0.0
        %975 = vmatprep.subr.mxu0 0.0
        %976 = vmatpush1.msra.mxu0 0.0
        %977 = vmatprep.subr.mxu0 0.0
        %978 = vmatpush1.msra.mxu0 0.0
        %979 = vmatprep.subr.mxu0 0.0
        %980 = vmatpush1.msra.mxu0 0.0
        %981 = vmatprep.subr.mxu0 0.0
        %982 = vmatpush1.msra.mxu0 %v953
        %983 = vmatprep.subr.mxu0 0.0
        %984 = vmatpush1.msra.mxu0 %v952
        %985 = vmatprep.subr.mxu0 0.0
        %986 = vmatpush1.msra.mxu0 %v951
        %987 = vmatprep.subr.mxu0 0.0
        %988 = vmatpush1.msra.mxu0 %v950
        %989 = vmatprep.subr.mxu0 0.0
        %990 = vmatpush2.msra.mxu0 0.0
        %991 = vmatprep.subr.mxu0 0.0
        %992 = vmatpush2.msra.mxu0 0.0
        %993 = vmatprep.subr.mxu0 0.0
        %994 = vmatpush2.msra.mxu0 0.0
        %995 = vmatprep.subr.mxu0 0.0
        %996 = vmatpush2.msra.mxu0 0.0
        %997 = vmatprep.subr.mxu0 0.0
        %998 = vmatpush2.msra.mxu0 0.0
        %999 = vmatprep.subr.mxu0 0.0
        %1000 = vmatpush2.msra.mxu0 0.0
        %1001 = vmatprep.subr.mxu0 0.0
        %1002 = vmatpush2.msra.mxu0 0.0
        %1003 = vmatprep.subr.mxu0 0.0
        %1004 = vmatpush2.msra.mxu0 0.0
        %1005 = vmatprep.subr.mxu0 0.0
        %1006 = vmatpush2.msra.mxu0 0.0
        %1007 = vmatprep.subr.mxu0 0.0
        %1008 = vmatpush2.msra.mxu0 0.0
        %1009 = vmatprep.subr.mxu0 0.0
        %1010 = vmatpush2.msra.mxu0 0.0
        %1011 = vmatprep.subr.mxu0 0.0
        %1012 = vmatpush2.msra.mxu0 0.0
        %1013 = vmatprep.subr.mxu0 0.0
        %1014 = vmatpush2.msra.mxu0 0.0
        %1015 = vmatprep.subr.mxu0 0.0
        %1016 = vmatpush2.msra.mxu0 0.0
        %1017 = vmatprep.subr.mxu0 0.0
        %1018 = vmatpush2.msra.mxu0 0.0
        %1019 = vmatprep.subr.mxu0 0.0
        %1020 = vmatpush2.msra.mxu0 0.0
        %1021 = vmatprep.mubr.f32.mxu0 0.0
        %1022 = vmatmul.mubr.f32.gmra.mxu0 %v955
        %v1023 = vpop.f32.mrf.mxu0
        %v1024 = vadd.f32 0.0, %v1023
        %v1025 = vpop.f32.mrf.mxu0
        %1026 = vdwg.mxu0
        %v1027 = vld [vmem:[%s792] sm:$0xff]
        %v1028 = vld [vmem:[%s792 + $0x8] sm:$0xff]
        %v1029 = vld [vmem:[%s792 + $0x10] sm:$0xff]
        %v1030 = vld [vmem:[%s792 + $0x18] sm:$0xff]
        %1031 = vmatprep.subr.mxu0 0.0
        %1032 = vmatpush1.msra.mxu0 0.0
        %1033 = vmatprep.subr.mxu0 0.0
        %1034 = vmatpush1.msra.mxu0 0.0
        %1035 = vmatprep.subr.mxu0 0.0
        %1036 = vmatpush1.msra.mxu0 0.0
        %1037 = vmatprep.subr.mxu0 0.0
        %1038 = vmatpush1.msra.mxu0 0.0
        %1039 = vmatprep.subr.mxu0 0.0
        %1040 = vmatpush1.msra.mxu0 0.0
        %1041 = vmatprep.subr.mxu0 0.0
        %1042 = vmatpush1.msra.mxu0 0.0
        %1043 = vmatprep.subr.mxu0 0.0
        %1044 = vmatpush1.msra.mxu0 0.0
        %1045 = vmatprep.subr.mxu0 0.0
        %1046 = vmatpush1.msra.mxu0 0.0
        %1047 = vmatprep.subr.mxu0 0.0
        %1048 = vmatpush1.msra.mxu0 0.0
        %1049 = vmatprep.subr.mxu0 0.0
        %1050 = vmatpush1.msra.mxu0 0.0
        %1051 = vmatprep.subr.mxu0 0.0
        %1052 = vmatpush1.msra.mxu0 0.0
        %1053 = vmatprep.subr.mxu0 0.0
        %1054 = vmatpush1.msra.mxu0 0.0
        %1055 = vmatprep.subr.mxu0 0.0
        %1056 = vmatpush1.msra.mxu0 %v1030
        %1057 = vmatprep.subr.mxu0 0.0
        %1058 = vmatpush1.msra.mxu0 %v1029
        %1059 = vmatprep.subr.mxu0 0.0
        %1060 = vmatpush1.msra.mxu0 %v1028
        %1061 = vmatprep.subr.mxu0 0.0
        %1062 = vmatpush1.msra.mxu0 %v1027
        %1063 = vmatprep.subr.mxu0 0.0
        %1064 = vmatpush2.msra.mxu0 0.0
        %1065 = vmatprep.subr.mxu0 0.0
        %1066 = vmatpush2.msra.mxu0 0.0
        %1067 = vmatprep.subr.mxu0 0.0
        %1068 = vmatpush2.msra.mxu0 0.0
        %1069 = vmatprep.subr.mxu0 0.0
        %1070 = vmatpush2.msra.mxu0 0.0
        %1071 = vmatprep.subr.mxu0 0.0
        %1072 = vmatpush2.msra.mxu0 0.0
        %1073 = vmatprep.subr.mxu0 0.0
        %1074 = vmatpush2.msra.mxu0 0.0
        %1075 = vmatprep.subr.mxu0 0.0
        %1076 = vmatpush2.msra.mxu0 0.0
        %1077 = vmatprep.subr.mxu0 0.0
        %1078 = vmatpush2.msra.mxu0 0.0
        %1079 = vmatprep.subr.mxu0 0.0
        %1080 = vmatpush2.msra.mxu0 0.0
        %1081 = vmatprep.subr.mxu0 0.0
        %1082 = vmatpush2.msra.mxu0 0.0
        %1083 = vmatprep.subr.mxu0 0.0
        %1084 = vmatpush2.msra.mxu0 0.0
        %1085 = vmatprep.subr.mxu0 0.0
        %1086 = vmatpush2.msra.mxu0 0.0
        %1087 = vmatprep.subr.mxu0 0.0
        %1088 = vmatpush2.msra.mxu0 0.0
        %1089 = vmatprep.subr.mxu0 0.0
        %1090 = vmatpush2.msra.mxu0 0.0
        %1091 = vmatprep.subr.mxu0 0.0
        %1092 = vmatpush2.msra.mxu0 0.0
        %1093 = vmatprep.subr.mxu0 0.0
        %1094 = vmatpush2.msra.mxu0 0.0
        %1095 = vmatprep.mubr.f32.mxu0 0.0
        %1096 = vmatmul.mubr.f32.gmra.mxu0 %v955
        %v1097 = vpop.f32.mrf.mxu0
        %v1098 = vadd.f32 0.0, %v1097
        %v1099 = vpop.f32.mrf.mxu0
        %1100 = vdwg.mxu0
        %vm1101 = vcmask 64512
        %v1103 = vsel %vm1101, %v947, 0
        %v1106 = vsel %vm1101, %v1024, 0
        %1108 = vmatprep.subr.mxu0 0.0
        %1109 = vmatpush1.xpose.msra.mxu0 0.0
        %1110 = vmatprep.subr.mxu0 0.0
        %1111 = vmatpush1.xpose.msra.mxu0 0.0
        %1112 = vmatprep.subr.mxu0 0.0
        %1113 = vmatpush1.xpose.msra.mxu0 0.0
        %1114 = vmatprep.subr.mxu0 0.0
        %1115 = vmatpush1.xpose.msra.mxu0 0.0
        %1116 = vmatprep.subr.mxu0 0.0
        %1117 = vmatpush1.xpose.msra.mxu0 0.0
        %1118 = vmatprep.subr.mxu0 0.0
        %1119 = vmatpush1.xpose.msra.mxu0 0.0
        %1120 = vmatprep.subr.mxu0 0.0
        %1121 = vmatpush1.xpose.msra.mxu0 0.0
        %1122 = vmatprep.subr.mxu0 0.0
        %1123 = vmatpush1.xpose.msra.mxu0 0.0
        %1124 = vmatprep.subr.mxu0 0.0
        %1125 = vmatpush1.xpose.msra.mxu0 0.0
        %1126 = vmatprep.subr.mxu0 0.0
        %1127 = vmatpush1.xpose.msra.mxu0 0.0
        %1128 = vmatprep.subr.mxu0 0.0
        %1129 = vmatpush1.xpose.msra.mxu0 0.0
        %1130 = vmatprep.subr.mxu0 0.0
        %1131 = vmatpush1.xpose.msra.mxu0 0.0
        %1132 = vmatprep.subr.mxu0 0.0
        %1133 = vmatpush1.xpose.msra.mxu0 0.0
        %1134 = vmatprep.subr.mxu0 0.0
        %1135 = vmatpush1.xpose.msra.mxu0 0.0
        %1136 = vmatprep.subr.mxu0 0.0
        %1137 = vmatpush1.xpose.msra.mxu0 0.0
        %1138 = vmatprep.subr.mxu0 0.0
        %1139 = vmatpush1.xpose.msra.mxu0 %v1106
        %1140 = vmatprep.subr.mxu0 0.0
        %1141 = vmatpush2.xpose.msra.mxu0 0.0
        %1142 = vmatprep.subr.mxu0 0.0
        %1143 = vmatpush2.xpose.msra.mxu0 0.0
        %1144 = vmatprep.subr.mxu0 0.0
        %1145 = vmatpush2.xpose.msra.mxu0 0.0
        %1146 = vmatprep.subr.mxu0 0.0
        %1147 = vmatpush2.xpose.msra.mxu0 0.0
        %1148 = vmatprep.subr.mxu0 0.0
        %1149 = vmatpush2.xpose.msra.mxu0 0.0
        %1150 = vmatprep.subr.mxu0 0.0
        %1151 = vmatpush2.xpose.msra.mxu0 0.0
        %1152 = vmatprep.subr.mxu0 0.0
        %1153 = vmatpush2.xpose.msra.mxu0 0.0
        %1154 = vmatprep.subr.mxu0 0.0
        %1155 = vmatpush2.xpose.msra.mxu0 0.0
        %1156 = vmatprep.subr.mxu0 0.0
        %1157 = vmatpush2.xpose.msra.mxu0 0.0
        %1158 = vmatprep.subr.mxu0 0.0
        %1159 = vmatpush2.xpose.msra.mxu0 0.0
        %1160 = vmatprep.subr.mxu0 0.0
        %1161 = vmatpush2.xpose.msra.mxu0 0.0
        %1162 = vmatprep.subr.mxu0 0.0
        %1163 = vmatpush2.xpose.msra.mxu0 0.0
        %1164 = vmatprep.subr.mxu0 0.0
        %1165 = vmatpush2.xpose.msra.mxu0 0.0
        %1166 = vmatprep.subr.mxu0 0.0
        %1167 = vmatpush2.xpose.msra.mxu0 0.0
        %1168 = vmatprep.subr.mxu0 0.0
        %1169 = vmatpush2.xpose.msra.mxu0 0.0
        %1170 = vmatprep.subr.mxu0 0.0
        %1171 = vmatpush2.xpose.msra.mxu0 0.0
        %1172 = vmatprep.mubr.f32.mxu0 0.0
        %1173 = vmatmul.mubr.f32.gmra.mxu0 %v1103
        %v1174 = vpop.f32.mrf.mxu0
        %v1175 = vadd.f32 %v833, %v1174
        %v1176 = vpop.f32.mrf.mxu0
        %1177 = vdwg.mxu0
        %v1178 = vsel %vm1101, %v1175, -inf
        %1179 = vmax.xlane.f32.xlu0 %v1178
        %v1180 = vpop.xlane.xlu0 %1179
        %v1181 = vsub.f32 %v1175, %v1180
        %v1182 = vmul.f32 %v1181, 1.442695
        %v1183 = vpow.pop %v1182
        %v1184 = vsel %vm1101, %v1183, 0.0
        %1185 = vadd.xlane.f32.xlu0 %v1184
        %v1186 = vpop.xlane.xlu0 %1185
        %v1187 = vrcp.pop %v1186
        %v1188 = vmul.f32 %v1183, %v1187
        %s1189 = scalar_lea.vmem %s778, 32
        %v1190 = vld [vmem:[%s1189] sm:$0xff]
        %v1191 = vld [vmem:[%s1189 + $0x8] sm:$0xff]
        %v1192 = vld [vmem:[%s1189 + $0x10] sm:$0xff]
        %v1193 = vld [vmem:[%s1189 + $0x18] sm:$0xff]
        %s1194 = scalar_lea.vmem %s782, 1
        %v1195 = vld [vmem:[%s1194] sm:$0x1]
        %v1197 = vlaneseq
        %v1198 = vshrl.u32 %v1197, 7
        %v1199 = vsub.s32 0, %v1198
        %v1200 = vrot.slane %v1195, %v1199
        %1202 = vmatprep.subr.mxu0 0.0
        %1203 = vmatpush1.msra.mxu0 0.0
        %1204 = vmatprep.subr.mxu0 0.0
        %1205 = vmatpush1.msra.mxu0 0.0
        %1206 = vmatprep.subr.mxu0 0.0
        %1207 = vmatpush1.msra.mxu0 0.0
        %1208 = vmatprep.subr.mxu0 0.0
        %1209 = vmatpush1.msra.mxu0 0.0
        %1210 = vmatprep.subr.mxu0 0.0
        %1211 = vmatpush1.msra.mxu0 0.0
        %1212 = vmatprep.subr.mxu0 0.0
        %1213 = vmatpush1.msra.mxu0 0.0
        %1214 = vmatprep.subr.mxu0 0.0
        %1215 = vmatpush1.msra.mxu0 0.0
        %1216 = vmatprep.subr.mxu0 0.0
        %1217 = vmatpush1.msra.mxu0 0.0
        %1218 = vmatprep.subr.mxu0 0.0
        %1219 = vmatpush1.msra.mxu0 0.0
        %1220 = vmatprep.subr.mxu0 0.0
        %1221 = vmatpush1.msra.mxu0 0.0
        %1222 = vmatprep.subr.mxu0 0.0
        %1223 = vmatpush1.msra.mxu0 0.0
        %1224 = vmatprep.subr.mxu0 0.0
        %1225 = vmatpush1.msra.mxu0 0.0
        %1226 = vmatprep.subr.mxu0 0.0
        %1227 = vmatpush1.msra.mxu0 %v1193
        %1228 = vmatprep.subr.mxu0 0.0
        %1229 = vmatpush1.msra.mxu0 %v1192
        %1230 = vmatprep.subr.mxu0 0.0
        %1231 = vmatpush1.msra.mxu0 %v1191
        %1232 = vmatprep.subr.mxu0 0.0
        %1233 = vmatpush1.msra.mxu0 %v1190
        %1234 = vmatprep.subr.mxu0 0.0
        %1235 = vmatpush2.msra.mxu0 0.0
        %1236 = vmatprep.subr.mxu0 0.0
        %1237 = vmatpush2.msra.mxu0 0.0
        %1238 = vmatprep.subr.mxu0 0.0
        %1239 = vmatpush2.msra.mxu0 0.0
        %1240 = vmatprep.subr.mxu0 0.0
        %1241 = vmatpush2.msra.mxu0 0.0
        %1242 = vmatprep.subr.mxu0 0.0
        %1243 = vmatpush2.msra.mxu0 0.0
        %1244 = vmatprep.subr.mxu0 0.0
        %1245 = vmatpush2.msra.mxu0 0.0
        %1246 = vmatprep.subr.mxu0 0.0
        %1247 = vmatpush2.msra.mxu0 0.0
        %1248 = vmatprep.subr.mxu0 0.0
        %1249 = vmatpush2.msra.mxu0 0.0
        %1250 = vmatprep.subr.mxu0 0.0
        %1251 = vmatpush2.msra.mxu0 0.0
        %1252 = vmatprep.subr.mxu0 0.0
        %1253 = vmatpush2.msra.mxu0 0.0
        %1254 = vmatprep.subr.mxu0 0.0
        %1255 = vmatpush2.msra.mxu0 0.0
        %1256 = vmatprep.subr.mxu0 0.0
        %1257 = vmatpush2.msra.mxu0 0.0
        %1258 = vmatprep.subr.mxu0 0.0
        %1259 = vmatpush2.msra.mxu0 0.0
        %1260 = vmatprep.subr.mxu0 0.0
        %1261 = vmatpush2.msra.mxu0 0.0
        %1262 = vmatprep.subr.mxu0 0.0
        %1263 = vmatpush2.msra.mxu0 0.0
        %1264 = vmatprep.subr.mxu0 0.0
        %1265 = vmatpush2.msra.mxu0 0.0
        %1266 = vmatprep.mubr.f32.mxu0 0.0
        %1267 = vmatmul.mubr.f32.gmra.mxu0 %v878
        %v1268 = vpop.f32.mrf.mxu0
        %v1269 = vadd.f32 %v1200, %v1268
        %v1270 = vpop.f32.mrf.mxu0
        %1271 = vdwg.mxu0
        %s1272 = scalar_lea.vmem %s787, 32
        %v1273 = vld [vmem:[%s1272] sm:$0xff]
        %v1274 = vld [vmem:[%s1272 + $0x8] sm:$0xff]
        %v1275 = vld [vmem:[%s1272 + $0x10] sm:$0xff]
        %v1276 = vld [vmem:[%s1272 + $0x18] sm:$0xff]
        %1277 = vmatprep.subr.mxu0 0.0
        %1278 = vmatpush1.msra.mxu0 0.0
        %1279 = vmatprep.subr.mxu0 0.0
        %1280 = vmatpush1.msra.mxu0 0.0
        %1281 = vmatprep.subr.mxu0 0.0
        %1282 = vmatpush1.msra.mxu0 0.0
        %1283 = vmatprep.subr.mxu0 0.0
        %1284 = vmatpush1.msra.mxu0 0.0
        %1285 = vmatprep.subr.mxu0 0.0
        %1286 = vmatpush1.msra.mxu0 0.0
        %1287 = vmatprep.subr.mxu0 0.0
        %1288 = vmatpush1.msra.mxu0 0.0
        %1289 = vmatprep.subr.mxu0 0.0
        %1290 = vmatpush1.msra.mxu0 0.0
        %1291 = vmatprep.subr.mxu0 0.0
        %1292 = vmatpush1.msra.mxu0 0.0
        %1293 = vmatprep.subr.mxu0 0.0
        %1294 = vmatpush1.msra.mxu0 0.0
        %1295 = vmatprep.subr.mxu0 0.0
        %1296 = vmatpush1.msra.mxu0 0.0
        %1297 = vmatprep.subr.mxu0 0.0
        %1298 = vmatpush1.msra.mxu0 0.0
        %1299 = vmatprep.subr.mxu0 0.0
        %1300 = vmatpush1.msra.mxu0 0.0
        %1301 = vmatprep.subr.mxu0 0.0
        %1302 = vmatpush1.msra.mxu0 %v1276
        %1303 = vmatprep.subr.mxu0 0.0
        %1304 = vmatpush1.msra.mxu0 %v1275
        %1305 = vmatprep.subr.mxu0 0.0
        %1306 = vmatpush1.msra.mxu0 %v1274
        %1307 = vmatprep.subr.mxu0 0.0
        %1308 = vmatpush1.msra.mxu0 %v1273
        %1309 = vmatprep.subr.mxu0 0.0
        %1310 = vmatpush2.msra.mxu0 0.0
        %1311 = vmatprep.subr.mxu0 0.0
        %1312 = vmatpush2.msra.mxu0 0.0
        %1313 = vmatprep.subr.mxu0 0.0
        %1314 = vmatpush2.msra.mxu0 0.0
        %1315 = vmatprep.subr.mxu0 0.0
        %1316 = vmatpush2.msra.mxu0 0.0
        %1317 = vmatprep.subr.mxu0 0.0
        %1318 = vmatpush2.msra.mxu0 0.0
        %1319 = vmatprep.subr.mxu0 0.0
        %1320 = vmatpush2.msra.mxu0 0.0
        %1321 = vmatprep.subr.mxu0 0.0
        %1322 = vmatpush2.msra.mxu0 0.0
        %1323 = vmatprep.subr.mxu0 0.0
        %1324 = vmatpush2.msra.mxu0 0.0
        %1325 = vmatprep.subr.mxu0 0.0
        %1326 = vmatpush2.msra.mxu0 0.0
        %1327 = vmatprep.subr.mxu0 0.0
        %1328 = vmatpush2.msra.mxu0 0.0
        %1329 = vmatprep.subr.mxu0 0.0
        %1330 = vmatpush2.msra.mxu0 0.0
        %1331 = vmatprep.subr.mxu0 0.0
        %1332 = vmatpush2.msra.mxu0 0.0
        %1333 = vmatprep.subr.mxu0 0.0
        %1334 = vmatpush2.msra.mxu0 0.0
        %1335 = vmatprep.subr.mxu0 0.0
        %1336 = vmatpush2.msra.mxu0 0.0
        %1337 = vmatprep.subr.mxu0 0.0
        %1338 = vmatpush2.msra.mxu0 0.0
        %1339 = vmatprep.subr.mxu0 0.0
        %1340 = vmatpush2.msra.mxu0 0.0
        %1341 = vmatprep.mubr.f32.mxu0 0.0
        %1342 = vmatmul.mubr.f32.gmra.mxu0 %v955
        %v1343 = vpop.f32.mrf.mxu0
        %v1344 = vadd.f32 0.0, %v1343
        %v1345 = vpop.f32.mrf.mxu0
        %1346 = vdwg.mxu0
        %s1347 = scalar_lea.vmem %s792, 32
        %v1348 = vld [vmem:[%s1347] sm:$0xff]
        %v1349 = vld [vmem:[%s1347 + $0x8] sm:$0xff]
        %v1350 = vld [vmem:[%s1347 + $0x10] sm:$0xff]
        %v1351 = vld [vmem:[%s1347 + $0x18] sm:$0xff]
        %1352 = vmatprep.subr.mxu0 0.0
        %1353 = vmatpush1.msra.mxu0 0.0
        %1354 = vmatprep.subr.mxu0 0.0
        %1355 = vmatpush1.msra.mxu0 0.0
        %1356 = vmatprep.subr.mxu0 0.0
        %1357 = vmatpush1.msra.mxu0 0.0
        %1358 = vmatprep.subr.mxu0 0.0
        %1359 = vmatpush1.msra.mxu0 0.0
        %1360 = vmatprep.subr.mxu0 0.0
        %1361 = vmatpush1.msra.mxu0 0.0
        %1362 = vmatprep.subr.mxu0 0.0
        %1363 = vmatpush1.msra.mxu0 0.0
        %1364 = vmatprep.subr.mxu0 0.0
        %1365 = vmatpush1.msra.mxu0 0.0
        %1366 = vmatprep.subr.mxu0 0.0
        %1367 = vmatpush1.msra.mxu0 0.0
        %1368 = vmatprep.subr.mxu0 0.0
        %1369 = vmatpush1.msra.mxu0 0.0
        %1370 = vmatprep.subr.mxu0 0.0
        %1371 = vmatpush1.msra.mxu0 0.0
        %1372 = vmatprep.subr.mxu0 0.0
        %1373 = vmatpush1.msra.mxu0 0.0
        %1374 = vmatprep.subr.mxu0 0.0
        %1375 = vmatpush1.msra.mxu0 0.0
        %1376 = vmatprep.subr.mxu0 0.0
        %1377 = vmatpush1.msra.mxu0 %v1351
        %1378 = vmatprep.subr.mxu0 0.0
        %1379 = vmatpush1.msra.mxu0 %v1350
        %1380 = vmatprep.subr.mxu0 0.0
        %1381 = vmatpush1.msra.mxu0 %v1349
        %1382 = vmatprep.subr.mxu0 0.0
        %1383 = vmatpush1.msra.mxu0 %v1348
        %1384 = vmatprep.subr.mxu0 0.0
        %1385 = vmatpush2.msra.mxu0 0.0
        %1386 = vmatprep.subr.mxu0 0.0
        %1387 = vmatpush2.msra.mxu0 0.0
        %1388 = vmatprep.subr.mxu0 0.0
        %1389 = vmatpush2.msra.mxu0 0.0
        %1390 = vmatprep.subr.mxu0 0.0
        %1391 = vmatpush2.msra.mxu0 0.0
        %1392 = vmatprep.subr.mxu0 0.0
        %1393 = vmatpush2.msra.mxu0 0.0
        %1394 = vmatprep.subr.mxu0 0.0
        %1395 = vmatpush2.msra.mxu0 0.0
        %1396 = vmatprep.subr.mxu0 0.0
        %1397 = vmatpush2.msra.mxu0 0.0
        %1398 = vmatprep.subr.mxu0 0.0
        %1399 = vmatpush2.msra.mxu0 0.0
        %1400 = vmatprep.subr.mxu0 0.0
        %1401 = vmatpush2.msra.mxu0 0.0
        %1402 = vmatprep.subr.mxu0 0.0
        %1403 = vmatpush2.msra.mxu0 0.0
        %1404 = vmatprep.subr.mxu0 0.0
        %1405 = vmatpush2.msra.mxu0 0.0
        %1406 = vmatprep.subr.mxu0 0.0
        %1407 = vmatpush2.msra.mxu0 0.0
        %1408 = vmatprep.subr.mxu0 0.0
        %1409 = vmatpush2.msra.mxu0 0.0
        %1410 = vmatprep.subr.mxu0 0.0
        %1411 = vmatpush2.msra.mxu0 0.0
        %1412 = vmatprep.subr.mxu0 0.0
        %1413 = vmatpush2.msra.mxu0 0.0
        %1414 = vmatprep.subr.mxu0 0.0
        %1415 = vmatpush2.msra.mxu0 0.0
        %1416 = vmatprep.mubr.f32.mxu0 0.0
        %1417 = vmatmul.mubr.f32.gmra.mxu0 %v955
        %v1418 = vpop.f32.mrf.mxu0
        %v1419 = vadd.f32 0.0, %v1418
        %v1420 = vpop.f32.mrf.mxu0
        %1421 = vdwg.mxu0
        %v1423 = vsel %vm1101, %v1269, 0
        %v1426 = vsel %vm1101, %v1344, 0
        %1428 = vmatprep.subr.mxu0 0.0
        %1429 = vmatpush1.xpose.msra.mxu0 0.0
        %1430 = vmatprep.subr.mxu0 0.0
        %1431 = vmatpush1.xpose.msra.mxu0 0.0
        %1432 = vmatprep.subr.mxu0 0.0
        %1433 = vmatpush1.xpose.msra.mxu0 0.0
        %1434 = vmatprep.subr.mxu0 0.0
        %1435 = vmatpush1.xpose.msra.mxu0 0.0
        %1436 = vmatprep.subr.mxu0 0.0
        %1437 = vmatpush1.xpose.msra.mxu0 0.0
        %1438 = vmatprep.subr.mxu0 0.0
        %1439 = vmatpush1.xpose.msra.mxu0 0.0
        %1440 = vmatprep.subr.mxu0 0.0
        %1441 = vmatpush1.xpose.msra.mxu0 0.0
        %1442 = vmatprep.subr.mxu0 0.0
        %1443 = vmatpush1.xpose.msra.mxu0 0.0
        %1444 = vmatprep.subr.mxu0 0.0
        %1445 = vmatpush1.xpose.msra.mxu0 0.0
        %1446 = vmatprep.subr.mxu0 0.0
        %1447 = vmatpush1.xpose.msra.mxu0 0.0
        %1448 = vmatprep.subr.mxu0 0.0
        %1449 = vmatpush1.xpose.msra.mxu0 0.0
        %1450 = vmatprep.subr.mxu0 0.0
        %1451 = vmatpush1.xpose.msra.mxu0 0.0
        %1452 = vmatprep.subr.mxu0 0.0
        %1453 = vmatpush1.xpose.msra.mxu0 0.0
        %1454 = vmatprep.subr.mxu0 0.0
        %1455 = vmatpush1.xpose.msra.mxu0 0.0
        %1456 = vmatprep.subr.mxu0 0.0
        %1457 = vmatpush1.xpose.msra.mxu0 0.0
        %1458 = vmatprep.subr.mxu0 0.0
        %1459 = vmatpush1.xpose.msra.mxu0 %v1426
        %1460 = vmatprep.subr.mxu0 0.0
        %1461 = vmatpush2.xpose.msra.mxu0 0.0
        %1462 = vmatprep.subr.mxu0 0.0
        %1463 = vmatpush2.xpose.msra.mxu0 0.0
        %1464 = vmatprep.subr.mxu0 0.0
        %1465 = vmatpush2.xpose.msra.mxu0 0.0
        %1466 = vmatprep.subr.mxu0 0.0
        %1467 = vmatpush2.xpose.msra.mxu0 0.0
        %1468 = vmatprep.subr.mxu0 0.0
        %1469 = vmatpush2.xpose.msra.mxu0 0.0
        %1470 = vmatprep.subr.mxu0 0.0
        %1471 = vmatpush2.xpose.msra.mxu0 0.0
        %1472 = vmatprep.subr.mxu0 0.0
        %1473 = vmatpush2.xpose.msra.mxu0 0.0
        %1474 = vmatprep.subr.mxu0 0.0
        %1475 = vmatpush2.xpose.msra.mxu0 0.0
        %1476 = vmatprep.subr.mxu0 0.0
        %1477 = vmatpush2.xpose.msra.mxu0 0.0
        %1478 = vmatprep.subr.mxu0 0.0
        %1479 = vmatpush2.xpose.msra.mxu0 0.0
        %1480 = vmatprep.subr.mxu0 0.0
        %1481 = vmatpush2.xpose.msra.mxu0 0.0
        %1482 = vmatprep.subr.mxu0 0.0
        %1483 = vmatpush2.xpose.msra.mxu0 0.0
        %1484 = vmatprep.subr.mxu0 0.0
        %1485 = vmatpush2.xpose.msra.mxu0 0.0
        %1486 = vmatprep.subr.mxu0 0.0
        %1487 = vmatpush2.xpose.msra.mxu0 0.0
        %1488 = vmatprep.subr.mxu0 0.0
        %1489 = vmatpush2.xpose.msra.mxu0 0.0
        %1490 = vmatprep.subr.mxu0 0.0
        %1491 = vmatpush2.xpose.msra.mxu0 0.0
        %1492 = vmatprep.mubr.f32.mxu0 0.0
        %1493 = vmatmul.mubr.f32.gmra.mxu0 %v1423
        %v1494 = vpop.f32.mrf.mxu0
        %v1495 = vadd.f32 %v833, %v1494
        %v1496 = vpop.f32.mrf.mxu0
        %1497 = vdwg.mxu0
        %v1498 = vsel %vm1101, %v1495, -inf
        %1499 = vmax.xlane.f32.xlu0 %v1498
        %v1500 = vpop.xlane.xlu0 %1499
        %v1501 = vsub.f32 %v1495, %v1500
        %v1502 = vmul.f32 %v1501, 1.442695
        %v1503 = vpow.pop %v1502
        %v1504 = vsel %vm1101, %v1503, 0.0
        %1505 = vadd.xlane.f32.xlu0 %v1504
        %v1506 = vpop.xlane.xlu0 %1505
        %v1507 = vrcp.pop %v1506
        %v1508 = vmul.f32 %v1503, %v1507
        %v1510 = vsel %vm1101, %v1508, 0
        %1512 = vmatprep.subr.mxu0 0.0
        %1513 = vmatpush1.msra.mxu0 0.0
        %1514 = vmatprep.subr.mxu0 0.0
        %1515 = vmatpush1.msra.mxu0 0.0
        %1516 = vmatprep.subr.mxu0 0.0
        %1517 = vmatpush1.msra.mxu0 0.0
        %1518 = vmatprep.subr.mxu0 0.0
        %1519 = vmatpush1.msra.mxu0 0.0
        %1520 = vmatprep.subr.mxu0 0.0
        %1521 = vmatpush1.msra.mxu0 0.0
        %1522 = vmatprep.subr.mxu0 0.0
        %1523 = vmatpush1.msra.mxu0 0.0
        %1524 = vmatprep.subr.mxu0 0.0
        %1525 = vmatpush1.msra.mxu0 0.0
        %1526 = vmatprep.subr.mxu0 0.0
        %1527 = vmatpush1.msra.mxu0 0.0
        %1528 = vmatprep.subr.mxu0 0.0
        %1529 = vmatpush1.msra.mxu0 0.0
        %1530 = vmatprep.subr.mxu0 0.0
        %1531 = vmatpush1.msra.mxu0 0.0
        %1532 = vmatprep.subr.mxu0 0.0
        %1533 = vmatpush1.msra.mxu0 0.0
        %1534 = vmatprep.subr.mxu0 0.0
        %1535 = vmatpush1.msra.mxu0 0.0
        %1536 = vmatprep.subr.mxu0 0.0
        %1537 = vmatpush1.msra.mxu0 0.0
        %1538 = vmatprep.subr.mxu0 0.0
        %1539 = vmatpush1.msra.mxu0 0.0
        %1540 = vmatprep.subr.mxu0 0.0
        %1541 = vmatpush1.msra.mxu0 0.0
        %1542 = vmatprep.subr.mxu0 0.0
        %1543 = vmatpush1.msra.mxu0 %v1419
        %1544 = vmatprep.subr.mxu0 0.0
        %1545 = vmatpush2.msra.mxu0 0.0
        %1546 = vmatprep.subr.mxu0 0.0
        %1547 = vmatpush2.msra.mxu0 0.0
        %1548 = vmatprep.subr.mxu0 0.0
        %1549 = vmatpush2.msra.mxu0 0.0
        %1550 = vmatprep.subr.mxu0 0.0
        %1551 = vmatpush2.msra.mxu0 0.0
        %1552 = vmatprep.subr.mxu0 0.0
        %1553 = vmatpush2.msra.mxu0 0.0
        %1554 = vmatprep.subr.mxu0 0.0
        %1555 = vmatpush2.msra.mxu0 0.0
        %1556 = vmatprep.subr.mxu0 0.0
        %1557 = vmatpush2.msra.mxu0 0.0
        %1558 = vmatprep.subr.mxu0 0.0
        %1559 = vmatpush2.msra.mxu0 0.0
        %1560 = vmatprep.subr.mxu0 0.0
        %1561 = vmatpush2.msra.mxu0 0.0
        %1562 = vmatprep.subr.mxu0 0.0
        %1563 = vmatpush2.msra.mxu0 0.0
        %1564 = vmatprep.subr.mxu0 0.0
        %1565 = vmatpush2.msra.mxu0 0.0
        %1566 = vmatprep.subr.mxu0 0.0
        %1567 = vmatpush2.msra.mxu0 0.0
        %1568 = vmatprep.subr.mxu0 0.0
        %1569 = vmatpush2.msra.mxu0 0.0
        %1570 = vmatprep.subr.mxu0 0.0
        %1571 = vmatpush2.msra.mxu0 0.0
        %1572 = vmatprep.subr.mxu0 0.0
        %1573 = vmatpush2.msra.mxu0 0.0
        %1574 = vmatprep.subr.mxu0 0.0
        %1575 = vmatpush2.msra.mxu0 0.0
        %1576 = vmatprep.mubr.f32.mxu0 0.0
        %1577 = vmatmul.mubr.f32.gmra.mxu0 %v1510
        %v1578 = vpop.f32.mrf.mxu0
        %v1579 = vadd.f32 0.0, %v1578
        %v1580 = vpop.f32.mrf.mxu0
        %1581 = vdwg.mxu0
        %v1583 = vsel %vm1101, %v1188, 0
        %1585 = vmatprep.subr.mxu0 0.0
        %1586 = vmatpush1.msra.mxu0 0.0
        %1587 = vmatprep.subr.mxu0 0.0
        %1588 = vmatpush1.msra.mxu0 0.0
        %1589 = vmatprep.subr.mxu0 0.0
        %1590 = vmatpush1.msra.mxu0 0.0
        %1591 = vmatprep.subr.mxu0 0.0
        %1592 = vmatpush1.msra.mxu0 0.0
        %1593 = vmatprep.subr.mxu0 0.0
        %1594 = vmatpush1.msra.mxu0 0.0
        %1595 = vmatprep.subr.mxu0 0.0
        %1596 = vmatpush1.msra.mxu0 0.0
        %1597 = vmatprep.subr.mxu0 0.0
        %1598 = vmatpush1.msra.mxu0 0.0
        %1599 = vmatprep.subr.mxu0 0.0
        %1600 = vmatpush1.msra.mxu0 0.0
        %1601 = vmatprep.subr.mxu0 0.0
        %1602 = vmatpush1.msra.mxu0 0.0
        %1603 = vmatprep.subr.mxu0 0.0
        %1604 = vmatpush1.msra.mxu0 0.0
        %1605 = vmatprep.subr.mxu0 0.0
        %1606 = vmatpush1.msra.mxu0 0.0
        %1607 = vmatprep.subr.mxu0 0.0
        %1608 = vmatpush1.msra.mxu0 0.0
        %1609 = vmatprep.subr.mxu0 0.0
        %1610 = vmatpush1.msra.mxu0 0.0
        %1611 = vmatprep.subr.mxu0 0.0
        %1612 = vmatpush1.msra.mxu0 0.0
        %1613 = vmatprep.subr.mxu0 0.0
        %1614 = vmatpush1.msra.mxu0 0.0
        %1615 = vmatprep.subr.mxu0 0.0
        %1616 = vmatpush1.msra.mxu0 %v1098
        %1617 = vmatprep.subr.mxu0 0.0
        %1618 = vmatpush2.msra.mxu0 0.0
        %1619 = vmatprep.subr.mxu0 0.0
        %1620 = vmatpush2.msra.mxu0 0.0
        %1621 = vmatprep.subr.mxu0 0.0
        %1622 = vmatpush2.msra.mxu0 0.0
        %1623 = vmatprep.subr.mxu0 0.0
        %1624 = vmatpush2.msra.mxu0 0.0
        %1625 = vmatprep.subr.mxu0 0.0
        %1626 = vmatpush2.msra.mxu0 0.0
        %1627 = vmatprep.subr.mxu0 0.0
        %1628 = vmatpush2.msra.mxu0 0.0
        %1629 = vmatprep.subr.mxu0 0.0
        %1630 = vmatpush2.msra.mxu0 0.0
        %1631 = vmatprep.subr.mxu0 0.0
        %1632 = vmatpush2.msra.mxu0 0.0
        %1633 = vmatprep.subr.mxu0 0.0
        %1634 = vmatpush2.msra.mxu0 0.0
        %1635 = vmatprep.subr.mxu0 0.0
        %1636 = vmatpush2.msra.mxu0 0.0
        %1637 = vmatprep.subr.mxu0 0.0
        %1638 = vmatpush2.msra.mxu0 0.0
        %1639 = vmatprep.subr.mxu0 0.0
        %1640 = vmatpush2.msra.mxu0 0.0
        %1641 = vmatprep.subr.mxu0 0.0
        %1642 = vmatpush2.msra.mxu0 0.0
        %1643 = vmatprep.subr.mxu0 0.0
        %1644 = vmatpush2.msra.mxu0 0.0
        %1645 = vmatprep.subr.mxu0 0.0
        %1646 = vmatpush2.msra.mxu0 0.0
        %1647 = vmatprep.subr.mxu0 0.0
        %1648 = vmatpush2.msra.mxu0 0.0
        %1649 = vmatprep.mubr.f32.mxu0 0.0
        %1650 = vmatmul.mubr.f32.gmra.mxu0 %v1583
        %v1651 = vpop.f32.mrf.mxu0
        %v1652 = vadd.f32 %v1579, %v1651
        %v1653 = vpop.f32.mrf.mxu0
        %1654 = vdwg.mxu0
        %s1655 = scalar_lea.vmem %s778, 64
        %v1656 = vld [vmem:[%s1655] sm:$0xff]
        %v1657 = vld [vmem:[%s1655 + $0x8] sm:$0xff]
        %v1658 = vld [vmem:[%s1655 + $0x10] sm:$0xff]
        %v1659 = vld [vmem:[%s1655 + $0x18] sm:$0xff]
        %s1660 = scalar_lea.vmem %s782, 2
        %v1661 = vld [vmem:[%s1660] sm:$0x1]
        %v1663 = vlaneseq
        %v1664 = vshrl.u32 %v1663, 7
        %v1665 = vsub.s32 0, %v1664
        %v1666 = vrot.slane %v1661, %v1665
        %1668 = vmatprep.subr.mxu0 0.0
        %1669 = vmatpush1.msra.mxu0 0.0
        %1670 = vmatprep.subr.mxu0 0.0
        %1671 = vmatpush1.msra.mxu0 0.0
        %1672 = vmatprep.subr.mxu0 0.0
        %1673 = vmatpush1.msra.mxu0 0.0
        %1674 = vmatprep.subr.mxu0 0.0
        %1675 = vmatpush1.msra.mxu0 0.0
        %1676 = vmatprep.subr.mxu0 0.0
        %1677 = vmatpush1.msra.mxu0 0.0
        %1678 = vmatprep.subr.mxu0 0.0
        %1679 = vmatpush1.msra.mxu0 0.0
        %1680 = vmatprep.subr.mxu0 0.0
        %1681 = vmatpush1.msra.mxu0 0.0
        %1682 = vmatprep.subr.mxu0 0.0
        %1683 = vmatpush1.msra.mxu0 0.0
        %1684 = vmatprep.subr.mxu0 0.0
        %1685 = vmatpush1.msra.mxu0 0.0
        %1686 = vmatprep.subr.mxu0 0.0
        %1687 = vmatpush1.msra.mxu0 0.0
        %1688 = vmatprep.subr.mxu0 0.0
        %1689 = vmatpush1.msra.mxu0 0.0
        %1690 = vmatprep.subr.mxu0 0.0
        %1691 = vmatpush1.msra.mxu0 0.0
        %1692 = vmatprep.subr.mxu0 0.0
        %1693 = vmatpush1.msra.mxu0 %v1659
        %1694 = vmatprep.subr.mxu0 0.0
        %1695 = vmatpush1.msra.mxu0 %v1658
        %1696 = vmatprep.subr.mxu0 0.0
        %1697 = vmatpush1.msra.mxu0 %v1657
        %1698 = vmatprep.subr.mxu0 0.0
        %1699 = vmatpush1.msra.mxu0 %v1656
        %1700 = vmatprep.subr.mxu0 0.0
        %1701 = vmatpush2.msra.mxu0 0.0
        %1702 = vmatprep.subr.mxu0 0.0
        %1703 = vmatpush2.msra.mxu0 0.0
        %1704 = vmatprep.subr.mxu0 0.0
        %1705 = vmatpush2.msra.mxu0 0.0
        %1706 = vmatprep.subr.mxu0 0.0
        %1707 = vmatpush2.msra.mxu0 0.0
        %1708 = vmatprep.subr.mxu0 0.0
        %1709 = vmatpush2.msra.mxu0 0.0
        %1710 = vmatprep.subr.mxu0 0.0
        %1711 = vmatpush2.msra.mxu0 0.0
        %1712 = vmatprep.subr.mxu0 0.0
        %1713 = vmatpush2.msra.mxu0 0.0
        %1714 = vmatprep.subr.mxu0 0.0
        %1715 = vmatpush2.msra.mxu0 0.0
        %1716 = vmatprep.subr.mxu0 0.0
        %1717 = vmatpush2.msra.mxu0 0.0
        %1718 = vmatprep.subr.mxu0 0.0
        %1719 = vmatpush2.msra.mxu0 0.0
        %1720 = vmatprep.subr.mxu0 0.0
        %1721 = vmatpush2.msra.mxu0 0.0
        %1722 = vmatprep.subr.mxu0 0.0
        %1723 = vmatpush2.msra.mxu0 0.0
        %1724 = vmatprep.subr.mxu0 0.0
        %1725 = vmatpush2.msra.mxu0 0.0
        %1726 = vmatprep.subr.mxu0 0.0
        %1727 = vmatpush2.msra.mxu0 0.0
        %1728 = vmatprep.subr.mxu0 0.0
        %1729 = vmatpush2.msra.mxu0 0.0
        %1730 = vmatprep.subr.mxu0 0.0
        %1731 = vmatpush2.msra.mxu0 0.0
        %1732 = vmatprep.mubr.f32.mxu0 0.0
        %1733 = vmatmul.mubr.f32.gmra.mxu0 %v878
        %v1734 = vpop.f32.mrf.mxu0
        %v1735 = vadd.f32 %v1666, %v1734
        %v1736 = vpop.f32.mrf.mxu0
        %1737 = vdwg.mxu0
        %s1738 = scalar_lea.vmem %s787, 64
        %v1739 = vld [vmem:[%s1738] sm:$0xff]
        %v1740 = vld [vmem:[%s1738 + $0x8] sm:$0xff]
        %v1741 = vld [vmem:[%s1738 + $0x10] sm:$0xff]
        %v1742 = vld [vmem:[%s1738 + $0x18] sm:$0xff]
        %1743 = vmatprep.subr.mxu0 0.0
        %1744 = vmatpush1.msra.mxu0 0.0
        %1745 = vmatprep.subr.mxu0 0.0
        %1746 = vmatpush1.msra.mxu0 0.0
        %1747 = vmatprep.subr.mxu0 0.0
        %1748 = vmatpush1.msra.mxu0 0.0
        %1749 = vmatprep.subr.mxu0 0.0
        %1750 = vmatpush1.msra.mxu0 0.0
        %1751 = vmatprep.subr.mxu0 0.0
        %1752 = vmatpush1.msra.mxu0 0.0
        %1753 = vmatprep.subr.mxu0 0.0
        %1754 = vmatpush1.msra.mxu0 0.0
        %1755 = vmatprep.subr.mxu0 0.0
        %1756 = vmatpush1.msra.mxu0 0.0
        %1757 = vmatprep.subr.mxu0 0.0
        %1758 = vmatpush1.msra.mxu0 0.0
        %1759 = vmatprep.subr.mxu0 0.0
        %1760 = vmatpush1.msra.mxu0 0.0
        %1761 = vmatprep.subr.mxu0 0.0
        %1762 = vmatpush1.msra.mxu0 0.0
        %1763 = vmatprep.subr.mxu0 0.0
        %1764 = vmatpush1.msra.mxu0 0.0
        %1765 = vmatprep.subr.mxu0 0.0
        %1766 = vmatpush1.msra.mxu0 0.0
        %1767 = vmatprep.subr.mxu0 0.0
        %1768 = vmatpush1.msra.mxu0 %v1742
        %1769 = vmatprep.subr.mxu0 0.0
        %1770 = vmatpush1.msra.mxu0 %v1741
        %1771 = vmatprep.subr.mxu0 0.0
        %1772 = vmatpush1.msra.mxu0 %v1740
        %1773 = vmatprep.subr.mxu0 0.0
        %1774 = vmatpush1.msra.mxu0 %v1739
        %1775 = vmatprep.subr.mxu0 0.0
        %1776 = vmatpush2.msra.mxu0 0.0
        %1777 = vmatprep.subr.mxu0 0.0
        %1778 = vmatpush2.msra.mxu0 0.0
        %1779 = vmatprep.subr.mxu0 0.0
        %1780 = vmatpush2.msra.mxu0 0.0
        %1781 = vmatprep.subr.mxu0 0.0
        %1782 = vmatpush2.msra.mxu0 0.0
        %1783 = vmatprep.subr.mxu0 0.0
        %1784 = vmatpush2.msra.mxu0 0.0
        %1785 = vmatprep.subr.mxu0 0.0
        %1786 = vmatpush2.msra.mxu0 0.0
        %1787 = vmatprep.subr.mxu0 0.0
        %1788 = vmatpush2.msra.mxu0 0.0
        %1789 = vmatprep.subr.mxu0 0.0
        %1790 = vmatpush2.msra.mxu0 0.0
        %1791 = vmatprep.subr.mxu0 0.0
        %1792 = vmatpush2.msra.mxu0 0.0
        %1793 = vmatprep.subr.mxu0 0.0
        %1794 = vmatpush2.msra.mxu0 0.0
        %1795 = vmatprep.subr.mxu0 0.0
        %1796 = vmatpush2.msra.mxu0 0.0
        %1797 = vmatprep.subr.mxu0 0.0
        %1798 = vmatpush2.msra.mxu0 0.0
        %1799 = vmatprep.subr.mxu0 0.0
        %1800 = vmatpush2.msra.mxu0 0.0
        %1801 = vmatprep.subr.mxu0 0.0
        %1802 = vmatpush2.msra.mxu0 0.0
        %1803 = vmatprep.subr.mxu0 0.0
        %1804 = vmatpush2.msra.mxu0 0.0
        %1805 = vmatprep.subr.mxu0 0.0
        %1806 = vmatpush2.msra.mxu0 0.0
        %1807 = vmatprep.mubr.f32.mxu0 0.0
        %1808 = vmatmul.mubr.f32.gmra.mxu0 %v955
        %v1809 = vpop.f32.mrf.mxu0
        %v1810 = vadd.f32 0.0, %v1809
        %v1811 = vpop.f32.mrf.mxu0
        %1812 = vdwg.mxu0
        %s1813 = scalar_lea.vmem %s792, 64
        %v1814 = vld [vmem:[%s1813] sm:$0xff]
        %v1815 = vld [vmem:[%s1813 + $0x8] sm:$0xff]
        %v1816 = vld [vmem:[%s1813 + $0x10] sm:$0xff]
        %v1817 = vld [vmem:[%s1813 + $0x18] sm:$0xff]
        %1818 = vmatprep.subr.mxu0 0.0
        %1819 = vmatpush1.msra.mxu0 0.0
        %1820 = vmatprep.subr.mxu0 0.0
        %1821 = vmatpush1.msra.mxu0 0.0
        %1822 = vmatprep.subr.mxu0 0.0
        %1823 = vmatpush1.msra.mxu0 0.0
        %1824 = vmatprep.subr.mxu0 0.0
        %1825 = vmatpush1.msra.mxu0 0.0
        %1826 = vmatprep.subr.mxu0 0.0
        %1827 = vmatpush1.msra.mxu0 0.0
        %1828 = vmatprep.subr.mxu0 0.0
        %1829 = vmatpush1.msra.mxu0 0.0
        %1830 = vmatprep.subr.mxu0 0.0
        %1831 = vmatpush1.msra.mxu0 0.0
        %1832 = vmatprep.subr.mxu0 0.0
        %1833 = vmatpush1.msra.mxu0 0.0
        %1834 = vmatprep.subr.mxu0 0.0
        %1835 = vmatpush1.msra.mxu0 0.0
        %1836 = vmatprep.subr.mxu0 0.0
        %1837 = vmatpush1.msra.mxu0 0.0
        %1838 = vmatprep.subr.mxu0 0.0
        %1839 = vmatpush1.msra.mxu0 0.0
        %1840 = vmatprep.subr.mxu0 0.0
        %1841 = vmatpush1.msra.mxu0 0.0
        %1842 = vmatprep.subr.mxu0 0.0
        %1843 = vmatpush1.msra.mxu0 %v1817
        %1844 = vmatprep.subr.mxu0 0.0
        %1845 = vmatpush1.msra.mxu0 %v1816
        %1846 = vmatprep.subr.mxu0 0.0
        %1847 = vmatpush1.msra.mxu0 %v1815
        %1848 = vmatprep.subr.mxu0 0.0
        %1849 = vmatpush1.msra.mxu0 %v1814
        %1850 = vmatprep.subr.mxu0 0.0
        %1851 = vmatpush2.msra.mxu0 0.0
        %1852 = vmatprep.subr.mxu0 0.0
        %1853 = vmatpush2.msra.mxu0 0.0
        %1854 = vmatprep.subr.mxu0 0.0
        %1855 = vmatpush2.msra.mxu0 0.0
        %1856 = vmatprep.subr.mxu0 0.0
        %1857 = vmatpush2.msra.mxu0 0.0
        %1858 = vmatprep.subr.mxu0 0.0
        %1859 = vmatpush2.msra.mxu0 0.0
        %1860 = vmatprep.subr.mxu0 0.0
        %1861 = vmatpush2.msra.mxu0 0.0
        %1862 = vmatprep.subr.mxu0 0.0
        %1863 = vmatpush2.msra.mxu0 0.0
        %1864 = vmatprep.subr.mxu0 0.0
        %1865 = vmatpush2.msra.mxu0 0.0
        %1866 = vmatprep.subr.mxu0 0.0
        %1867 = vmatpush2.msra.mxu0 0.0
        %1868 = vmatprep.subr.mxu0 0.0
        %1869 = vmatpush2.msra.mxu0 0.0
        %1870 = vmatprep.subr.mxu0 0.0
        %1871 = vmatpush2.msra.mxu0 0.0
        %1872 = vmatprep.subr.mxu0 0.0
        %1873 = vmatpush2.msra.mxu0 0.0
        %1874 = vmatprep.subr.mxu0 0.0
        %1875 = vmatpush2.msra.mxu0 0.0
        %1876 = vmatprep.subr.mxu0 0.0
        %1877 = vmatpush2.msra.mxu0 0.0
        %1878 = vmatprep.subr.mxu0 0.0
        %1879 = vmatpush2.msra.mxu0 0.0
        %1880 = vmatprep.subr.mxu0 0.0
        %1881 = vmatpush2.msra.mxu0 0.0
        %1882 = vmatprep.mubr.f32.mxu0 0.0
        %1883 = vmatmul.mubr.f32.gmra.mxu0 %v955
        %v1884 = vpop.f32.mrf.mxu0
        %v1885 = vadd.f32 0.0, %v1884
        %v1886 = vpop.f32.mrf.mxu0
        %1887 = vdwg.mxu0
        %v1889 = vsel %vm1101, %v1735, 0
        %v1892 = vsel %vm1101, %v1810, 0
        %1894 = vmatprep.subr.mxu0 0.0
        %1895 = vmatpush1.xpose.msra.mxu0 0.0
        %1896 = vmatprep.subr.mxu0 0.0
        %1897 = vmatpush1.xpose.msra.mxu0 0.0
        %1898 = vmatprep.subr.mxu0 0.0
        %1899 = vmatpush1.xpose.msra.mxu0 0.0
        %1900 = vmatprep.subr.mxu0 0.0
        %1901 = vmatpush1.xpose.msra.mxu0 0.0
        %1902 = vmatprep.subr.mxu0 0.0
        %1903 = vmatpush1.xpose.msra.mxu0 0.0
        %1904 = vmatprep.subr.mxu0 0.0
        %1905 = vmatpush1.xpose.msra.mxu0 0.0
        %1906 = vmatprep.subr.mxu0 0.0
        %1907 = vmatpush1.xpose.msra.mxu0 0.0
        %1908 = vmatprep.subr.mxu0 0.0
        %1909 = vmatpush1.xpose.msra.mxu0 0.0
        %1910 = vmatprep.subr.mxu0 0.0
        %1911 = vmatpush1.xpose.msra.mxu0 0.0
        %1912 = vmatprep.subr.mxu0 0.0
        %1913 = vmatpush1.xpose.msra.mxu0 0.0
        %1914 = vmatprep.subr.mxu0 0.0
        %1915 = vmatpush1.xpose.msra.mxu0 0.0
        %1916 = vmatprep.subr.mxu0 0.0
        %1917 = vmatpush1.xpose.msra.mxu0 0.0
        %1918 = vmatprep.subr.mxu0 0.0
        %1919 = vmatpush1.xpose.msra.mxu0 0.0
        %1920 = vmatprep.subr.mxu0 0.0
        %1921 = vmatpush1.xpose.msra.mxu0 0.0
        %1922 = vmatprep.subr.mxu0 0.0
        %1923 = vmatpush1.xpose.msra.mxu0 0.0
        %1924 = vmatprep.subr.mxu0 0.0
        %1925 = vmatpush1.xpose.msra.mxu0 %v1892
        %1926 = vmatprep.subr.mxu0 0.0
        %1927 = vmatpush2.xpose.msra.mxu0 0.0
        %1928 = vmatprep.subr.mxu0 0.0
        %1929 = vmatpush2.xpose.msra.mxu0 0.0
        %1930 = vmatprep.subr.mxu0 0.0
        %1931 = vmatpush2.xpose.msra.mxu0 0.0
        %1932 = vmatprep.subr.mxu0 0.0
        %1933 = vmatpush2.xpose.msra.mxu0 0.0
        %1934 = vmatprep.subr.mxu0 0.0
        %1935 = vmatpush2.xpose.msra.mxu0 0.0
        %1936 = vmatprep.subr.mxu0 0.0
        %1937 = vmatpush2.xpose.msra.mxu0 0.0
        %1938 = vmatprep.subr.mxu0 0.0
        %1939 = vmatpush2.xpose.msra.mxu0 0.0
        %1940 = vmatprep.subr.mxu0 0.0
        %1941 = vmatpush2.xpose.msra.mxu0 0.0
        %1942 = vmatprep.subr.mxu0 0.0
        %1943 = vmatpush2.xpose.msra.mxu0 0.0
        %1944 = vmatprep.subr.mxu0 0.0
        %1945 = vmatpush2.xpose.msra.mxu0 0.0
        %1946 = vmatprep.subr.mxu0 0.0
        %1947 = vmatpush2.xpose.msra.mxu0 0.0
        %1948 = vmatprep.subr.mxu0 0.0
        %1949 = vmatpush2.xpose.msra.mxu0 0.0
        %1950 = vmatprep.subr.mxu0 0.0
        %1951 = vmatpush2.xpose.msra.mxu0 0.0
        %1952 = vmatprep.subr.mxu0 0.0
        %1953 = vmatpush2.xpose.msra.mxu0 0.0
        %1954 = vmatprep.subr.mxu0 0.0
        %1955 = vmatpush2.xpose.msra.mxu0 0.0
        %1956 = vmatprep.subr.mxu0 0.0
        %1957 = vmatpush2.xpose.msra.mxu0 0.0
        %1958 = vmatprep.mubr.f32.mxu0 0.0
        %1959 = vmatmul.mubr.f32.gmra.mxu0 %v1889
        %v1960 = vpop.f32.mrf.mxu0
        %v1961 = vadd.f32 %v833, %v1960
        %v1962 = vpop.f32.mrf.mxu0
        %1963 = vdwg.mxu0
        %v1964 = vsel %vm1101, %v1961, -inf
        %1965 = vmax.xlane.f32.xlu0 %v1964
        %v1966 = vpop.xlane.xlu0 %1965
        %v1967 = vsub.f32 %v1961, %v1966
        %v1968 = vmul.f32 %v1967, 1.442695
        %v1969 = vpow.pop %v1968
        %v1970 = vsel %vm1101, %v1969, 0.0
        %1971 = vadd.xlane.f32.xlu0 %v1970
        %v1972 = vpop.xlane.xlu0 %1971
        %v1973 = vrcp.pop %v1972
        %v1974 = vmul.f32 %v1969, %v1973
        %v1976 = vsel %vm1101, %v1974, 0
        %1978 = vmatprep.subr.mxu0 0.0
        %1979 = vmatpush1.msra.mxu0 0.0
        %1980 = vmatprep.subr.mxu0 0.0
        %1981 = vmatpush1.msra.mxu0 0.0
        %1982 = vmatprep.subr.mxu0 0.0
        %1983 = vmatpush1.msra.mxu0 0.0
        %1984 = vmatprep.subr.mxu0 0.0
        %1985 = vmatpush1.msra.mxu0 0.0
        %1986 = vmatprep.subr.mxu0 0.0
        %1987 = vmatpush1.msra.mxu0 0.0
        %1988 = vmatprep.subr.mxu0 0.0
        %1989 = vmatpush1.msra.mxu0 0.0
        %1990 = vmatprep.subr.mxu0 0.0
        %1991 = vmatpush1.msra.mxu0 0.0
        %1992 = vmatprep.subr.mxu0 0.0
        %1993 = vmatpush1.msra.mxu0 0.0
        %1994 = vmatprep.subr.mxu0 0.0
        %1995 = vmatpush1.msra.mxu0 0.0
        %1996 = vmatprep.subr.mxu0 0.0
        %1997 = vmatpush1.msra.mxu0 0.0
        %1998 = vmatprep.subr.mxu0 0.0
        %1999 = vmatpush1.msra.mxu0 0.0
        %2000 = vmatprep.subr.mxu0 0.0
        %2001 = vmatpush1.msra.mxu0 0.0
        %2002 = vmatprep.subr.mxu0 0.0
        %2003 = vmatpush1.msra.mxu0 0.0
        %2004 = vmatprep.subr.mxu0 0.0
        %2005 = vmatpush1.msra.mxu0 0.0
        %2006 = vmatprep.subr.mxu0 0.0
        %2007 = vmatpush1.msra.mxu0 0.0
        %2008 = vmatprep.subr.mxu0 0.0
        %2009 = vmatpush1.msra.mxu0 %v1885
        %2010 = vmatprep.subr.mxu0 0.0
        %2011 = vmatpush2.msra.mxu0 0.0
        %2012 = vmatprep.subr.mxu0 0.0
        %2013 = vmatpush2.msra.mxu0 0.0
        %2014 = vmatprep.subr.mxu0 0.0
        %2015 = vmatpush2.msra.mxu0 0.0
        %2016 = vmatprep.subr.mxu0 0.0
        %2017 = vmatpush2.msra.mxu0 0.0
        %2018 = vmatprep.subr.mxu0 0.0
        %2019 = vmatpush2.msra.mxu0 0.0
        %2020 = vmatprep.subr.mxu0 0.0
        %2021 = vmatpush2.msra.mxu0 0.0
        %2022 = vmatprep.subr.mxu0 0.0
        %2023 = vmatpush2.msra.mxu0 0.0
        %2024 = vmatprep.subr.mxu0 0.0
        %2025 = vmatpush2.msra.mxu0 0.0
        %2026 = vmatprep.subr.mxu0 0.0
        %2027 = vmatpush2.msra.mxu0 0.0
        %2028 = vmatprep.subr.mxu0 0.0
        %2029 = vmatpush2.msra.mxu0 0.0
        %2030 = vmatprep.subr.mxu0 0.0
        %2031 = vmatpush2.msra.mxu0 0.0
        %2032 = vmatprep.subr.mxu0 0.0
        %2033 = vmatpush2.msra.mxu0 0.0
        %2034 = vmatprep.subr.mxu0 0.0
        %2035 = vmatpush2.msra.mxu0 0.0
        %2036 = vmatprep.subr.mxu0 0.0
        %2037 = vmatpush2.msra.mxu0 0.0
        %2038 = vmatprep.subr.mxu0 0.0
        %2039 = vmatpush2.msra.mxu0 0.0
        %2040 = vmatprep.subr.mxu0 0.0
        %2041 = vmatpush2.msra.mxu0 0.0
        %2042 = vmatprep.mubr.f32.mxu0 0.0
        %2043 = vmatmul.mubr.f32.gmra.mxu0 %v1976
        %v2044 = vpop.f32.mrf.mxu0
        %v2045 = vadd.f32 0.0, %v2044
        %v2046 = vpop.f32.mrf.mxu0
        %2047 = vdwg.mxu0
        %v2048 = vadd.f32 %v1652, %v2045
        %s2049 = scalar_lea.vmem %s778, 96
        %v2050 = vld [vmem:[%s2049] sm:$0xff]
        %v2051 = vld [vmem:[%s2049 + $0x8] sm:$0xff]
        %v2052 = vld [vmem:[%s2049 + $0x10] sm:$0xff]
        %v2053 = vld [vmem:[%s2049 + $0x18] sm:$0xff]
        %s2054 = scalar_lea.vmem %s782, 3
        %v2055 = vld [vmem:[%s2054] sm:$0x1]
        %v2057 = vlaneseq
        %v2058 = vshrl.u32 %v2057, 7
        %v2059 = vsub.s32 0, %v2058
        %v2060 = vrot.slane %v2055, %v2059
        %2062 = vmatprep.subr.mxu0 0.0
        %2063 = vmatpush1.msra.mxu0 0.0
        %2064 = vmatprep.subr.mxu0 0.0
        %2065 = vmatpush1.msra.mxu0 0.0
        %2066 = vmatprep.subr.mxu0 0.0
        %2067 = vmatpush1.msra.mxu0 0.0
        %2068 = vmatprep.subr.mxu0 0.0
        %2069 = vmatpush1.msra.mxu0 0.0
        %2070 = vmatprep.subr.mxu0 0.0
        %2071 = vmatpush1.msra.mxu0 0.0
        %2072 = vmatprep.subr.mxu0 0.0
        %2073 = vmatpush1.msra.mxu0 0.0
        %2074 = vmatprep.subr.mxu0 0.0
        %2075 = vmatpush1.msra.mxu0 0.0
        %2076 = vmatprep.subr.mxu0 0.0
        %2077 = vmatpush1.msra.mxu0 0.0
        %2078 = vmatprep.subr.mxu0 0.0
        %2079 = vmatpush1.msra.mxu0 0.0
        %2080 = vmatprep.subr.mxu0 0.0
        %2081 = vmatpush1.msra.mxu0 0.0
        %2082 = vmatprep.subr.mxu0 0.0
        %2083 = vmatpush1.msra.mxu0 0.0
        %2084 = vmatprep.subr.mxu0 0.0
        %2085 = vmatpush1.msra.mxu0 0.0
        %2086 = vmatprep.subr.mxu0 0.0
        %2087 = vmatpush1.msra.mxu0 %v2053
        %2088 = vmatprep.subr.mxu0 0.0
        %2089 = vmatpush1.msra.mxu0 %v2052
        %2090 = vmatprep.subr.mxu0 0.0
        %2091 = vmatpush1.msra.mxu0 %v2051
        %2092 = vmatprep.subr.mxu0 0.0
        %2093 = vmatpush1.msra.mxu0 %v2050
        %2094 = vmatprep.subr.mxu0 0.0
        %2095 = vmatpush2.msra.mxu0 0.0
        %2096 = vmatprep.subr.mxu0 0.0
        %2097 = vmatpush2.msra.mxu0 0.0
        %2098 = vmatprep.subr.mxu0 0.0
        %2099 = vmatpush2.msra.mxu0 0.0
        %2100 = vmatprep.subr.mxu0 0.0
        %2101 = vmatpush2.msra.mxu0 0.0
        %2102 = vmatprep.subr.mxu0 0.0
        %2103 = vmatpush2.msra.mxu0 0.0
        %2104 = vmatprep.subr.mxu0 0.0
        %2105 = vmatpush2.msra.mxu0 0.0
        %2106 = vmatprep.subr.mxu0 0.0
        %2107 = vmatpush2.msra.mxu0 0.0
        %2108 = vmatprep.subr.mxu0 0.0
        %2109 = vmatpush2.msra.mxu0 0.0
        %2110 = vmatprep.subr.mxu0 0.0
        %2111 = vmatpush2.msra.mxu0 0.0
        %2112 = vmatprep.subr.mxu0 0.0
        %2113 = vmatpush2.msra.mxu0 0.0
        %2114 = vmatprep.subr.mxu0 0.0
        %2115 = vmatpush2.msra.mxu0 0.0
        %2116 = vmatprep.subr.mxu0 0.0
        %2117 = vmatpush2.msra.mxu0 0.0
        %2118 = vmatprep.subr.mxu0 0.0
        %2119 = vmatpush2.msra.mxu0 0.0
        %2120 = vmatprep.subr.mxu0 0.0
        %2121 = vmatpush2.msra.mxu0 0.0
        %2122 = vmatprep.subr.mxu0 0.0
        %2123 = vmatpush2.msra.mxu0 0.0
        %2124 = vmatprep.subr.mxu0 0.0
        %2125 = vmatpush2.msra.mxu0 0.0
        %2126 = vmatprep.mubr.f32.mxu0 0.0
        %2127 = vmatmul.mubr.f32.gmra.mxu0 %v878
        %v2128 = vpop.f32.mrf.mxu0
        %v2129 = vadd.f32 %v2060, %v2128
        %v2130 = vpop.f32.mrf.mxu0
        %2131 = vdwg.mxu0
        %s2132 = scalar_lea.vmem %s787, 96
        %v2133 = vld [vmem:[%s2132] sm:$0xff]
        %v2134 = vld [vmem:[%s2132 + $0x8] sm:$0xff]
        %v2135 = vld [vmem:[%s2132 + $0x10] sm:$0xff]
        %v2136 = vld [vmem:[%s2132 + $0x18] sm:$0xff]
        %2137 = vmatprep.subr.mxu0 0.0
        %2138 = vmatpush1.msra.mxu0 0.0
        %2139 = vmatprep.subr.mxu0 0.0
        %2140 = vmatpush1.msra.mxu0 0.0
        %2141 = vmatprep.subr.mxu0 0.0
        %2142 = vmatpush1.msra.mxu0 0.0
        %2143 = vmatprep.subr.mxu0 0.0
        %2144 = vmatpush1.msra.mxu0 0.0
        %2145 = vmatprep.subr.mxu0 0.0
        %2146 = vmatpush1.msra.mxu0 0.0
        %2147 = vmatprep.subr.mxu0 0.0
        %2148 = vmatpush1.msra.mxu0 0.0
        %2149 = vmatprep.subr.mxu0 0.0
        %2150 = vmatpush1.msra.mxu0 0.0
        %2151 = vmatprep.subr.mxu0 0.0
        %2152 = vmatpush1.msra.mxu0 0.0
        %2153 = vmatprep.subr.mxu0 0.0
        %2154 = vmatpush1.msra.mxu0 0.0
        %2155 = vmatprep.subr.mxu0 0.0
        %2156 = vmatpush1.msra.mxu0 0.0
        %2157 = vmatprep.subr.mxu0 0.0
        %2158 = vmatpush1.msra.mxu0 0.0
        %2159 = vmatprep.subr.mxu0 0.0
        %2160 = vmatpush1.msra.mxu0 0.0
        %2161 = vmatprep.subr.mxu0 0.0
        %2162 = vmatpush1.msra.mxu0 %v2136
        %2163 = vmatprep.subr.mxu0 0.0
        %2164 = vmatpush1.msra.mxu0 %v2135
        %2165 = vmatprep.subr.mxu0 0.0
        %2166 = vmatpush1.msra.mxu0 %v2134
        %2167 = vmatprep.subr.mxu0 0.0
        %2168 = vmatpush1.msra.mxu0 %v2133
        %2169 = vmatprep.subr.mxu0 0.0
        %2170 = vmatpush2.msra.mxu0 0.0
        %2171 = vmatprep.subr.mxu0 0.0
        %2172 = vmatpush2.msra.mxu0 0.0
        %2173 = vmatprep.subr.mxu0 0.0
        %2174 = vmatpush2.msra.mxu0 0.0
        %2175 = vmatprep.subr.mxu0 0.0
        %2176 = vmatpush2.msra.mxu0 0.0
        %2177 = vmatprep.subr.mxu0 0.0
        %2178 = vmatpush2.msra.mxu0 0.0
        %2179 = vmatprep.subr.mxu0 0.0
        %2180 = vmatpush2.msra.mxu0 0.0
        %2181 = vmatprep.subr.mxu0 0.0
        %2182 = vmatpush2.msra.mxu0 0.0
        %2183 = vmatprep.subr.mxu0 0.0
        %2184 = vmatpush2.msra.mxu0 0.0
        %2185 = vmatprep.subr.mxu0 0.0
        %2186 = vmatpush2.msra.mxu0 0.0
        %2187 = vmatprep.subr.mxu0 0.0
        %2188 = vmatpush2.msra.mxu0 0.0
        %2189 = vmatprep.subr.mxu0 0.0
        %2190 = vmatpush2.msra.mxu0 0.0
        %2191 = vmatprep.subr.mxu0 0.0
        %2192 = vmatpush2.msra.mxu0 0.0
        %2193 = vmatprep.subr.mxu0 0.0
        %2194 = vmatpush2.msra.mxu0 0.0
        %2195 = vmatprep.subr.mxu0 0.0
        %2196 = vmatpush2.msra.mxu0 0.0
        %2197 = vmatprep.subr.mxu0 0.0
        %2198 = vmatpush2.msra.mxu0 0.0
        %2199 = vmatprep.subr.mxu0 0.0
        %2200 = vmatpush2.msra.mxu0 0.0
        %2201 = vmatprep.mubr.f32.mxu0 0.0
        %2202 = vmatmul.mubr.f32.gmra.mxu0 %v955
        %v2203 = vpop.f32.mrf.mxu0
        %v2204 = vadd.f32 0.0, %v2203
        %v2205 = vpop.f32.mrf.mxu0
        %2206 = vdwg.mxu0
        %s2207 = scalar_lea.vmem %s792, 96
        %v2208 = vld [vmem:[%s2207] sm:$0xff]
        %v2209 = vld [vmem:[%s2207 + $0x8] sm:$0xff]
        %v2210 = vld [vmem:[%s2207 + $0x10] sm:$0xff]
        %v2211 = vld [vmem:[%s2207 + $0x18] sm:$0xff]
        %2212 = vmatprep.subr.mxu0 0.0
        %2213 = vmatpush1.msra.mxu0 0.0
        %2214 = vmatprep.subr.mxu0 0.0
        %2215 = vmatpush1.msra.mxu0 0.0
        %2216 = vmatprep.subr.mxu0 0.0
        %2217 = vmatpush1.msra.mxu0 0.0
        %2218 = vmatprep.subr.mxu0 0.0
        %2219 = vmatpush1.msra.mxu0 0.0
        %2220 = vmatprep.subr.mxu0 0.0
        %2221 = vmatpush1.msra.mxu0 0.0
        %2222 = vmatprep.subr.mxu0 0.0
        %2223 = vmatpush1.msra.mxu0 0.0
        %2224 = vmatprep.subr.mxu0 0.0
        %2225 = vmatpush1.msra.mxu0 0.0
        %2226 = vmatprep.subr.mxu0 0.0
        %2227 = vmatpush1.msra.mxu0 0.0
        %2228 = vmatprep.subr.mxu0 0.0
        %2229 = vmatpush1.msra.mxu0 0.0
        %2230 = vmatprep.subr.mxu0 0.0
        %2231 = vmatpush1.msra.mxu0 0.0
        %2232 = vmatprep.subr.mxu0 0.0
        %2233 = vmatpush1.msra.mxu0 0.0
        %2234 = vmatprep.subr.mxu0 0.0
        %2235 = vmatpush1.msra.mxu0 0.0
        %2236 = vmatprep.subr.mxu0 0.0
        %2237 = vmatpush1.msra.mxu0 %v2211
        %2238 = vmatprep.subr.mxu0 0.0
        %2239 = vmatpush1.msra.mxu0 %v2210
        %2240 = vmatprep.subr.mxu0 0.0
        %2241 = vmatpush1.msra.mxu0 %v2209
        %2242 = vmatprep.subr.mxu0 0.0
        %2243 = vmatpush1.msra.mxu0 %v2208
        %2244 = vmatprep.subr.mxu0 0.0
        %2245 = vmatpush2.msra.mxu0 0.0
        %2246 = vmatprep.subr.mxu0 0.0
        %2247 = vmatpush2.msra.mxu0 0.0
        %2248 = vmatprep.subr.mxu0 0.0
        %2249 = vmatpush2.msra.mxu0 0.0
        %2250 = vmatprep.subr.mxu0 0.0
        %2251 = vmatpush2.msra.mxu0 0.0
        %2252 = vmatprep.subr.mxu0 0.0
        %2253 = vmatpush2.msra.mxu0 0.0
        %2254 = vmatprep.subr.mxu0 0.0
        %2255 = vmatpush2.msra.mxu0 0.0
        %2256 = vmatprep.subr.mxu0 0.0
        %2257 = vmatpush2.msra.mxu0 0.0
        %2258 = vmatprep.subr.mxu0 0.0
        %2259 = vmatpush2.msra.mxu0 0.0
        %2260 = vmatprep.subr.mxu0 0.0
        %2261 = vmatpush2.msra.mxu0 0.0
        %2262 = vmatprep.subr.mxu0 0.0
        %2263 = vmatpush2.msra.mxu0 0.0
        %2264 = vmatprep.subr.mxu0 0.0
        %2265 = vmatpush2.msra.mxu0 0.0
        %2266 = vmatprep.subr.mxu0 0.0
        %2267 = vmatpush2.msra.mxu0 0.0
        %2268 = vmatprep.subr.mxu0 0.0
        %2269 = vmatpush2.msra.mxu0 0.0
        %2270 = vmatprep.subr.mxu0 0.0
        %2271 = vmatpush2.msra.mxu0 0.0
        %2272 = vmatprep.subr.mxu0 0.0
        %2273 = vmatpush2.msra.mxu0 0.0
        %2274 = vmatprep.subr.mxu0 0.0
        %2275 = vmatpush2.msra.mxu0 0.0
        %2276 = vmatprep.mubr.f32.mxu0 0.0
        %2277 = vmatmul.mubr.f32.gmra.mxu0 %v955
        %v2278 = vpop.f32.mrf.mxu0
        %v2279 = vadd.f32 0.0, %v2278
        %v2280 = vpop.f32.mrf.mxu0
        %2281 = vdwg.mxu0
        %v2283 = vsel %vm1101, %v2129, 0
        %v2286 = vsel %vm1101, %v2204, 0
        %2288 = vmatprep.subr.mxu0 0.0
        %2289 = vmatpush1.xpose.msra.mxu0 0.0
        %2290 = vmatprep.subr.mxu0 0.0
        %2291 = vmatpush1.xpose.msra.mxu0 0.0
        %2292 = vmatprep.subr.mxu0 0.0
        %2293 = vmatpush1.xpose.msra.mxu0 0.0
        %2294 = vmatprep.subr.mxu0 0.0
        %2295 = vmatpush1.xpose.msra.mxu0 0.0
        %2296 = vmatprep.subr.mxu0 0.0
        %2297 = vmatpush1.xpose.msra.mxu0 0.0
        %2298 = vmatprep.subr.mxu0 0.0
        %2299 = vmatpush1.xpose.msra.mxu0 0.0
        %2300 = vmatprep.subr.mxu0 0.0
        %2301 = vmatpush1.xpose.msra.mxu0 0.0
        %2302 = vmatprep.subr.mxu0 0.0
        %2303 = vmatpush1.xpose.msra.mxu0 0.0
        %2304 = vmatprep.subr.mxu0 0.0
        %2305 = vmatpush1.xpose.msra.mxu0 0.0
        %2306 = vmatprep.subr.mxu0 0.0
        %2307 = vmatpush1.xpose.msra.mxu0 0.0
        %2308 = vmatprep.subr.mxu0 0.0
        %2309 = vmatpush1.xpose.msra.mxu0 0.0
        %2310 = vmatprep.subr.mxu0 0.0
        %2311 = vmatpush1.xpose.msra.mxu0 0.0
        %2312 = vmatprep.subr.mxu0 0.0
        %2313 = vmatpush1.xpose.msra.mxu0 0.0
        %2314 = vmatprep.subr.mxu0 0.0
        %2315 = vmatpush1.xpose.msra.mxu0 0.0
        %2316 = vmatprep.subr.mxu0 0.0
        %2317 = vmatpush1.xpose.msra.mxu0 0.0
        %2318 = vmatprep.subr.mxu0 0.0
        %2319 = vmatpush1.xpose.msra.mxu0 %v2286
        %2320 = vmatprep.subr.mxu0 0.0
        %2321 = vmatpush2.xpose.msra.mxu0 0.0
        %2322 = vmatprep.subr.mxu0 0.0
        %2323 = vmatpush2.xpose.msra.mxu0 0.0
        %2324 = vmatprep.subr.mxu0 0.0
        %2325 = vmatpush2.xpose.msra.mxu0 0.0
        %2326 = vmatprep.subr.mxu0 0.0
        %2327 = vmatpush2.xpose.msra.mxu0 0.0
        %2328 = vmatprep.subr.mxu0 0.0
        %2329 = vmatpush2.xpose.msra.mxu0 0.0
        %2330 = vmatprep.subr.mxu0 0.0
        %2331 = vmatpush2.xpose.msra.mxu0 0.0
        %2332 = vmatprep.subr.mxu0 0.0
        %2333 = vmatpush2.xpose.msra.mxu0 0.0
        %2334 = vmatprep.subr.mxu0 0.0
        %2335 = vmatpush2.xpose.msra.mxu0 0.0
        %2336 = vmatprep.subr.mxu0 0.0
        %2337 = vmatpush2.xpose.msra.mxu0 0.0
        %2338 = vmatprep.subr.mxu0 0.0
        %2339 = vmatpush2.xpose.msra.mxu0 0.0
        %2340 = vmatprep.subr.mxu0 0.0
        %2341 = vmatpush2.xpose.msra.mxu0 0.0
        %2342 = vmatprep.subr.mxu0 0.0
        %2343 = vmatpush2.xpose.msra.mxu0 0.0
        %2344 = vmatprep.subr.mxu0 0.0
        %2345 = vmatpush2.xpose.msra.mxu0 0.0
        %2346 = vmatprep.subr.mxu0 0.0
        %2347 = vmatpush2.xpose.msra.mxu0 0.0
        %2348 = vmatprep.subr.mxu0 0.0
        %2349 = vmatpush2.xpose.msra.mxu0 0.0
        %2350 = vmatprep.subr.mxu0 0.0
        %2351 = vmatpush2.xpose.msra.mxu0 0.0
        %2352 = vmatprep.mubr.f32.mxu0 0.0
        %2353 = vmatmul.mubr.f32.gmra.mxu0 %v2283
        %v2354 = vpop.f32.mrf.mxu0
        %v2355 = vadd.f32 %v833, %v2354
        %v2356 = vpop.f32.mrf.mxu0
        %2357 = vdwg.mxu0
        %v2358 = vsel %vm1101, %v2355, -inf
        %2359 = vmax.xlane.f32.xlu0 %v2358
        %v2360 = vpop.xlane.xlu0 %2359
        %v2361 = vsub.f32 %v2355, %v2360
        %v2362 = vmul.f32 %v2361, 1.442695
        %v2363 = vpow.pop %v2362
        %v2364 = vsel %vm1101, %v2363, 0.0
        %2365 = vadd.xlane.f32.xlu0 %v2364
        %v2366 = vpop.xlane.xlu0 %2365
        %v2367 = vrcp.pop %v2366
        %v2368 = vmul.f32 %v2363, %v2367
        %v2370 = vsel %vm1101, %v2368, 0
        %2372 = vmatprep.subr.mxu0 0.0
        %2373 = vmatpush1.msra.mxu0 0.0
        %2374 = vmatprep.subr.mxu0 0.0
        %2375 = vmatpush1.msra.mxu0 0.0
        %2376 = vmatprep.subr.mxu0 0.0
        %2377 = vmatpush1.msra.mxu0 0.0
        %2378 = vmatprep.subr.mxu0 0.0
        %2379 = vmatpush1.msra.mxu0 0.0
        %2380 = vmatprep.subr.mxu0 0.0
        %2381 = vmatpush1.msra.mxu0 0.0
        %2382 = vmatprep.subr.mxu0 0.0
        %2383 = vmatpush1.msra.mxu0 0.0
        %2384 = vmatprep.subr.mxu0 0.0
        %2385 = vmatpush1.msra.mxu0 0.0
        %2386 = vmatprep.subr.mxu0 0.0
        %2387 = vmatpush1.msra.mxu0 0.0
        %2388 = vmatprep.subr.mxu0 0.0
        %2389 = vmatpush1.msra.mxu0 0.0
        %2390 = vmatprep.subr.mxu0 0.0
        %2391 = vmatpush1.msra.mxu0 0.0
        %2392 = vmatprep.subr.mxu0 0.0
        %2393 = vmatpush1.msra.mxu0 0.0
        %2394 = vmatprep.subr.mxu0 0.0
        %2395 = vmatpush1.msra.mxu0 0.0
        %2396 = vmatprep.subr.mxu0 0.0
        %2397 = vmatpush1.msra.mxu0 0.0
        %2398 = vmatprep.subr.mxu0 0.0
        %2399 = vmatpush1.msra.mxu0 0.0
        %2400 = vmatprep.subr.mxu0 0.0
        %2401 = vmatpush1.msra.mxu0 0.0
        %2402 = vmatprep.subr.mxu0 0.0
        %2403 = vmatpush1.msra.mxu0 %v2279
        %2404 = vmatprep.subr.mxu0 0.0
        %2405 = vmatpush2.msra.mxu0 0.0
        %2406 = vmatprep.subr.mxu0 0.0
        %2407 = vmatpush2.msra.mxu0 0.0
        %2408 = vmatprep.subr.mxu0 0.0
        %2409 = vmatpush2.msra.mxu0 0.0
        %2410 = vmatprep.subr.mxu0 0.0
        %2411 = vmatpush2.msra.mxu0 0.0
        %2412 = vmatprep.subr.mxu0 0.0
        %2413 = vmatpush2.msra.mxu0 0.0
        %2414 = vmatprep.subr.mxu0 0.0
        %2415 = vmatpush2.msra.mxu0 0.0
        %2416 = vmatprep.subr.mxu0 0.0
        %2417 = vmatpush2.msra.mxu0 0.0
        %2418 = vmatprep.subr.mxu0 0.0
        %2419 = vmatpush2.msra.mxu0 0.0
        %2420 = vmatprep.subr.mxu0 0.0
        %2421 = vmatpush2.msra.mxu0 0.0
        %2422 = vmatprep.subr.mxu0 0.0
        %2423 = vmatpush2.msra.mxu0 0.0
        %2424 = vmatprep.subr.mxu0 0.0
        %2425 = vmatpush2.msra.mxu0 0.0
        %2426 = vmatprep.subr.mxu0 0.0
        %2427 = vmatpush2.msra.mxu0 0.0
        %2428 = vmatprep.subr.mxu0 0.0
        %2429 = vmatpush2.msra.mxu0 0.0
        %2430 = vmatprep.subr.mxu0 0.0
        %2431 = vmatpush2.msra.mxu0 0.0
        %2432 = vmatprep.subr.mxu0 0.0
        %2433 = vmatpush2.msra.mxu0 0.0
        %2434 = vmatprep.subr.mxu0 0.0
        %2435 = vmatpush2.msra.mxu0 0.0
        %2436 = vmatprep.mubr.f32.mxu0 0.0
        %2437 = vmatmul.mubr.f32.gmra.mxu0 %v2370
        %v2438 = vpop.f32.mrf.mxu0
        %v2439 = vadd.f32 0.0, %v2438
        %v2440 = vpop.f32.mrf.mxu0
        %2441 = vdwg.mxu0
        %v2442 = vadd.f32 %v2048, %v2439
        %v2443 = vadd.f32 %v826, %v2442
        %v2444 = vld [vmem:[%s795] sm:$0x1]
        %v2446 = vlaneseq
        %v2447 = vshrl.u32 %v2446, 7
        %v2448 = vsub.s32 0, %v2447
        %v2449 = vrot.slane %v2444, %v2448
        %v2451 = vadd.f32 %v2443, %v2449
        %v2452 = vld [vmem:[%s798] sm:$0x1]
        %v2453 = vld [vmem:[%s801] sm:$0x1]
        %v2454 = vsel %vm837, %v2451, 0.0
        %2455 = vadd.xlane.f32.xlu0 %v2454
        %v2456 = vpop.xlane.xlu0 %2455
        %v2457 = vmul.f32 %v2456, %v841
        %v2458 = vsub.f32 %v2451, %v2457
        %v2459 = vmul.f32 %v2458, %v2458
        %v2460 = vsel %vm837, %v2459, 0.0
        %2461 = vadd.xlane.f32.xlu0 %v2460
        %v2462 = vpop.xlane.xlu0 %2461
        %v2463 = vmul.f32 %v2462, %v841
        %v2464 = vadd.f32 %v2463, 1e-05
        %v2465 = vrsqrt.pop %v2464
        %v2466 = vmul.f32 %v2458, %v2465
        %v2468 = vlaneseq
        %v2469 = vshrl.u32 %v2468, 7
        %v2470 = vsub.s32 0, %v2469
        %v2471 = vrot.slane %v2452, %v2470
        %v2473 = vmul.f32 %v2466, %v2471
        %v2475 = vlaneseq
        %v2476 = vshrl.u32 %v2475, 7
        %v2477 = vsub.s32 0, %v2476
        %v2478 = vrot.slane %v2453, %v2477
        %v2480 = vadd.f32 %v2473, %v2478
        %v2481 = vld [vmem:[%s806] sm:$0xff]
        %v2482 = vld [vmem:[%s806 + $0x8] sm:$0xff]
        %v2483 = vld [vmem:[%s806 + $0x10] sm:$0xff]
        %v2484 = vld [vmem:[%s806 + $0x18] sm:$0xff]
        %v2485 = vld [vmem:[%s806 + $0x20] sm:$0xff]
        %v2486 = vld [vmem:[%s806 + $0x28] sm:$0xff]
        %v2487 = vld [vmem:[%s806 + $0x30] sm:$0xff]
        %v2488 = vld [vmem:[%s806 + $0x38] sm:$0xff]
        %v2489 = vld [vmem:[%s810] sm:$0x3]
        %v2491 = vlaneseq
        %v2492 = vshrl.u32 %v2491, 7
        %v2493 = vsub.s32 0, %v2492
        %v2494 = vrot.slane %v2489, %v2493
        %v2495 = vlaneseq
        %v2496 = vshrl.u32 %v2495, 7
        %v2497 = vsub.s32 1, %v2496
        %v2498 = vrot.slane %v2489, %v2497
        %v2502 = vsel %vm837, %v2480, 0
        %2504 = vmatprep.subr.mxu0 0.0
        %2505 = vmatpush1.msra.mxu0 0.0
        %2506 = vmatprep.subr.mxu0 0.0
        %2507 = vmatpush1.msra.mxu0 0.0
        %2508 = vmatprep.subr.mxu0 0.0
        %2509 = vmatpush1.msra.mxu0 0.0
        %2510 = vmatprep.subr.mxu0 0.0
        %2511 = vmatpush1.msra.mxu0 0.0
        %2512 = vmatprep.subr.mxu0 0.0
        %2513 = vmatpush1.msra.mxu0 0.0
        %2514 = vmatprep.subr.mxu0 0.0
        %2515 = vmatpush1.msra.mxu0 0.0
        %2516 = vmatprep.subr.mxu0 0.0
        %2517 = vmatpush1.msra.mxu0 0.0
        %2518 = vmatprep.subr.mxu0 0.0
        %2519 = vmatpush1.msra.mxu0 0.0
        %2520 = vmatprep.subr.mxu0 0.0
        %2521 = vmatpush1.msra.mxu0 0.0
        %2522 = vmatprep.subr.mxu0 0.0
        %2523 = vmatpush1.msra.mxu0 0.0
        %2524 = vmatprep.subr.mxu0 0.0
        %2525 = vmatpush1.msra.mxu0 0.0
        %2526 = vmatprep.subr.mxu0 0.0
        %2527 = vmatpush1.msra.mxu0 0.0
        %2528 = vmatprep.subr.mxu0 %v2488
        %2529 = vmatpush1.msra.mxu0 %v2487
        %2530 = vmatprep.subr.mxu0 %v2486
        %2531 = vmatpush1.msra.mxu0 %v2485
        %2532 = vmatprep.subr.mxu0 %v2484
        %2533 = vmatpush1.msra.mxu0 %v2483
        %2534 = vmatprep.subr.mxu0 %v2482
        %2535 = vmatpush1.msra.mxu0 %v2481
        %2536 = vmatprep.subr.mxu0 0.0
        %2537 = vmatpush2.msra.mxu0 0.0
        %2538 = vmatprep.subr.mxu0 0.0
        %2539 = vmatpush2.msra.mxu0 0.0
        %2540 = vmatprep.subr.mxu0 0.0
        %2541 = vmatpush2.msra.mxu0 0.0
        %2542 = vmatprep.subr.mxu0 0.0
        %2543 = vmatpush2.msra.mxu0 0.0
        %2544 = vmatprep.subr.mxu0 0.0
        %2545 = vmatpush2.msra.mxu0 0.0
        %2546 = vmatprep.subr.mxu0 0.0
        %2547 = vmatpush2.msra.mxu0 0.0
        %2548 = vmatprep.subr.mxu0 0.0
        %2549 = vmatpush2.msra.mxu0 0.0
        %2550 = vmatprep.subr.mxu0 0.0
        %2551 = vmatpush2.msra.mxu0 0.0
        %2552 = vmatprep.subr.mxu0 0.0
        %2553 = vmatpush2.msra.mxu0 0.0
        %2554 = vmatprep.subr.mxu0 0.0
        %2555 = vmatpush2.msra.mxu0 0.0
        %2556 = vmatprep.subr.mxu0 0.0
        %2557 = vmatpush2.msra.mxu0 0.0
        %2558 = vmatprep.subr.mxu0 0.0
        %2559 = vmatpush2.msra.mxu0 0.0
        %2560 = vmatprep.subr.mxu0 0.0
        %2561 = vmatpush2.msra.mxu0 0.0
        %2562 = vmatprep.subr.mxu0 0.0
        %2563 = vmatpush2.msra.mxu0 0.0
        %2564 = vmatprep.subr.mxu0 0.0
        %2565 = vmatpush2.msra.mxu0 0.0
        %2566 = vmatprep.subr.mxu0 0.0
        %2567 = vmatpush2.msra.mxu0 0.0
        %2568 = vmatprep.mubr.f32.mxu0 0.0
        %2569 = vmatmul.mubr.f32.gmra.mxu0 %v2502
        %v2570 = vpop.f32.mrf.mxu0
        %v2571 = vadd.f32 %v2494, %v2570
        %v2572 = vpop.f32.mrf.mxu0
        %v2573 = vadd.f32 %v2498, %v2572
        %2574 = vdwg.mxu0
        %s2575 = smul.u32 %s37, 2
        %s2576 = sld [smem:[#allocation3 + %s2575]]
        %s2577 = sadd.s32 %s2575, 1
        %s2578 = sld [smem:[#allocation3 + %s2577]]
        %v2579 = vstv %s2578
        %v2580 = vadd.f32 %v2571, %v2579
        %v2581 = vadd.f32 %v2573, %v2579
        %v2582 = vand.u32 2147483647, %v2580
        %vm2583 = vcmp.le.f32.partialorder %v2582, 0.7853982
        %vm2584 = vcmp.lt.s32.totalorder %v2580, 0
        %v2585 = vand.u32 %v2580, 2139095040
        %v2586 = vshrl.u32 %v2585, 23
        %v2587 = vsub.s32 %v2586, 127
        %v2588 = vand.u32 2147483647, %v2580
        %v2589 = vand.u32 %v2588, 8388607
        %v2590 = vor.u32 %v2589, 8388608
        %v2591 = vsub.s32 0, %v2590
        %v2592 = vadd.s32 %v2587, 1
        %vm2593 = vcmp.gt.s32.totalorder %v2592, 0
        %v2594 = vsel %vm2593, %v2592, 0
        %v2595 = vshrl.u32 %v2594, 5
        %v2596 = vand.u32 %v2594, 31
        %v2597 = vsub.s32 32, %v2596
        %v2598 = vshrl.u32 683565275, %v2597
        %v2599 = vshll.u32 683565275, %v2596
        %v2600 = vshrl.u32 2475754826, %v2597
        %v2601 = vor.u32 %v2599, %v2600
        %v2602 = vshll.u32 2475754826, %v2596
        %v2603 = vshrl.u32 2131351028, %v2597
        %v2604 = vor.u32 %v2602, %v2603
        %v2605 = vshll.u32 2131351028, %v2596
        %v2606 = vshrl.u32 2102212464, %v2597
        %v2607 = vor.u32 %v2605, %v2606
        %v2608 = vshll.u32 2102212464, %v2596
        %v2609 = vshrl.u32 920167782, %v2597
        %v2610 = vor.u32 %v2608, %v2609
        %v2611 = vshll.u32 920167782, %v2596
        %v2612 = vshrl.u32 1326507024, %v2597
        %v2613 = vor.u32 %v2611, %v2612
        %vm2614 = vcmp.lt.s32.totalorder %v2595, 1
        %vm2615 = vcmp.lt.s32.totalorder %v2595, 2
        %vm2616 = vcmp.lt.s32.totalorder %v2595, 3
        %vm2617 = vcmp.lt.s32.totalorder %v2595, 4
        %v2618 = vsel %vm2614, %v2598, %v2601
        %v2619 = vsel %vm2617, %v2607, 2102212464
        %v2620 = vsel %vm2616, %v2604, %v2619
        %v2621 = vsel %vm2615, %v2618, %v2620
        %v2622 = vsel %vm2614, %v2601, %v2604
        %v2623 = vsel %vm2617, %v2610, 920167782
        %v2624 = vsel %vm2616, %v2607, %v2623
        %v2625 = vsel %vm2615, %v2622, %v2624
        %v2626 = vsel %vm2614, %v2604, %v2607
        %v2627 = vsel %vm2617, %v2613, 1326507024
        %v2628 = vsel %vm2616, %v2610, %v2627
        %v2629 = vsel %vm2615, %v2626, %v2628
        %v2630 = vshll.u32 %v2590, 8
        %v2631 = vmul.u32.u64.compose %v2630, %v2629
        %v2632 = vextract.low.u32 %v2631
        %v2633 = vextract.high.u32 %v2631
        %v2634 = vmul.u32.u64.compose %v2630, %v2625
        %v2635 = vextract.low.u32 %v2634
        %v2636 = vextract.high.u32 %v2634
        %v2637 = vmul.u32 %v2630, %v2621
        %v2638 = vadd.s32 %v2633, %v2635
        %vm2639 = vc.u32 %v2633, %v2635
        %v2640 = vadd.s32 %v2636, 1
        %v2641 = vsel %vm2639, %v2640, %v2636
        %v2642 = vadd.s32 %v2637, %v2641
        %v2643 = vadd.s32 %v2642, 536870912
        %v2644 = vshrl.u32 %v2643, 30
        %v2645 = vshll.u32 %v2644, 30
        %v2646 = vsub.s32 %v2642, %v2645
        %vm2647 = vcmp.lt.s32.totalorder %v2646, 0
        %v2648 = vsub.s32 0, %v2646
        %v2649 = vsel %vm2647, %v2648, %v2646
        %v2650 = vclz %v2649
        %v2651 = vsub.s32 %v2650, 2
        %vm2652 = vcmp.gt.s32.totalorder 0, %v2651
        %v2653 = vsel %vm2652, 0, %v2651
        %v2654 = vsub.s32 32, %v2653
        %v2655 = vshll.u32 %v2646, %v2653
        %v2656 = vshrl.u32 %v2638, %v2654
        %v2657 = vor.u32 %v2655, %v2656
        %v2658 = vsub.s32 4294967266, %v2653
        %v2659 = vadd.s32 %v2658, 127
        %v2660 = vshll.u32 %v2659, 23
        %v2661 = vor.u32 4788187, %v2660
        %v2662 = vand.u32 2147483647, %v2661
        %v2664 = vcvt.s32.f32 %v2657
        %v2665 = vmul.f32 %v2664, %v2662
        %v2666 = vxor.u32 %v2665, 2147483648
        %v2667 = vsel %vm2584, %v2666, %v2665
        %v2668 = vsub.s32 4, %v2644
        %v2669 = vsel %vm2584, %v2668, %v2644
        %v2670 = vsel %vm2583, %v2580, %v2667
        %v2671 = vsel %vm2583, 0, %v2669
        %v2672 = vcosq.f32.pop %v2670
        %v2673 = vsinq.f32.pop %v2670
        %vm2674 = vweird.f32 %v2580
        %v2675 = vadd.s32 %v2671, 3
        %v2676 = vand.u32 %v2675, 3
        %vm2677 = vcmp.lt.s32.totalorder %v2676, 2
        %vm2678 = vcmp.eq.s32.totalorder %v2676, 0
        %v2679 = vxor.u32 %v2673, 2147483648
        %v2680 = vsel %vm2678, %v2672, %v2679
        %vm2681 = vcmp.eq.s32.totalorder %v2676, 2
        %v2682 = vxor.u32 %v2672, 2147483648
        %v2683 = vsel %vm2681, %v2682, %v2673
        %v2684 = vsel %vm2677, %v2680, %v2683
        %v2685 = vsel %vm2674, nan, %v2684
        %v2686 = vand.u32 2147483647, %v2581
        %vm2687 = vcmp.le.f32.partialorder %v2686, 0.7853982
        %vm2688 = vcmp.lt.s32.totalorder %v2581, 0
        %v2689 = vand.u32 %v2581, 2139095040
        %v2690 = vshrl.u32 %v2689, 23
        %v2691 = vsub.s32 %v2690, 127
        %v2692 = vand.u32 2147483647, %v2581
        %v2693 = vand.u32 %v2692, 8388607
        %v2694 = vor.u32 %v2693, 8388608
        %v2695 = vsub.s32 0, %v2694
        %v2696 = vadd.s32 %v2691, 1
        %vm2697 = vcmp.gt.s32.totalorder %v2696, 0
        %v2698 = vsel %vm2697, %v2696, 0
        %v2699 = vshrl.u32 %v2698, 5
        %v2700 = vand.u32 %v2698, 31
        %v2701 = vsub.s32 32, %v2700
        %v2702 = vshrl.u32 683565275, %v2701
        %v2703 = vshll.u32 683565275, %v2700
        %v2704 = vshrl.u32 2475754826, %v2701
        %v2705 = vor.u32 %v2703, %v2704
        %v2706 = vshll.u32 2475754826, %v2700
        %v2707 = vshrl.u32 2131351028, %v2701
        %v2708 = vor.u32 %v2706, %v2707
        %v2709 = vshll.u32 2131351028, %v2700
        %v2710 = vshrl.u32 2102212464, %v2701
        %v2711 = vor.u32 %v2709, %v2710
        %v2712 = vshll.u32 2102212464, %v2700
        %v2713 = vshrl.u32 920167782, %v2701
        %v2714 = vor.u32 %v2712, %v2713
        %v2715 = vshll.u32 920167782, %v2700
        %v2716 = vshrl.u32 1326507024, %v2701
        %v2717 = vor.u32 %v2715, %v2716
        %vm2718 = vcmp.lt.s32.totalorder %v2699, 1
        %vm2719 = vcmp.lt.s32.totalorder %v2699, 2
        %vm2720 = vcmp.lt.s32.totalorder %v2699, 3
        %vm2721 = vcmp.lt.s32.totalorder %v2699, 4
        %v2722 = vsel %vm2718, %v2702, %v2705
        %v2723 = vsel %vm2721, %v2711, 2102212464
        %v2724 = vsel %vm2720, %v2708, %v2723
        %v2725 = vsel %vm2719, %v2722, %v2724
        %v2726 = vsel %vm2718, %v2705, %v2708
        %v2727 = vsel %vm2721, %v2714, 920167782
        %v2728 = vsel %vm2720, %v2711, %v2727
        %v2729 = vsel %vm2719, %v2726, %v2728
        %v2730 = vsel %vm2718, %v2708, %v2711
        %v2731 = vsel %vm2721, %v2717, 1326507024
        %v2732 = vsel %vm2720, %v2714, %v2731
        %v2733 = vsel %vm2719, %v2730, %v2732
        %v2734 = vshll.u32 %v2694, 8
        %v2735 = vmul.u32.u64.compose %v2734, %v2733
        %v2736 = vextract.low.u32 %v2735
        %v2737 = vextract.high.u32 %v2735
        %v2738 = vmul.u32.u64.compose %v2734, %v2729
        %v2739 = vextract.low.u32 %v2738
        %v2740 = vextract.high.u32 %v2738
        %v2741 = vmul.u32 %v2734, %v2725
        %v2742 = vadd.s32 %v2737, %v2739
        %vm2743 = vc.u32 %v2737, %v2739
        %v2744 = vadd.s32 %v2740, 1
        %v2745 = vsel %vm2743, %v2744, %v2740
        %v2746 = vadd.s32 %v2741, %v2745
        %v2747 = vadd.s32 %v2746, 536870912
        %v2748 = vshrl.u32 %v2747, 30
        %v2749 = vshll.u32 %v2748, 30
        %v2750 = vsub.s32 %v2746, %v2749
        %vm2751 = vcmp.lt.s32.totalorder %v2750, 0
        %v2752 = vsub.s32 0, %v2750
        %v2753 = vsel %vm2751, %v2752, %v2750
        %v2754 = vclz %v2753
        %v2755 = vsub.s32 %v2754, 2
        %vm2756 = vcmp.gt.s32.totalorder 0, %v2755
        %v2757 = vsel %vm2756, 0, %v2755
        %v2758 = vsub.s32 32, %v2757
        %v2759 = vshll.u32 %v2750, %v2757
        %v2760 = vshrl.u32 %v2742, %v2758
        %v2761 = vor.u32 %v2759, %v2760
        %v2762 = vsub.s32 4294967266, %v2757
        %v2763 = vadd.s32 %v2762, 127
        %v2764 = vshll.u32 %v2763, 23
        %v2765 = vor.u32 4788187, %v2764
        %v2766 = vand.u32 2147483647, %v2765
        %v2768 = vcvt.s32.f32 %v2761
        %v2769 = vmul.f32 %v2768, %v2766
        %v2770 = vxor.u32 %v2769, 2147483648
        %v2771 = vsel %vm2688, %v2770, %v2769
        %v2772 = vsub.s32 4, %v2748
        %v2773 = vsel %vm2688, %v2772, %v2748
        %v2774 = vsel %vm2687, %v2581, %v2771
        %v2775 = vsel %vm2687, 0, %v2773
        %v2776 = vcosq.f32.pop %v2774
        %v2777 = vsinq.f32.pop %v2774
        %vm2778 = vweird.f32 %v2581
        %v2779 = vadd.s32 %v2775, 3
        %v2780 = vand.u32 %v2779, 3
        %vm2781 = vcmp.lt.s32.totalorder %v2780, 2
        %vm2782 = vcmp.eq.s32.totalorder %v2780, 0
        %v2783 = vxor.u32 %v2777, 2147483648
        %v2784 = vsel %vm2782, %v2776, %v2783
        %vm2785 = vcmp.eq.s32.totalorder %v2780, 2
        %v2786 = vxor.u32 %v2776, 2147483648
        %v2787 = vsel %vm2785, %v2786, %v2777
        %v2788 = vsel %vm2781, %v2784, %v2787
        %v2789 = vsel %vm2778, nan, %v2788
        %v2790 = vstv %s2576
        %v2791 = vmul.f32 %v2790, %v2685
        %v2792 = vmul.f32 %v2790, %v2789
        %v2793 = vld [vmem:[%s815] sm:$0xff]
        %v2794 = vld [vmem:[%s815 + $0x8] sm:$0xff]
        %v2795 = vld [vmem:[%s815 + $0x10] sm:$0xff]
        %v2796 = vld [vmem:[%s815 + $0x18] sm:$0xff]
        %v2797 = vld [vmem:[%s815 + $0x20] sm:$0xff]
        %v2798 = vld [vmem:[%s815 + $0x28] sm:$0xff]
        %v2799 = vld [vmem:[%s815 + $0x30] sm:$0xff]
        %v2800 = vld [vmem:[%s815 + $0x38] sm:$0xff]
        %v2801 = vld [vmem:[%s815 + $0x40] sm:$0xff]
        %v2802 = vld [vmem:[%s815 + $0x48] sm:$0xff]
        %v2803 = vld [vmem:[%s815 + $0x50] sm:$0xff]
        %v2804 = vld [vmem:[%s815 + $0x58] sm:$0xff]
        %v2805 = vld [vmem:[%s815 + $0x60] sm:$0xff]
        %v2806 = vld [vmem:[%s815 + $0x68] sm:$0xff]
        %v2807 = vld [vmem:[%s815 + $0x70] sm:$0xff]
        %v2808 = vld [vmem:[%s815 + $0x78] sm:$0xff]
        %v2809 = vld [vmem:[%s815 + $0x80] sm:$0xff]
        %v2810 = vld [vmem:[%s815 + $0x88] sm:$0xff]
        %v2811 = vld [vmem:[%s815 + $0x90] sm:$0xff]
        %v2812 = vld [vmem:[%s815 + $0x98] sm:$0xff]
        %v2813 = vld [vmem:[%s815 + $0xa0] sm:$0xff]
        %v2814 = vld [vmem:[%s815 + $0xa8] sm:$0xff]
        %v2815 = vld [vmem:[%s815 + $0xb0] sm:$0xff]
        %v2816 = vld [vmem:[%s815 + $0xb8] sm:$0xff]
        %v2817 = vld [vmem:[%s815 + $0xc0] sm:$0xff]
        %v2818 = vld [vmem:[%s815 + $0xc8] sm:$0xff]
        %v2819 = vld [vmem:[%s815 + $0xd0] sm:$0xff]
        %v2820 = vld [vmem:[%s815 + $0xd8] sm:$0xff]
        %v2821 = vld [vmem:[%s815 + $0xe0] sm:$0xff]
        %v2822 = vld [vmem:[%s815 + $0xe8] sm:$0xff]
        %v2823 = vld [vmem:[%s815 + $0xf0] sm:$0xff]
        %v2824 = vld [vmem:[%s815 + $0xf8] sm:$0xff]
        %v2825 = vld [vmem:[%s818] sm:$0x1]
        %v2827 = vlaneseq
        %v2828 = vshrl.u32 %v2827, 7
        %v2829 = vsub.s32 0, %v2828
        %v2830 = vrot.slane %v2825, %v2829
        %2832 = vmatprep.subr.mxu0 0.0
        %2833 = vmatpush1.msra.mxu0 %v2808
        %2834 = vmatprep.subr.mxu0 0.0
        %2835 = vmatpush1.msra.mxu0 %v2807
        %2836 = vmatprep.subr.mxu0 0.0
        %2837 = vmatpush1.msra.mxu0 %v2806
        %2838 = vmatprep.subr.mxu0 0.0
        %2839 = vmatpush1.msra.mxu0 %v2805
        %2840 = vmatprep.subr.mxu0 0.0
        %2841 = vmatpush1.msra.mxu0 %v2804
        %2842 = vmatprep.subr.mxu0 0.0
        %2843 = vmatpush1.msra.mxu0 %v2803
        %2844 = vmatprep.subr.mxu0 0.0
        %2845 = vmatpush1.msra.mxu0 %v2802
        %2846 = vmatprep.subr.mxu0 0.0
        %2847 = vmatpush1.msra.mxu0 %v2801
        %2848 = vmatprep.subr.mxu0 0.0
        %2849 = vmatpush1.msra.mxu0 %v2800
        %2850 = vmatprep.subr.mxu0 0.0
        %2851 = vmatpush1.msra.mxu0 %v2799
        %2852 = vmatprep.subr.mxu0 0.0
        %2853 = vmatpush1.msra.mxu0 %v2798
        %2854 = vmatprep.subr.mxu0 0.0
        %2855 = vmatpush1.msra.mxu0 %v2797
        %2856 = vmatprep.subr.mxu0 0.0
        %2857 = vmatpush1.msra.mxu0 %v2796
        %2858 = vmatprep.subr.mxu0 0.0
        %2859 = vmatpush1.msra.mxu0 %v2795
        %2860 = vmatprep.subr.mxu0 0.0
        %2861 = vmatpush1.msra.mxu0 %v2794
        %2862 = vmatprep.subr.mxu0 0.0
        %2863 = vmatpush1.msra.mxu0 %v2793
        %2864 = vmatprep.subr.mxu0 0.0
        %2865 = vmatpush2.msra.mxu0 %v2824
        %2866 = vmatprep.subr.mxu0 0.0
        %2867 = vmatpush2.msra.mxu0 %v2823
        %2868 = vmatprep.subr.mxu0 0.0
        %2869 = vmatpush2.msra.mxu0 %v2822
        %2870 = vmatprep.subr.mxu0 0.0
        %2871 = vmatpush2.msra.mxu0 %v2821
        %2872 = vmatprep.subr.mxu0 0.0
        %2873 = vmatpush2.msra.mxu0 %v2820
        %2874 = vmatprep.subr.mxu0 0.0
        %2875 = vmatpush2.msra.mxu0 %v2819
        %2876 = vmatprep.subr.mxu0 0.0
        %2877 = vmatpush2.msra.mxu0 %v2818
        %2878 = vmatprep.subr.mxu0 0.0
        %2879 = vmatpush2.msra.mxu0 %v2817
        %2880 = vmatprep.subr.mxu0 0.0
        %2881 = vmatpush2.msra.mxu0 %v2816
        %2882 = vmatprep.subr.mxu0 0.0
        %2883 = vmatpush2.msra.mxu0 %v2815
        %2884 = vmatprep.subr.mxu0 0.0
        %2885 = vmatpush2.msra.mxu0 %v2814
        %2886 = vmatprep.subr.mxu0 0.0
        %2887 = vmatpush2.msra.mxu0 %v2813
        %2888 = vmatprep.subr.mxu0 0.0
        %2889 = vmatpush2.msra.mxu0 %v2812
        %2890 = vmatprep.subr.mxu0 0.0
        %2891 = vmatpush2.msra.mxu0 %v2811
        %2892 = vmatprep.subr.mxu0 0.0
        %2893 = vmatpush2.msra.mxu0 %v2810
        %2894 = vmatprep.subr.mxu0 0.0
        %2895 = vmatpush2.msra.mxu0 %v2809
        %2896 = vmatprep.mubr.f32.mxu0 %v2792
        %2897 = vmatmul.mubr.f32.gmra.mxu0 %v2791
        %v2898 = vpop.f32.mrf.mxu0
        %v2899 = vadd.f32 %v2830, %v2898
        %v2900 = vpop.f32.mrf.mxu0
        %2901 = vdwg.mxu0
        %v2902 = vadd.f32 %v2451, %v2899
        %2903 = vst.msk [vmem:[#allocation2] sm:$0xff] %vm837, %v2902
        %p2904 = scmp.eq.s32.totalorder %s37, 1
        // Predicated region
        $region97: #{tpu_custom_call.1} parent=87 // pred_check
          %p2905 = pneg %p2904
        $region98: #{tpu_custom_call.1} parent=87 // pred_check_branch
          %2907 = sbr.rel (%p2905) target = $region100
        $region99: #{tpu_custom_call.1} parent=87 // pred_region
          %2908 = vst.msk [vmem:[%s756] sm:$0xff] %vm837, %v2902
        $region100: #{tpu_custom_call.1} parent=87 // pred_fallthru
          _
        %s2909 = sand.u32 %s489, 1
        %s2910 = scalar_lea.sflag [#allocation4], %s2909
        %s2911 = sand.u32 %s489, 1
        %s2912 = smul.addr %s2911, 8
        %s2913 = scalar_lea.vmem [#allocation6], %s2912
        // Predicated region
        $region101: #{tpu_custom_call.1} parent=87 // pred_check
          %p2914 = pneg %p499
        $region102: #{tpu_custom_call.1} parent=87 // pred_check_branch
          %2916 = sbr.rel (%p2914) target = $region104
        $region103: #{tpu_custom_call.1} parent=87 // pred_region
          %s2918 = ssub.s32 128, 128
          %2919 = vsyncadd %s2910, %s2918
          %s2920 = smul.addr %s36, 128
          %s2921 = scalar_lea.hbm %s17, %s2920
          %s2923 = sshll.u32 %s2913, 4
          %s2924 = int_to_ptr.vmem [resolvable:$true] %s2923
          %2926 = dma.vmem_to_hbm [thread:$0]  %s2924, 128, %s2921, %s2910
        $region104: #{tpu_custom_call.1} parent=87 // pred_fallthru
          _
      $region88: #{tpu_custom_call.1} parent=5 // pred_fallthru
        _
      %p2927 = scmp.le.s32.totalorder 2, %s27
      // Predicated region
      $region105: #{tpu_custom_call.1} parent=5 // pred_check
        %p2928 = pneg %p2927
      $region106: #{tpu_custom_call.1} parent=5 // pred_check_branch
        %2930 = sbr.rel (%p2928) target = $region108
      $region107: #{tpu_custom_call.1} parent=5 // pred_region
        %s2931 = ssub.s32 %s27, 2
        // Predicated region
        $region109: #{tpu_custom_call.1} parent=107 // pred_check
          %p2932 = pneg %p505
        $region110: #{tpu_custom_call.1} parent=107 // pred_check_branch
          %2934 = sbr.rel (%p2932) target = $region112
        $region111: #{tpu_custom_call.1} parent=107 // pred_region
          %s2935 = sand.u32 %s490, 1
          %s2936 = scalar_lea.sflag [#allocation4], %s2935
          %s2937 = sand.u32 %s490, 1
          %s2938 = smul.addr %s2937, 8
          %s2939 = scalar_lea.vmem [#allocation6], %s2938
          %2940 = dma.done %s2936, 128
        $region112: #{tpu_custom_call.1} parent=107 // pred_fallthru
          _
      $region108: #{tpu_custom_call.1} parent=5 // pred_fallthru
        _
    $region6: #{tpu_custom_call.1} parent=1 // loop_footer
      %s31 = sadd.s32 1, %s27
    $region7: #{tpu_custom_call.1} parent=1 // loop_footer_branch
      %26 = sbr.rel target = $region3
    $region8: #{tpu_custom_call.1} parent=1 // loop_exit
      _
    %2941 = vsyncpa [#allocation4], 1
    %s2942 = scalar_lea.sflag [#allocation4], 1
    %2943 = vsyncpa %s2942, 1
    %2944 = vsyncpa [#allocation5], 1
    %s2945 = scalar_lea.sflag [#allocation5], 1
    %2946 = vsyncpa %s2945, 1

</llo_original>
